<compile_context>
chip_gen: v7x
topology: tpu7x:2x2x1
jax: 0.10.0
libtpu: 0.0.40
codegen_flags: <defaults>
</compile_context>

<pallas_src>
import jax
import jax.numpy as jnp
from jax.experimental import pallas as pl
from jax.experimental.pallas import tpu as pltpu

LANE = 128
SUBLANE = 8


def _round_up(x, m):
    return (x + m - 1) // m * m


def _vmem_budgets(weight_bytes):
    """Generation-aware VMEM sizing (v5e/v6e: 128 MiB physical, v7x: 64 MiB)."""
    cap = None
    try:
        cap = getattr(pltpu.get_tpu_info(), "vmem_capacity_bytes", None)
    except Exception:
        cap = None
    if not cap or cap <= 0:
        cap = 64 * 2 ** 20                      # conservative (v7x-sized) fallback
    hist_budget = max(4 * 2 ** 20, int(0.40 * cap) - 2 * weight_bytes)
    vmem_limit = min(int(0.75 * cap), 96 * 2 ** 20)
    return hist_budget, vmem_limit


def _pick_batch_tile(B, per_row_bytes, budget_bytes, target=512, live_factor=6):
    """Largest batch tile (multiple of 8) whose hist working set (pipeline
    buffers + in-kernel temporaries) fits the budget; capped so the grid has
    at least two steps when the batch allows it (v7x dual TensorCore)."""
    cap = budget_bytes // max(live_factor * per_row_bytes, 1)
    cap = max(SUBLANE, cap // SUBLANE * SUBLANE)
    b8 = _round_up(B, SUBLANE)
    tile = max(SUBLANE, min(target, cap, b8) // SUBLANE * SUBLANE)
    if tile >= b8 and b8 >= 2 * SUBLANE:        # force >= 2 grid steps (megacore)
        tile = _round_up((b8 + 1) // 2, SUBLANE)
    return tile


def _mlp(item, attn, alpha, fc_refs, num_fc):
    """Shared-alpha PReLU MLP; concat([item, attn]) realized as a split first
    layer.  Dropout is identity (eval mode)."""
    w1i, w1a, b1 = fc_refs[0], fc_refs[1], fc_refs[2]
    x = (jnp.dot(item, w1i[...], preferred_element_type=jnp.float32)
         + jnp.dot(attn, w1a[...], preferred_element_type=jnp.float32)
         + b1[...])
    x = jnp.where(x >= 0, x, alpha * x)
    for i in range(1, num_fc):
        w = fc_refs[2 * i + 1]
        b = fc_refs[2 * i + 2]
        x = jnp.dot(x, w[...], preferred_element_type=jnp.float32) + b[...]
        x = jnp.where(x >= 0, x, alpha * x)
    return x


def _make_packed_kernel(embd_dim, num_fc):
    """Kernel for the lane-packed hist layout (B, S*D/128, 128)."""
    D = embd_dim

    def kernel(item_ref, hist_ref, wq_ref, bq_ref, wkt_ref, seg_ref, wkp_ref,
               bk_ref, alpha_ref, *rest):
        fc_refs, out_ref = rest[:-1], rest[-1]
        tb, rr, lane = hist_ref.shape

        item = item_ref[...]                                   # (TB, D)
        histp = hist_ref[...]                                  # (TB, RR, 128)

        # query transform (1/sqrt(D) folded into wq/bq wrapper-side); key
        # transform folded into the query and replicated onto 128 lanes:
        #   qw_lane[b, j] = (q @ Wk^T)[b, j % D]
        q = jnp.dot(item, wq_ref[...], preferred_element_type=jnp.float32) + bq_ref[...]
        qw_lane = jnp.dot(q, wkt_ref[...], preferred_element_type=jnp.float32)  # (TB,128)

        # scores replicated across each D-lane segment via one MXU matmul with
        # a block-diagonal ones matrix (segment sums).  Key bias is a per-row
        # constant under softmax -> dropped.
        prod = histp * qw_lane[:, None, :]                     # (TB, RR, 128)
        srep = jnp.dot(prod.reshape(tb * rr, lane), seg_ref[...],
                       preferred_element_type=jnp.float32).reshape(tb, rr, lane)

        # softmax; every score appears D times, so the denominator is sum/D.
        m = jnp.max(jnp.max(srep, axis=2, keepdims=True), axis=1, keepdims=True)
        e = jnp.exp(srep - m)
        denom = jnp.sum(jnp.sum(e, axis=2, keepdims=True), axis=1, keepdims=True)
        probs = e * (jnp.float32(D) / denom)                   # replicated probs

        # probability-weighted mix of history: sum over packed rows, then fold
        # the 128/D lane segments together with a roll+add tree (every lane j
        # ends up holding mix[b, j % D]).
        acc = jnp.sum(probs * histp, axis=1)                   # (TB, 128)
        step = D
        while step < lane:
            acc = acc + pltpu.roll(acc, shift=lane - step, axis=1)
            step *= 2

        # deferred key projection (Wk zero-padded to 128 input rows) + bias
        # (probs sum to 1, so bk passes through unchanged).
        attn = jnp.dot(acc, wkp_ref[...], preferred_element_type=jnp.float32) + bk_ref[...]

        alpha = alpha_ref[0, 0]
        x = _mlp(item, attn, alpha, fc_refs, num_fc)
        out_ref[...] = jax.nn.sigmoid(x[:, 0:1]).astype(out_ref.dtype)

    return kernel


def _make_unpacked_kernel(num_fc):
    """Fallback kernel for the raw (B, S, D) hist layout."""

    def kernel(item_ref, hist_ref, wq_ref, bq_ref, wkt_ref, wk_ref, bk_ref,
               alpha_ref, *rest):
        fc_refs, out_ref = rest[:-1], rest[-1]

        item = item_ref[...]                                   # (TB, D)
        hist = hist_ref[...]                                   # (TB, S, D)

        q = jnp.dot(item, wq_ref[...], preferred_element_type=jnp.float32) + bq_ref[...]
        qw = jnp.dot(q, wkt_ref[...], preferred_element_type=jnp.float32)       # (TB, D)

        scores = jnp.sum(qw[:, None, :] * hist, axis=-1)       # (TB, S)
        m = jnp.max(scores, axis=-1, keepdims=True)
        e = jnp.exp(scores - m)
        probs = e / jnp.sum(e, axis=-1, keepdims=True)

        mix = jnp.sum(probs[:, :, None] * hist, axis=1)        # (TB, D)
        attn = jnp.dot(mix, wk_ref[...], preferred_element_type=jnp.float32) + bk_ref[...]

        alpha = alpha_ref[0, 0]
        x = _mlp(item, attn, alpha, fc_refs, num_fc)
        out_ref[...] = jax.nn.sigmoid(x[:, 0:1]).astype(out_ref.dtype)

    return kernel


def sim_soft_search_forward(item, hist, params):
    """Pallas-backed forward.  Returns sigmoid logits of shape (B,)."""
    wq, bq, wk, bk, alpha, fc_ws, fc_bs = params
    B, D = item.shape
    S = hist.shape[1]
    num_fc = len(fc_ws)
    scale = 1.0 / (D ** 0.5)
    itemsize = hist.dtype.itemsize

    # Lane-packed hist path whenever D tiles the 128-lane vreg evenly.
    packed = (D <= LANE) and (LANE % D == 0) and (S % (LANE // D) == 0)
    if packed:
        R = LANE // D
        RR = S // R
        per_row = _round_up(RR, SUBLANE) * LANE * itemsize
    else:
        per_row = _round_up(S, SUBLANE) * _round_up(D, LANE) * itemsize

    # ---- parameter prep (wrapper-side, one-time, all XLA) -------------------
    wq_s = (wq * scale).astype(jnp.float32)                    # fold 1/sqrt(D)
    bq_s = (bq * scale).astype(jnp.float32)
    alpha2 = jnp.asarray(alpha, jnp.float32).reshape(1, 1)

    w1, b1v = fc_ws[0], fc_bs[0]
    H1 = w1.shape[1]
    H1p = _round_up(H1, LANE)
    w1i = jnp.zeros((D, H1p), w1.dtype).at[:, :H1].set(w1[:D, :])
    w1a = jnp.zeros((D, H1p), w1.dtype).at[:, :H1].set(w1[D:, :])
    b1p = jnp.zeros((1, H1p), b1v.dtype).at[:, :H1].set(b1v)
    fc_inputs = [w1i, w1a, b1p]
    fc_flops = 2 * D * H1p * 2
    prev_p = H1p
    for l in range(1, num_fc):
        w, b = fc_ws[l], fc_bs[l]
        hin, hout = w.shape
        houtp = _round_up(hout, LANE)
        wp = jnp.zeros((prev_p, houtp), w.dtype).at[:hin, :hout].set(w)
        bp = jnp.zeros((1, houtp), b.dtype).at[:, :hout].set(b)
        fc_inputs += [wp, bp]
        fc_flops += 2 * prev_p * houtp
        prev_p = houtp

    if packed:
        wkt_rep = jnp.tile(wk.T, (1, R)).astype(jnp.float32)   # (D, 128)
        lanes = jnp.arange(LANE)
        seg_ones = (lanes[:, None] // D == lanes[None, :] // D).astype(jnp.float32)
        wk_pad = jnp.zeros((LANE, D), wk.dtype).at[:D, :].set(wk)
        attn_inputs = [wkt_rep, seg_ones, wk_pad, bk]
        kernel = _make_packed_kernel(D, num_fc)
    else:
        attn_inputs = [wk.T, wk, bk]
        kernel = _make_unpacked_kernel(num_fc)

    weight_inputs = [wq_s, bq_s] + attn_inputs + fc_inputs
    weight_bytes = sum(a.size * a.dtype.itemsize for a in weight_inputs)

    # ---- generation-aware batch tiling --------------------------------------
    hist_budget, vmem_limit = _vmem_budgets(weight_bytes)
    tile_b = _pick_batch_tile(B, per_row, hist_budget)
    B_pad = _round_up(B, tile_b)

    item_p = item if B_pad == B else jnp.zeros((B_pad, D), item.dtype).at[:B].set(item)
    if packed:
        hist2 = hist.reshape(B, RR, LANE)
        hist_in = (hist2 if B_pad == B
                   else jnp.zeros((B_pad, RR, LANE), hist.dtype).at[:B].set(hist2))
        hist_spec = pl.BlockSpec((tile_b, RR, LANE), lambda i: (i, 0, 0))
    else:
        hist_in = (hist if B_pad == B
                   else jnp.zeros((B_pad, S, D), hist.dtype).at[:B].set(hist))
        hist_spec = pl.BlockSpec((tile_b, S, D), lambda i: (i, 0, 0))

    inputs = [item_p, hist_in, wq_s, bq_s] + attn_inputs + [alpha2] + fc_inputs

    # advisory cost estimate
    flops_row = 2 * D * D + 2 * D * LANE + 6 * S * D + 2 * LANE * D + fc_flops
    if packed:
        flops_row += 2 * RR * LANE * LANE
    bytes_accessed = (item_p.size * item_p.dtype.itemsize
                      + hist_in.size * hist_in.dtype.itemsize
                      + B_pad * 4 + weight_bytes)
    ce = pl.CostEstimate(flops=int(B_pad * flops_row),
                         transcendentals=int(B_pad * (S * (D if packed else 1) + 1)),
                         bytes_accessed=int(bytes_accessed))

    def _call(weight_mode):
        def resident(arr):
            nd = arr.ndim
            if weight_mode is None:
                return pl.BlockSpec(arr.shape, lambda i, _n=nd: (0,) * _n)
            return pl.BlockSpec(arr.shape, lambda i, _n=nd: (0,) * _n,
                                pipeline_mode=weight_mode)

        in_specs = ([pl.BlockSpec((tile_b, D), lambda i: (i, 0)), hist_spec]
                    + [resident(a) for a in [wq_s, bq_s] + attn_inputs]
                    + [pl.BlockSpec(memory_space=pltpu.MemorySpace.SMEM)]   # alpha
                    + [resident(a) for a in fc_inputs])
        out_specs = pl.BlockSpec((tile_b, 1), lambda i: (i, 0))

        return pl.pallas_call(
            kernel,
            out_shape=jax.ShapeDtypeStruct((B_pad, 1), jnp.float32),
            grid=(B_pad // tile_b,),
            in_specs=in_specs,
            out_specs=out_specs,
            compiler_params=pltpu.CompilerParams(
                dimension_semantics=("parallel",),
                vmem_limit_bytes=int(vmem_limit)),
            cost_estimate=ce,
        )(*inputs)

    try:
        # Single-buffer the VMEM-resident weights (constant index_map); fall
        # back to default double-buffering if this jax rejects buffer_count=1.
        out = _call(pl.Buffered(1))
    except Exception:
        out = _call(None)

    # torch: sigmoid(input_embd.squeeze()) with last real dim == 1 -> (B,)
    return out[:B, 0]


def reference_forward(item, hist, params):
    """Pure-JAX reference mirroring the PyTorch forward (eval mode)."""
    wq, bq, wk, bk, alpha, fc_ws, fc_bs = params
    D = item.shape[-1]
    q = item @ wq + bq[0]
    k = jnp.einsum('bsd,de->bse', hist, wk) + bk[0]
    scores = jnp.einsum('bd,bsd->bs', q, k) / (D ** 0.5)
    probs = jax.nn.softmax(scores, axis=-1)
    attn = jnp.einsum('bs,bsd->bd', probs, k)
    x = jnp.concatenate([item, attn], axis=1)
    a = alpha[0, 0]
    for w, b in zip(fc_ws, fc_bs):
        x = x @ w + b[0]
        x = jnp.where(x >= 0, x, a * x)
    return jax.nn.sigmoid(x)[:, 0]


def init_params(key, embd_dim, fc_layers_list):
    """Deterministic synthetic parameters matching the module's shapes."""
    keys = jax.random.split(key, 4 + 2 * len(fc_layers_list))
    s = 0.1
    wq = s * jax.random.normal(keys[0], (embd_dim, embd_dim), jnp.float32)
    bq = s * jax.random.normal(keys[1], (1, embd_dim), jnp.float32)
    wk = s * jax.random.normal(keys[2], (embd_dim, embd_dim), jnp.float32)
    bk = s * jax.random.normal(keys[3], (1, embd_dim), jnp.float32)
    alpha = jnp.full((1, 1), 0.25, jnp.float32)        # nn.PReLU() default init
    fc_ws, fc_bs = [], []
    in_dim = 2 * embd_dim
    for i, out_dim in enumerate(fc_layers_list):
        fc_ws.append(s * jax.random.normal(keys[4 + 2 * i], (in_dim, out_dim), jnp.float32))
        fc_bs.append(s * jax.random.normal(keys[5 + 2 * i], (1, out_dim), jnp.float32))
        in_dim = out_dim
    return (wq, bq, wk, bk, alpha, fc_ws, fc_bs)


if __name__ == "__main__":
    B, S, D = 2, 32, 32                 # S*D multiple of 128 -> lane-packed path
    fc_layers_list = [32, 16, 1]

    key = jax.random.PRNGKey(0)
    k_item, k_hist, k_params = jax.random.split(key, 3)
    item = jax.random.normal(k_item, (B, D), jnp.float32)
    hist = jax.random.normal(k_hist, (B, S, D), jnp.float32)
    params = init_params(k_params, D, fc_layers_list)

    out = sim_soft_search_forward(item, hist, params)
    out = jax.block_until_ready(out)

    ref = reference_forward(item, hist, params)
    assert out.shape == (B,)
    assert jnp.allclose(out, ref, atol=1e-3, rtol=1e-3), (out, ref)

    print("KERNEL_OK")
</pallas_src>

<mosaic_0001>
module attributes {stable_mosaic.version = 11 : i64} {
  func.func @kernel(%arg0: i32, %arg1: memref<8x32xf32, #tpu.memory_space<vmem>>, %arg2: memref<8x8x128xf32, #tpu.memory_space<vmem>>, %arg3: memref<32x32xf32, #tpu.memory_space<vmem>>, %arg4: memref<1x32xf32, #tpu.memory_space<vmem>>, %arg5: memref<32x128xf32, #tpu.memory_space<vmem>>, %arg6: memref<128x128xf32, #tpu.memory_space<vmem>>, %arg7: memref<128x32xf32, #tpu.memory_space<vmem>>, %arg8: memref<1x32xf32, #tpu.memory_space<vmem>>, %arg9: memref<1x1xf32, #tpu.memory_space<smem>>, %arg10: memref<32x128xf32, #tpu.memory_space<vmem>>, %arg11: memref<32x128xf32, #tpu.memory_space<vmem>>, %arg12: memref<1x128xf32, #tpu.memory_space<vmem>>, %arg13: memref<128x128xf32, #tpu.memory_space<vmem>>, %arg14: memref<1x128xf32, #tpu.memory_space<vmem>>, %arg15: memref<128x128xf32, #tpu.memory_space<vmem>>, %arg16: memref<1x128xf32, #tpu.memory_space<vmem>>, %arg17: memref<8x1xf32, #tpu.memory_space<vmem>>) attributes {dimension_semantics = [#tpu.dimension_semantics<parallel>], iteration_bounds = array<i64: 1>, scalar_prefetch = 0 : i64, scratch_operands = 0 : i64, tpu.core_type = #tpu.core_type<tc>, window_params = [{transform_indices = @transform_0, window_bounds = array<i64: 8, 32>}, {transform_indices = @transform_1, window_bounds = array<i64: 8, 8, 128>}, {pipeline_mode = #tpu.pipeline_mode<synchronous>, transform_indices = @transform_2, window_bounds = array<i64: 32, 32>}, {pipeline_mode = #tpu.pipeline_mode<synchronous>, transform_indices = @transform_3, window_bounds = array<i64: 1, 32>}, {pipeline_mode = #tpu.pipeline_mode<synchronous>, transform_indices = @transform_4, window_bounds = array<i64: 32, 128>}, {pipeline_mode = #tpu.pipeline_mode<synchronous>, transform_indices = @transform_5, window_bounds = array<i64: 128, 128>}, {pipeline_mode = #tpu.pipeline_mode<synchronous>, transform_indices = @transform_6, window_bounds = array<i64: 128, 32>}, {pipeline_mode = #tpu.pipeline_mode<synchronous>, transform_indices = @transform_7, window_bounds = array<i64: 1, 32>}, {transform_indices = @transform_8, window_bounds = array<i64: 1, 1>}, {pipeline_mode = #tpu.pipeline_mode<synchronous>, transform_indices = @transform_9, window_bounds = array<i64: 32, 128>}, {pipeline_mode = #tpu.pipeline_mode<synchronous>, transform_indices = @transform_10, window_bounds = array<i64: 32, 128>}, {pipeline_mode = #tpu.pipeline_mode<synchronous>, transform_indices = @transform_11, window_bounds = array<i64: 1, 128>}, {pipeline_mode = #tpu.pipeline_mode<synchronous>, transform_indices = @transform_12, window_bounds = array<i64: 128, 128>}, {pipeline_mode = #tpu.pipeline_mode<synchronous>, transform_indices = @transform_13, window_bounds = array<i64: 1, 128>}, {pipeline_mode = #tpu.pipeline_mode<synchronous>, transform_indices = @transform_14, window_bounds = array<i64: 128, 128>}, {pipeline_mode = #tpu.pipeline_mode<synchronous>, transform_indices = @transform_15, window_bounds = array<i64: 1, 128>}, {transform_indices = @transform_16, window_bounds = array<i64: 8, 1>}]} {
    %c0 = arith.constant 0 : index
    %c0_0 = arith.constant 0 : index
    %0 = vector.load %arg1[%c0, %c0_0] : memref<8x32xf32, #tpu.memory_space<vmem>>, vector<8x32xf32>
    %c0_1 = arith.constant 0 : index
    %c0_2 = arith.constant 0 : index
    %c0_3 = arith.constant 0 : index
    %1 = vector.load %arg2[%c0_1, %c0_2, %c0_3] : memref<8x8x128xf32, #tpu.memory_space<vmem>>, vector<8x8x128xf32>
    %c0_4 = arith.constant 0 : index
    %c0_5 = arith.constant 0 : index
    %2 = vector.load %arg3[%c0_4, %c0_5] : memref<32x32xf32, #tpu.memory_space<vmem>>, vector<32x32xf32>
    %cst = arith.constant dense<0.000000e+00> : vector<8x32xf32>
    %3 = tpu.matmul %0, %2, %cst {dimension_numbers = #tpu.dot_dimension_numbers<[1], [0], [0], [1], [0, 0, 1, 1], [], []>} : vector<8x32xf32>, vector<32x32xf32>, vector<8x32xf32> -> vector<8x32xf32>
    %c0_6 = arith.constant 0 : index
    %c0_7 = arith.constant 0 : index
    %4 = vector.load %arg4[%c0_6, %c0_7] : memref<1x32xf32, #tpu.memory_space<vmem>>, vector<1x32xf32>
    %5 = vector.broadcast %4 : vector<1x32xf32> to vector<8x32xf32>
    %6 = arith.addf %3, %5 : vector<8x32xf32>
    %c0_8 = arith.constant 0 : index
    %c0_9 = arith.constant 0 : index
    %7 = vector.load %arg5[%c0_8, %c0_9] : memref<32x128xf32, #tpu.memory_space<vmem>>, vector<32x128xf32>
    %cst_10 = arith.constant dense<0.000000e+00> : vector<8x128xf32>
    %8 = tpu.matmul %6, %7, %cst_10 {dimension_numbers = #tpu.dot_dimension_numbers<[1], [0], [0], [1], [0, 0, 1, 1], [], []>} : vector<8x32xf32>, vector<32x128xf32>, vector<8x128xf32> -> vector<8x128xf32>
    %9 = vector.shape_cast %8 : vector<8x128xf32> to vector<8x1x128xf32>
    %10 = vector.broadcast %9 : vector<8x1x128xf32> to vector<8x8x128xf32>
    %11 = arith.mulf %1, %10 : vector<8x8x128xf32>
    %12 = vector.shape_cast %11 : vector<8x8x128xf32> to vector<64x128xf32>
    %c0_11 = arith.constant 0 : index
    %c0_12 = arith.constant 0 : index
    %13 = vector.load %arg6[%c0_11, %c0_12] : memref<128x128xf32, #tpu.memory_space<vmem>>, vector<128x128xf32>
    %cst_13 = arith.constant dense<0.000000e+00> : vector<64x128xf32>
    %14 = tpu.matmul %12, %13, %cst_13 {dimension_numbers = #tpu.dot_dimension_numbers<[1], [0], [0], [1], [0, 0, 1, 1], [], []>} : vector<64x128xf32>, vector<128x128xf32>, vector<64x128xf32> -> vector<64x128xf32>
    %15 = vector.shape_cast %14 : vector<64x128xf32> to vector<8x8x128xf32>
    %cst_14 = arith.constant dense<0xFF800000> : vector<8x8xf32>
    %16 = vector.multi_reduction <maximumf>, %15, %cst_14 [2] : vector<8x8x128xf32> to vector<8x8xf32>
    %17 = vector.shape_cast %16 : vector<8x8xf32> to vector<8x8x1xf32>
    %cst_15 = arith.constant dense<0xFF800000> : vector<8x1xf32>
    %18 = vector.multi_reduction <maximumf>, %17, %cst_15 [1] : vector<8x8x1xf32> to vector<8x1xf32>
    %19 = vector.shape_cast %18 : vector<8x1xf32> to vector<8x1x1xf32>
    %20 = vector.broadcast %19 : vector<8x1x1xf32> to vector<8x8x128xf32>
    %21 = arith.subf %15, %20 : vector<8x8x128xf32>
    %22 = math.exp %21 : vector<8x8x128xf32>
    %cst_16 = arith.constant dense<0.000000e+00> : vector<8x8xf32>
    %23 = vector.multi_reduction <add>, %22, %cst_16 [2] : vector<8x8x128xf32> to vector<8x8xf32>
    %24 = vector.shape_cast %23 : vector<8x8xf32> to vector<8x8x1xf32>
    %cst_17 = arith.constant dense<0.000000e+00> : vector<8x1xf32>
    %25 = vector.multi_reduction <add>, %24, %cst_17 [1] : vector<8x8x1xf32> to vector<8x1xf32>
    %26 = vector.shape_cast %25 : vector<8x1xf32> to vector<8x1x1xf32>
    %cst_18 = arith.constant 3.200000e+01 : f32
    %27 = vector.broadcast %cst_18 : f32 to vector<8x1x1xf32>
    %28 = arith.divf %27, %26 : vector<8x1x1xf32>
    %29 = vector.broadcast %28 : vector<8x1x1xf32> to vector<8x8x128xf32>
    %30 = arith.mulf %22, %29 : vector<8x8x128xf32>
    %31 = arith.mulf %30, %1 : vector<8x8x128xf32>
    %cst_19 = arith.constant dense<0.000000e+00> : vector<8x128xf32>
    %32 = vector.multi_reduction <add>, %31, %cst_19 [1] : vector<8x8x128xf32> to vector<8x128xf32>
    %c96_i32 = arith.constant 96 : i32
    %33 = tpu.dynamic_rotate %32 by %c96_i32 dim 1 : vector<8x128xf32>, i32 -> vector<8x128xf32>
    %34 = arith.addf %32, %33 : vector<8x128xf32>
    %c64_i32 = arith.constant 64 : i32
    %35 = tpu.dynamic_rotate %34 by %c64_i32 dim 1 : vector<8x128xf32>, i32 -> vector<8x128xf32>
    %36 = arith.addf %34, %35 : vector<8x128xf32>
    %c0_20 = arith.constant 0 : index
    %c0_21 = arith.constant 0 : index
    %37 = vector.load %arg7[%c0_20, %c0_21] : memref<128x32xf32, #tpu.memory_space<vmem>>, vector<128x32xf32>
    %cst_22 = arith.constant dense<0.000000e+00> : vector<8x32xf32>
    %38 = tpu.matmul %36, %37, %cst_22 {dimension_numbers = #tpu.dot_dimension_numbers<[1], [0], [0], [1], [0, 0, 1, 1], [], []>} : vector<8x128xf32>, vector<128x32xf32>, vector<8x32xf32> -> vector<8x32xf32>
    %c0_23 = arith.constant 0 : index
    %c0_24 = arith.constant 0 : index
    %39 = vector.load %arg8[%c0_23, %c0_24] : memref<1x32xf32, #tpu.memory_space<vmem>>, vector<1x32xf32>
    %40 = vector.broadcast %39 : vector<1x32xf32> to vector<8x32xf32>
    %41 = arith.addf %38, %40 : vector<8x32xf32>
    %c0_25 = arith.constant 0 : index
    %c0_26 = arith.constant 0 : index
    %42 = memref.load %arg9[%c0_25, %c0_26] : memref<1x1xf32, #tpu.memory_space<smem>>
    %c0_27 = arith.constant 0 : index
    %c0_28 = arith.constant 0 : index
    %43 = vector.load %arg10[%c0_27, %c0_28] : memref<32x128xf32, #tpu.memory_space<vmem>>, vector<32x128xf32>
    %cst_29 = arith.constant dense<0.000000e+00> : vector<8x128xf32>
    %44 = tpu.matmul %0, %43, %cst_29 {dimension_numbers = #tpu.dot_dimension_numbers<[1], [0], [0], [1], [0, 0, 1, 1], [], []>} : vector<8x32xf32>, vector<32x128xf32>, vector<8x128xf32> -> vector<8x128xf32>
    %c0_30 = arith.constant 0 : index
    %c0_31 = arith.constant 0 : index
    %45 = vector.load %arg11[%c0_30, %c0_31] : memref<32x128xf32, #tpu.memory_space<vmem>>, vector<32x128xf32>
    %cst_32 = arith.constant dense<0.000000e+00> : vector<8x128xf32>
    %46 = tpu.matmul %41, %45, %cst_32 {dimension_numbers = #tpu.dot_dimension_numbers<[1], [0], [0], [1], [0, 0, 1, 1], [], []>} : vector<8x32xf32>, vector<32x128xf32>, vector<8x128xf32> -> vector<8x128xf32>
    %47 = arith.addf %44, %46 : vector<8x128xf32>
    %c0_33 = arith.constant 0 : index
    %c0_34 = arith.constant 0 : index
    %48 = vector.load %arg12[%c0_33, %c0_34] : memref<1x128xf32, #tpu.memory_space<vmem>>, vector<1x128xf32>
    %49 = vector.broadcast %48 : vector<1x128xf32> to vector<8x128xf32>
    %50 = arith.addf %47, %49 : vector<8x128xf32>
    %cst_35 = arith.constant 0.000000e+00 : f32
    %51 = vector.broadcast %cst_35 : f32 to vector<8x128xf32>
    %52 = arith.cmpf oge, %50, %51 : vector<8x128xf32>
    %53 = vector.broadcast %42 : f32 to vector<8x128xf32>
    %54 = arith.mulf %53, %50 : vector<8x128xf32>
    %55 = arith.select %52, %50, %54 : vector<8x128xi1>, vector<8x128xf32>
    %c0_36 = arith.constant 0 : index
    %c0_37 = arith.constant 0 : index
    %56 = vector.load %arg13[%c0_36, %c0_37] : memref<128x128xf32, #tpu.memory_space<vmem>>, vector<128x128xf32>
    %cst_38 = arith.constant dense<0.000000e+00> : vector<8x128xf32>
    %57 = tpu.matmul %55, %56, %cst_38 {dimension_numbers = #tpu.dot_dimension_numbers<[1], [0], [0], [1], [0, 0, 1, 1], [], []>} : vector<8x128xf32>, vector<128x128xf32>, vector<8x128xf32> -> vector<8x128xf32>
    %c0_39 = arith.constant 0 : index
    %c0_40 = arith.constant 0 : index
    %58 = vector.load %arg14[%c0_39, %c0_40] : memref<1x128xf32, #tpu.memory_space<vmem>>, vector<1x128xf32>
    %59 = vector.broadcast %58 : vector<1x128xf32> to vector<8x128xf32>
    %60 = arith.addf %57, %59 : vector<8x128xf32>
    %cst_41 = arith.constant 0.000000e+00 : f32
    %61 = vector.broadcast %cst_41 : f32 to vector<8x128xf32>
    %62 = arith.cmpf oge, %60, %61 : vector<8x128xf32>
    %63 = vector.broadcast %42 : f32 to vector<8x128xf32>
    %64 = arith.mulf %63, %60 : vector<8x128xf32>
    %65 = arith.select %62, %60, %64 : vector<8x128xi1>, vector<8x128xf32>
    %c0_42 = arith.constant 0 : index
    %c0_43 = arith.constant 0 : index
    %66 = vector.load %arg15[%c0_42, %c0_43] : memref<128x128xf32, #tpu.memory_space<vmem>>, vector<128x128xf32>
    %cst_44 = arith.constant dense<0.000000e+00> : vector<8x128xf32>
    %67 = tpu.matmul %65, %66, %cst_44 {dimension_numbers = #tpu.dot_dimension_numbers<[1], [0], [0], [1], [0, 0, 1, 1], [], []>} : vector<8x128xf32>, vector<128x128xf32>, vector<8x128xf32> -> vector<8x128xf32>
    %c0_45 = arith.constant 0 : index
    %c0_46 = arith.constant 0 : index
    %68 = vector.load %arg16[%c0_45, %c0_46] : memref<1x128xf32, #tpu.memory_space<vmem>>, vector<1x128xf32>
    %69 = vector.broadcast %68 : vector<1x128xf32> to vector<8x128xf32>
    %70 = arith.addf %67, %69 : vector<8x128xf32>
    %cst_47 = arith.constant 0.000000e+00 : f32
    %71 = vector.broadcast %cst_47 : f32 to vector<8x128xf32>
    %72 = arith.cmpf oge, %70, %71 : vector<8x128xf32>
    %73 = vector.broadcast %42 : f32 to vector<8x128xf32>
    %74 = arith.mulf %73, %70 : vector<8x128xf32>
    %75 = arith.select %72, %70, %74 : vector<8x128xi1>, vector<8x128xf32>
    %76 = vector.extract_strided_slice %75 {offsets = [0, 0], sizes = [8, 1], strides = [1, 1]} : vector<8x128xf32> to vector<8x1xf32>
    %77 = arith.negf %76 : vector<8x1xf32>
    %78 = math.exp %77 : vector<8x1xf32>
    %cst_48 = arith.constant 1.000000e+00 : f32
    %79 = vector.broadcast %cst_48 : f32 to vector<8x1xf32>
    %80 = arith.addf %79, %78 : vector<8x1xf32>
    %81 = arith.divf %79, %80 : vector<8x1xf32>
    %c0_49 = arith.constant 0 : index
    %c0_50 = arith.constant 0 : index
    %82 = vector.load %arg17[%c0_49, %c0_50] : memref<8x1xf32, #tpu.memory_space<vmem>>, vector<8x1xf32>
    tpu.vector_store %arg17[%c0_49, %c0_50], %81 {strides = array<i32>} : memref<8x1xf32, #tpu.memory_space<vmem>>, vector<8x1xf32>,
    return
  }
  func.func @transform_0(%arg0: i32) -> (i32, i32) {
    %c0_i32 = arith.constant 0 : i32
    %c0_i32_0 = arith.constant 0 : i32
    return %arg0, %c0_i32 : i32, i32
  }
  func.func @transform_1(%arg0: i32) -> (i32, i32, i32) {
    %c0_i32 = arith.constant 0 : i32
    %c0_i32_0 = arith.constant 0 : i32
    %c0_i32_1 = arith.constant 0 : i32
    return %arg0, %c0_i32, %c0_i32_0 : i32, i32, i32
  }
  func.func @transform_2(%arg0: i32) -> (i32, i32) {
    %c0_i32 = arith.constant 0 : i32
    %c0_i32_0 = arith.constant 0 : i32
    %c0_i32_1 = arith.constant 0 : i32
    return %c0_i32, %c0_i32_0 : i32, i32
  }
  func.func @transform_3(%arg0: i32) -> (i32, i32) {
    %c0_i32 = arith.constant 0 : i32
    %c0_i32_0 = arith.constant 0 : i32
    %c0_i32_1 = arith.constant 0 : i32
    return %c0_i32, %c0_i32_0 : i32, i32
  }
  func.func @transform_4(%arg0: i32) -> (i32, i32) {
    %c0_i32 = arith.constant 0 : i32
    %c0_i32_0 = arith.constant 0 : i32
    %c0_i32_1 = arith.constant 0 : i32
    return %c0_i32, %c0_i32_0 : i32, i32
  }
  func.func @transform_5(%arg0: i32) -> (i32, i32) {
    %c0_i32 = arith.constant 0 : i32
    %c0_i32_0 = arith.constant 0 : i32
    %c0_i32_1 = arith.constant 0 : i32
    return %c0_i32, %c0_i32_0 : i32, i32
  }
  func.func @transform_6(%arg0: i32) -> (i32, i32) {
    %c0_i32 = arith.constant 0 : i32
    %c0_i32_0 = arith.constant 0 : i32
    %c0_i32_1 = arith.constant 0 : i32
    return %c0_i32, %c0_i32_0 : i32, i32
  }
  func.func @transform_7(%arg0: i32) -> (i32, i32) {
    %c0_i32 = arith.constant 0 : i32
    %c0_i32_0 = arith.constant 0 : i32
    %c0_i32_1 = arith.constant 0 : i32
    return %c0_i32, %c0_i32_0 : i32, i32
  }
  func.func @transform_8(%arg0: i32) -> (i32, i32) {
    %c0_i32 = arith.constant 0 : i32
    %c0_i32_0 = arith.constant 0 : i32
    %c0_i32_1 = arith.constant 0 : i32
    return %c0_i32, %c0_i32_0 : i32, i32
  }
  func.func @transform_9(%arg0: i32) -> (i32, i32) {
    %c0_i32 = arith.constant 0 : i32
    %c0_i32_0 = arith.constant 0 : i32
    %c0_i32_1 = arith.constant 0 : i32
    return %c0_i32, %c0_i32_0 : i32, i32
  }
  func.func @transform_10(%arg0: i32) -> (i32, i32) {
    %c0_i32 = arith.constant 0 : i32
    %c0_i32_0 = arith.constant 0 : i32
    %c0_i32_1 = arith.constant 0 : i32
    return %c0_i32, %c0_i32_0 : i32, i32
  }
  func.func @transform_11(%arg0: i32) -> (i32, i32) {
    %c0_i32 = arith.constant 0 : i32
    %c0_i32_0 = arith.constant 0 : i32
    %c0_i32_1 = arith.constant 0 : i32
    return %c0_i32, %c0_i32_0 : i32, i32
  }
  func.func @transform_12(%arg0: i32) -> (i32, i32) {
    %c0_i32 = arith.constant 0 : i32
    %c0_i32_0 = arith.constant 0 : i32
    %c0_i32_1 = arith.constant 0 : i32
    return %c0_i32, %c0_i32_0 : i32, i32
  }
  func.func @transform_13(%arg0: i32) -> (i32, i32) {
    %c0_i32 = arith.constant 0 : i32
    %c0_i32_0 = arith.constant 0 : i32
    %c0_i32_1 = arith.constant 0 : i32
    return %c0_i32, %c0_i32_0 : i32, i32
  }
  func.func @transform_14(%arg0: i32) -> (i32, i32) {
    %c0_i32 = arith.constant 0 : i32
    %c0_i32_0 = arith.constant 0 : i32
    %c0_i32_1 = arith.constant 0 : i32
    return %c0_i32, %c0_i32_0 : i32, i32
  }
  func.func @transform_15(%arg0: i32) -> (i32, i32) {
    %c0_i32 = arith.constant 0 : i32
    %c0_i32_0 = arith.constant 0 : i32
    %c0_i32_1 = arith.constant 0 : i32
    return %c0_i32, %c0_i32_0 : i32, i32
  }
  func.func @transform_16(%arg0: i32) -> (i32, i32) {
    %c0_i32 = arith.constant 0 : i32
    %c0_i32_0 = arith.constant 0 : i32
    return %arg0, %c0_i32 : i32, i32
  }
}

module attributes {stable_mosaic.version = 11 : i64} {
  func.func @kernel(%arg0: i32, %arg1: memref<8x32xf32, #tpu.memory_space<vmem>>, %arg2: memref<8x8x128xf32, #tpu.memory_space<vmem>>, %arg3: memref<32x32xf32, #tpu.memory_space<vmem>>, %arg4: memref<1x32xf32, #tpu.memory_space<vmem>>, %arg5: memref<32x128xf32, #tpu.memory_space<vmem>>, %arg6: memref<128x128xf32, #tpu.memory_space<vmem>>, %arg7: memref<128x32xf32, #tpu.memory_space<vmem>>, %arg8: memref<1x32xf32, #tpu.memory_space<vmem>>, %arg9: memref<1x1xf32, #tpu.memory_space<smem>>, %arg10: memref<32x128xf32, #tpu.memory_space<vmem>>, %arg11: memref<32x128xf32, #tpu.memory_space<vmem>>, %arg12: memref<1x128xf32, #tpu.memory_space<vmem>>, %arg13: memref<128x128xf32, #tpu.memory_space<vmem>>, %arg14: memref<1x128xf32, #tpu.memory_space<vmem>>, %arg15: memref<128x128xf32, #tpu.memory_space<vmem>>, %arg16: memref<1x128xf32, #tpu.memory_space<vmem>>, %arg17: memref<8x1xf32, #tpu.memory_space<vmem>>) attributes {dimension_semantics = [#tpu.dimension_semantics<parallel>], iteration_bounds = array<i64: 1>, scalar_prefetch = 0 : i64, scratch_operands = 0 : i64, tpu.core_type = #tpu.core_type<tc>, window_params = [{transform_indices = @transform_0, window_bounds = array<i64: 8, 32>}, {transform_indices = @transform_1, window_bounds = array<i64: 8, 8, 128>}, {pipeline_mode = #tpu.pipeline_mode<synchronous>, transform_indices = @transform_2, window_bounds = array<i64: 32, 32>}, {pipeline_mode = #tpu.pipeline_mode<synchronous>, transform_indices = @transform_3, window_bounds = array<i64: 1, 32>}, {pipeline_mode = #tpu.pipeline_mode<synchronous>, transform_indices = @transform_4, window_bounds = array<i64: 32, 128>}, {pipeline_mode = #tpu.pipeline_mode<synchronous>, transform_indices = @transform_5, window_bounds = array<i64: 128, 128>}, {pipeline_mode = #tpu.pipeline_mode<synchronous>, transform_indices = @transform_6, window_bounds = array<i64: 128, 32>}, {pipeline_mode = #tpu.pipeline_mode<synchronous>, transform_indices = @transform_7, window_bounds = array<i64: 1, 32>}, {transform_indices = @transform_8, window_bounds = array<i64: 1, 1>}, {pipeline_mode = #tpu.pipeline_mode<synchronous>, transform_indices = @transform_9, window_bounds = array<i64: 32, 128>}, {pipeline_mode = #tpu.pipeline_mode<synchronous>, transform_indices = @transform_10, window_bounds = array<i64: 32, 128>}, {pipeline_mode = #tpu.pipeline_mode<synchronous>, transform_indices = @transform_11, window_bounds = array<i64: 1, 128>}, {pipeline_mode = #tpu.pipeline_mode<synchronous>, transform_indices = @transform_12, window_bounds = array<i64: 128, 128>}, {pipeline_mode = #tpu.pipeline_mode<synchronous>, transform_indices = @transform_13, window_bounds = array<i64: 1, 128>}, {pipeline_mode = #tpu.pipeline_mode<synchronous>, transform_indices = @transform_14, window_bounds = array<i64: 128, 128>}, {pipeline_mode = #tpu.pipeline_mode<synchronous>, transform_indices = @transform_15, window_bounds = array<i64: 1, 128>}, {transform_indices = @transform_16, window_bounds = array<i64: 8, 1>}]} {
    %c0 = arith.constant 0 : index
    %c0_0 = arith.constant 0 : index
    %0 = vector.load %arg1[%c0, %c0_0] : memref<8x32xf32, #tpu.memory_space<vmem>>, vector<8x32xf32>
    %c0_1 = arith.constant 0 : index
    %c0_2 = arith.constant 0 : index
    %c0_3 = arith.constant 0 : index
    %1 = vector.load %arg2[%c0_1, %c0_2, %c0_3] : memref<8x8x128xf32, #tpu.memory_space<vmem>>, vector<8x8x128xf32>
    %c0_4 = arith.constant 0 : index
    %c0_5 = arith.constant 0 : index
    %2 = vector.load %arg3[%c0_4, %c0_5] : memref<32x32xf32, #tpu.memory_space<vmem>>, vector<32x32xf32>
    %cst = arith.constant dense<0.000000e+00> : vector<8x32xf32>
    %3 = tpu.matmul %0, %2, %cst {dimension_numbers = #tpu.dot_dimension_numbers<[1], [0], [0], [1], [0, 0, 1, 1], [], []>} : vector<8x32xf32>, vector<32x32xf32>, vector<8x32xf32> -> vector<8x32xf32>
    %c0_6 = arith.constant 0 : index
    %c0_7 = arith.constant 0 : index
    %4 = vector.load %arg4[%c0_6, %c0_7] : memref<1x32xf32, #tpu.memory_space<vmem>>, vector<1x32xf32>
    %5 = vector.broadcast %4 : vector<1x32xf32> to vector<8x32xf32>
    %6 = arith.addf %3, %5 : vector<8x32xf32>
    %c0_8 = arith.constant 0 : index
    %c0_9 = arith.constant 0 : index
    %7 = vector.load %arg5[%c0_8, %c0_9] : memref<32x128xf32, #tpu.memory_space<vmem>>, vector<32x128xf32>
    %cst_10 = arith.constant dense<0.000000e+00> : vector<8x128xf32>
    %8 = tpu.matmul %6, %7, %cst_10 {dimension_numbers = #tpu.dot_dimension_numbers<[1], [0], [0], [1], [0, 0, 1, 1], [], []>} : vector<8x32xf32>, vector<32x128xf32>, vector<8x128xf32> -> vector<8x128xf32>
    %9 = vector.shape_cast %8 : vector<8x128xf32> to vector<8x1x128xf32>
    %10 = vector.broadcast %9 : vector<8x1x128xf32> to vector<8x8x128xf32>
    %11 = arith.mulf %1, %10 : vector<8x8x128xf32>
    %12 = vector.shape_cast %11 : vector<8x8x128xf32> to vector<64x128xf32>
    %c0_11 = arith.constant 0 : index
    %c0_12 = arith.constant 0 : index
    %13 = vector.load %arg6[%c0_11, %c0_12] : memref<128x128xf32, #tpu.memory_space<vmem>>, vector<128x128xf32>
    %cst_13 = arith.constant dense<0.000000e+00> : vector<64x128xf32>
    %14 = tpu.matmul %12, %13, %cst_13 {dimension_numbers = #tpu.dot_dimension_numbers<[1], [0], [0], [1], [0, 0, 1, 1], [], []>} : vector<64x128xf32>, vector<128x128xf32>, vector<64x128xf32> -> vector<64x128xf32>
    %15 = vector.shape_cast %14 : vector<64x128xf32> to vector<8x8x128xf32>
    %cst_14 = arith.constant dense<0xFF800000> : vector<8x8xf32>
    %16 = vector.multi_reduction <maximumf>, %15, %cst_14 [2] : vector<8x8x128xf32> to vector<8x8xf32>
    %17 = vector.shape_cast %16 : vector<8x8xf32> to vector<8x8x1xf32>
    %cst_15 = arith.constant dense<0xFF800000> : vector<8x1xf32>
    %18 = vector.multi_reduction <maximumf>, %17, %cst_15 [1] : vector<8x8x1xf32> to vector<8x1xf32>
    %19 = vector.shape_cast %18 : vector<8x1xf32> to vector<8x1x1xf32>
    %20 = vector.broadcast %19 : vector<8x1x1xf32> to vector<8x8x128xf32>
    %21 = arith.subf %15, %20 : vector<8x8x128xf32>
    %22 = math.exp %21 : vector<8x8x128xf32>
    %cst_16 = arith.constant dense<0.000000e+00> : vector<8x8xf32>
    %23 = vector.multi_reduction <add>, %22, %cst_16 [2] : vector<8x8x128xf32> to vector<8x8xf32>
    %24 = vector.shape_cast %23 : vector<8x8xf32> to vector<8x8x1xf32>
    %cst_17 = arith.constant dense<0.000000e+00> : vector<8x1xf32>
    %25 = vector.multi_reduction <add>, %24, %cst_17 [1] : vector<8x8x1xf32> to vector<8x1xf32>
    %26 = vector.shape_cast %25 : vector<8x1xf32> to vector<8x1x1xf32>
    %cst_18 = arith.constant 3.200000e+01 : f32
    %27 = vector.broadcast %cst_18 : f32 to vector<8x1x1xf32>
    %28 = arith.divf %27, %26 : vector<8x1x1xf32>
    %29 = vector.broadcast %28 : vector<8x1x1xf32> to vector<8x8x128xf32>
    %30 = arith.mulf %22, %29 : vector<8x8x128xf32>
    %31 = arith.mulf %30, %1 : vector<8x8x128xf32>
    %cst_19 = arith.constant dense<0.000000e+00> : vector<8x128xf32>
    %32 = vector.multi_reduction <add>, %31, %cst_19 [1] : vector<8x8x128xf32> to vector<8x128xf32>
    %c96_i32 = arith.constant 96 : i32
    %33 = tpu.dynamic_rotate %32 by %c96_i32 dim 1 : vector<8x128xf32>, i32 -> vector<8x128xf32>
    %34 = arith.addf %32, %33 : vector<8x128xf32>
    %c64_i32 = arith.constant 64 : i32
    %35 = tpu.dynamic_rotate %34 by %c64_i32 dim 1 : vector<8x128xf32>, i32 -> vector<8x128xf32>
    %36 = arith.addf %34, %35 : vector<8x128xf32>
    %c0_20 = arith.constant 0 : index
    %c0_21 = arith.constant 0 : index
    %37 = vector.load %arg7[%c0_20, %c0_21] : memref<128x32xf32, #tpu.memory_space<vmem>>, vector<128x32xf32>
    %cst_22 = arith.constant dense<0.000000e+00> : vector<8x32xf32>
    %38 = tpu.matmul %36, %37, %cst_22 {dimension_numbers = #tpu.dot_dimension_numbers<[1], [0], [0], [1], [0, 0, 1, 1], [], []>} : vector<8x128xf32>, vector<128x32xf32>, vector<8x32xf32> -> vector<8x32xf32>
    %c0_23 = arith.constant 0 : index
    %c0_24 = arith.constant 0 : index
    %39 = vector.load %arg8[%c0_23, %c0_24] : memref<1x32xf32, #tpu.memory_space<vmem>>, vector<1x32xf32>
    %40 = vector.broadcast %39 : vector<1x32xf32> to vector<8x32xf32>
    %41 = arith.addf %38, %40 : vector<8x32xf32>
    %c0_25 = arith.constant 0 : index
    %c0_26 = arith.constant 0 : index
    %42 = memref.load %arg9[%c0_25, %c0_26] : memref<1x1xf32, #tpu.memory_space<smem>>
    %c0_27 = arith.constant 0 : index
    %c0_28 = arith.constant 0 : index
    %43 = vector.load %arg10[%c0_27, %c0_28] : memref<32x128xf32, #tpu.memory_space<vmem>>, vector<32x128xf32>
    %cst_29 = arith.constant dense<0.000000e+00> : vector<8x128xf32>
    %44 = tpu.matmul %0, %43, %cst_29 {dimension_numbers = #tpu.dot_dimension_numbers<[1], [0], [0], [1], [0, 0, 1, 1], [], []>} : vector<8x32xf32>, vector<32x128xf32>, vector<8x128xf32> -> vector<8x128xf32>
    %c0_30 = arith.constant 0 : index
    %c0_31 = arith.constant 0 : index
    %45 = vector.load %arg11[%c0_30, %c0_31] : memref<32x128xf32, #tpu.memory_space<vmem>>, vector<32x128xf32>
    %cst_32 = arith.constant dense<0.000000e+00> : vector<8x128xf32>
    %46 = tpu.matmul %41, %45, %cst_32 {dimension_numbers = #tpu.dot_dimension_numbers<[1], [0], [0], [1], [0, 0, 1, 1], [], []>} : vector<8x32xf32>, vector<32x128xf32>, vector<8x128xf32> -> vector<8x128xf32>
    %47 = arith.addf %44, %46 : vector<8x128xf32>
    %c0_33 = arith.constant 0 : index
    %c0_34 = arith.constant 0 : index
    %48 = vector.load %arg12[%c0_33, %c0_34] : memref<1x128xf32, #tpu.memory_space<vmem>>, vector<1x128xf32>
    %49 = vector.broadcast %48 : vector<1x128xf32> to vector<8x128xf32>
    %50 = arith.addf %47, %49 : vector<8x128xf32>
    %cst_35 = arith.constant 0.000000e+00 : f32
    %51 = vector.broadcast %cst_35 : f32 to vector<8x128xf32>
    %52 = arith.cmpf oge, %50, %51 : vector<8x128xf32>
    %53 = vector.broadcast %42 : f32 to vector<8x128xf32>
    %54 = arith.mulf %53, %50 : vector<8x128xf32>
    %55 = arith.select %52, %50, %54 : vector<8x128xi1>, vector<8x128xf32>
    %c0_36 = arith.constant 0 : index
    %c0_37 = arith.constant 0 : index
    %56 = vector.load %arg13[%c0_36, %c0_37] : memref<128x128xf32, #tpu.memory_space<vmem>>, vector<128x128xf32>
    %cst_38 = arith.constant dense<0.000000e+00> : vector<8x128xf32>
    %57 = tpu.matmul %55, %56, %cst_38 {dimension_numbers = #tpu.dot_dimension_numbers<[1], [0], [0], [1], [0, 0, 1, 1], [], []>} : vector<8x128xf32>, vector<128x128xf32>, vector<8x128xf32> -> vector<8x128xf32>
    %c0_39 = arith.constant 0 : index
    %c0_40 = arith.constant 0 : index
    %58 = vector.load %arg14[%c0_39, %c0_40] : memref<1x128xf32, #tpu.memory_space<vmem>>, vector<1x128xf32>
    %59 = vector.broadcast %58 : vector<1x128xf32> to vector<8x128xf32>
    %60 = arith.addf %57, %59 : vector<8x128xf32>
    %cst_41 = arith.constant 0.000000e+00 : f32
    %61 = vector.broadcast %cst_41 : f32 to vector<8x128xf32>
    %62 = arith.cmpf oge, %60, %61 : vector<8x128xf32>
    %63 = vector.broadcast %42 : f32 to vector<8x128xf32>
    %64 = arith.mulf %63, %60 : vector<8x128xf32>
    %65 = arith.select %62, %60, %64 : vector<8x128xi1>, vector<8x128xf32>
    %c0_42 = arith.constant 0 : index
    %c0_43 = arith.constant 0 : index
    %66 = vector.load %arg15[%c0_42, %c0_43] : memref<128x128xf32, #tpu.memory_space<vmem>>, vector<128x128xf32>
    %cst_44 = arith.constant dense<0.000000e+00> : vector<8x128xf32>
    %67 = tpu.matmul %65, %66, %cst_44 {dimension_numbers = #tpu.dot_dimension_numbers<[1], [0], [0], [1], [0, 0, 1, 1], [], []>} : vector<8x128xf32>, vector<128x128xf32>, vector<8x128xf32> -> vector<8x128xf32>
    %c0_45 = arith.constant 0 : index
    %c0_46 = arith.constant 0 : index
    %68 = vector.load %arg16[%c0_45, %c0_46] : memref<1x128xf32, #tpu.memory_space<vmem>>, vector<1x128xf32>
    %69 = vector.broadcast %68 : vector<1x128xf32> to vector<8x128xf32>
    %70 = arith.addf %67, %69 : vector<8x128xf32>
    %cst_47 = arith.constant 0.000000e+00 : f32
    %71 = vector.broadcast %cst_47 : f32 to vector<8x128xf32>
    %72 = arith.cmpf oge, %70, %71 : vector<8x128xf32>
    %73 = vector.broadcast %42 : f32 to vector<8x128xf32>
    %74 = arith.mulf %73, %70 : vector<8x128xf32>
    %75 = arith.select %72, %70, %74 : vector<8x128xi1>, vector<8x128xf32>
    %76 = vector.extract_strided_slice %75 {offsets = [0, 0], sizes = [8, 1], strides = [1, 1]} : vector<8x128xf32> to vector<8x1xf32>
    %77 = arith.negf %76 : vector<8x1xf32>
    %78 = math.exp %77 : vector<8x1xf32>
    %cst_48 = arith.constant 1.000000e+00 : f32
    %79 = vector.broadcast %cst_48 : f32 to vector<8x1xf32>
    %80 = arith.addf %79, %78 : vector<8x1xf32>
    %81 = arith.divf %79, %80 : vector<8x1xf32>
    %c0_49 = arith.constant 0 : index
    %c0_50 = arith.constant 0 : index
    %82 = vector.load %arg17[%c0_49, %c0_50] : memref<8x1xf32, #tpu.memory_space<vmem>>, vector<8x1xf32>
    tpu.vector_store %arg17[%c0_49, %c0_50], %81 {strides = array<i32>} : memref<8x1xf32, #tpu.memory_space<vmem>>, vector<8x1xf32>,
    return
  }
  func.func @transform_0(%arg0: i32) -> (i32, i32) {
    %c0_i32 = arith.constant 0 : i32
    %c0_i32_0 = arith.constant 0 : i32
    return %arg0, %c0_i32 : i32, i32
  }
  func.func @transform_1(%arg0: i32) -> (i32, i32, i32) {
    %c0_i32 = arith.constant 0 : i32
    %c0_i32_0 = arith.constant 0 : i32
    %c0_i32_1 = arith.constant 0 : i32
    return %arg0, %c0_i32, %c0_i32_0 : i32, i32, i32
  }
  func.func @transform_2(%arg0: i32) -> (i32, i32) {
    %c0_i32 = arith.constant 0 : i32
    %c0_i32_0 = arith.constant 0 : i32
    %c0_i32_1 = arith.constant 0 : i32
    return %c0_i32, %c0_i32_0 : i32, i32
  }
  func.func @transform_3(%arg0: i32) -> (i32, i32) {
    %c0_i32 = arith.constant 0 : i32
    %c0_i32_0 = arith.constant 0 : i32
    %c0_i32_1 = arith.constant 0 : i32
    return %c0_i32, %c0_i32_0 : i32, i32
  }
  func.func @transform_4(%arg0: i32) -> (i32, i32) {
    %c0_i32 = arith.constant 0 : i32
    %c0_i32_0 = arith.constant 0 : i32
    %c0_i32_1 = arith.constant 0 : i32
    return %c0_i32, %c0_i32_0 : i32, i32
  }
  func.func @transform_5(%arg0: i32) -> (i32, i32) {
    %c0_i32 = arith.constant 0 : i32
    %c0_i32_0 = arith.constant 0 : i32
    %c0_i32_1 = arith.constant 0 : i32
    return %c0_i32, %c0_i32_0 : i32, i32
  }
  func.func @transform_6(%arg0: i32) -> (i32, i32) {
    %c0_i32 = arith.constant 0 : i32
    %c0_i32_0 = arith.constant 0 : i32
    %c0_i32_1 = arith.constant 0 : i32
    return %c0_i32, %c0_i32_0 : i32, i32
  }
  func.func @transform_7(%arg0: i32) -> (i32, i32) {
    %c0_i32 = arith.constant 0 : i32
    %c0_i32_0 = arith.constant 0 : i32
    %c0_i32_1 = arith.constant 0 : i32
    return %c0_i32, %c0_i32_0 : i32, i32
  }
  func.func @transform_8(%arg0: i32) -> (i32, i32) {
    %c0_i32 = arith.constant 0 : i32
    %c0_i32_0 = arith.constant 0 : i32
    %c0_i32_1 = arith.constant 0 : i32
    return %c0_i32, %c0_i32_0 : i32, i32
  }
  func.func @transform_9(%arg0: i32) -> (i32, i32) {
    %c0_i32 = arith.constant 0 : i32
    %c0_i32_0 = arith.constant 0 : i32
    %c0_i32_1 = arith.constant 0 : i32
    return %c0_i32, %c0_i32_0 : i32, i32
  }
  func.func @transform_10(%arg0: i32) -> (i32, i32) {
    %c0_i32 = arith.constant 0 : i32
    %c0_i32_0 = arith.constant 0 : i32
    %c0_i32_1 = arith.constant 0 : i32
    return %c0_i32, %c0_i32_0 : i32, i32
  }
  func.func @transform_11(%arg0: i32) -> (i32, i32) {
    %c0_i32 = arith.constant 0 : i32
    %c0_i32_0 = arith.constant 0 : i32
    %c0_i32_1 = arith.constant 0 : i32
    return %c0_i32, %c0_i32_0 : i32, i32
  }
  func.func @transform_12(%arg0: i32) -> (i32, i32) {
    %c0_i32 = arith.constant 0 : i32
    %c0_i32_0 = arith.constant 0 : i32
    %c0_i32_1 = arith.constant 0 : i32
    return %c0_i32, %c0_i32_0 : i32, i32
  }
  func.func @transform_13(%arg0: i32) -> (i32, i32) {
    %c0_i32 = arith.constant 0 : i32
    %c0_i32_0 = arith.constant 0 : i32
    %c0_i32_1 = arith.constant 0 : i32
    return %c0_i32, %c0_i32_0 : i32, i32
  }
  func.func @transform_14(%arg0: i32) -> (i32, i32) {
    %c0_i32 = arith.constant 0 : i32
    %c0_i32_0 = arith.constant 0 : i32
    %c0_i32_1 = arith.constant 0 : i32
    return %c0_i32, %c0_i32_0 : i32, i32
  }
  func.func @transform_15(%arg0: i32) -> (i32, i32) {
    %c0_i32 = arith.constant 0 : i32
    %c0_i32_0 = arith.constant 0 : i32
    %c0_i32_1 = arith.constant 0 : i32
    return %c0_i32, %c0_i32_0 : i32, i32
  }
  func.func @transform_16(%arg0: i32) -> (i32, i32) {
    %c0_i32 = arith.constant 0 : i32
    %c0_i32_0 = arith.constant 0 : i32
    return %arg0, %c0_i32 : i32, i32
  }
}

</mosaic_0001>

<llo_original>
// kernel: tpu_custom_call.1
$region0: #{tpu_custom_call.1}
  #allocation0 [shape = 'u32[]', space=smem, size = 0x4, offset = 0x4, fixed_abs, tag = 'smem constant byte address 0x4 - core index']
  #allocation1 [shape = 'u32[144,128]{1,0:T(1,128)}', space=vmem, size = 0x12000, scoped, tag = 'internal scratch']
  #allocation2 [shape = 'f32[1,1]{1,0:T(1,128)S(6)}', space=smem, size = 0x200, scoped, tag = 'scoped memory for tpu_custom_call.1']
  %s0 = inlined_call_operand.hbm [shape: f32[8,32], index: 0, kind: input, shape index: {}]
  %s1 = inlined_call_operand.hbm [shape: f32[8,8,128], index: 1, kind: input, shape index: {}]
  %s2 = inlined_call_operand.vmem [shape: f32[32,32], index: 2, kind: input, shape index: {}]
  %s3 = inlined_call_operand.vmem [shape: f32[1,32], index: 3, kind: input, shape index: {}]
  %s4 = inlined_call_operand.hbm [shape: f32[32,128], index: 4, kind: input, shape index: {}]
  %s5 = inlined_call_operand.vmem [shape: f32[128,128], index: 5, kind: input, shape index: {}]
  %s6 = inlined_call_operand.vmem [shape: f32[128,32], index: 6, kind: input, shape index: {}]
  %s7 = inlined_call_operand.vmem [shape: f32[1,32], index: 7, kind: input, shape index: {}]
  %s8 = inlined_call_operand.<no memory space> [shape: f32[1,1], index: 8, kind: input, shape index: {}]
  %s9 = inlined_call_operand.vmem [shape: f32[32,128], index: 9, kind: input, shape index: {}]
  %s10 = inlined_call_operand.hbm [shape: f32[32,128], index: 10, kind: input, shape index: {}]
  %s11 = inlined_call_operand.vmem [shape: f32[1,128], index: 11, kind: input, shape index: {}]
  %s12 = inlined_call_operand.hbm [shape: f32[128,128], index: 12, kind: input, shape index: {}]
  %s13 = inlined_call_operand.vmem [shape: f32[1,128], index: 13, kind: input, shape index: {}]
  %s14 = inlined_call_operand.hbm [shape: f32[128,128], index: 14, kind: input, shape index: {}]
  %s15 = inlined_call_operand.vmem [shape: f32[1,128], index: 15, kind: input, shape index: {}]
  %s16 = inlined_call_operand.vmem [shape: f32[8,1], index: 16, kind: output, shape index: {}]
  %s17 = sld [smem:[#allocation0]]
  $region98: #{tpu_custom_call.1} parent=0
    _
  %s19 = ssub.s32 1, %s17
  %s20 = scalar_select 0, %s19, %s17
  %21 = sst [smem:[#allocation2]] %s8
  $region1: #{tpu_custom_call.1} parent=0
    #allocation3 [shape = 'u8[4096]{0}', space=vmem, size = 0x1000, scoped, tag = 'input window, operand 0, single buffered']
    #allocation4 [shape = 's32[1]{0}', space=sflag, size = 0x4, scoped, tag = 'scoped memory for tpu_custom_call.1']
    #allocation5 [shape = 'u8[32768]{0}', space=vmem, size = 0x8000, scoped, tag = 'input window, operand 1, single buffered']
    #allocation6 [shape = 's32[1]{0}', space=sflag, size = 0x4, scoped, tag = 'scoped memory for tpu_custom_call.1']
    #allocation7 [shape = 'u8[16384]{0}', space=vmem, size = 0x4000, scoped, tag = 'input window, operand 4, single buffered']
    #allocation8 [shape = 'u8[16384]{0}', space=vmem, size = 0x4000, scoped, tag = 'input window, operand 10, single buffered']
    #allocation9 [shape = 's32[1]{0}', space=sflag, size = 0x4, scoped, tag = 'scoped memory for tpu_custom_call.1']
    #allocation10 [shape = 'u8[65536]{0}', space=vmem, size = 0x10000, scoped, tag = 'input window, operand 12, single buffered']
    #allocation11 [shape = 'u8[65536]{0}', space=vmem, size = 0x10000, scoped, tag = 'input window, operand 14, single buffered']
    #allocation12 [shape = 's32[1]{0}', space=sflag, size = 0x4, scoped, tag = 'scoped memory for tpu_custom_call.1']
    %22 = vsyncpa [#allocation4], 0
    %23 = vsyncpa [#allocation6], 0
    %24 = vsyncpa [#allocation9], 0
    %25 = vsyncpa [#allocation12], 0
    // Predicated region
    $region2: #{tpu_custom_call.1} parent=1 // pred_check
      _
    $region3: #{tpu_custom_call.1} parent=1 // pred_check_branch
      %27 = sbr.rel (0) target = $region5
    $region4: #{tpu_custom_call.1} parent=1 // pred_region
      %s29 = ssub.s32 128, 128
      %30 = vsyncadd [#allocation4], %s29
      %s32 = sshll.u32 [#allocation3], 4
      %s33 = int_to_ptr.vmem [resolvable:$true] %s32
      %35 = dma.hbm_to_vmem [thread:$0]  %s0, 128, %s33, [#allocation4]
    $region5: #{tpu_custom_call.1} parent=1 // pred_fallthru
      _
    // Predicated region
    $region6: #{tpu_custom_call.1} parent=1 // pred_check
      _
    $region7: #{tpu_custom_call.1} parent=1 // pred_check_branch
      %37 = sbr.rel (0) target = $region9
    $region8: #{tpu_custom_call.1} parent=1 // pred_region
      %s39 = ssub.s32 1024, 1024
      %40 = vsyncadd [#allocation6], %s39
      %s41 = sshll.u32 [#allocation5], 4
      %s42 = int_to_ptr.vmem [resolvable:$true] %s41
      %47 = dma.hbm_to_vmem [thread:$0]  %s1, 1024, %s42, [#allocation6], 128, 128, 8
    $region9: #{tpu_custom_call.1} parent=1 // pred_fallthru
      _
    // Predicated region
    $region10: #{tpu_custom_call.1} parent=1 // pred_check
      _
    $region11: #{tpu_custom_call.1} parent=1 // pred_check_branch
      %49 = sbr.rel (0) target = $region13
    $region12: #{tpu_custom_call.1} parent=1 // pred_region
      _
    $region13: #{tpu_custom_call.1} parent=1 // pred_fallthru
      _
    // Predicated region
    $region14: #{tpu_custom_call.1} parent=1 // pred_check
      _
    $region15: #{tpu_custom_call.1} parent=1 // pred_check_branch
      %51 = sbr.rel (0) target = $region17
    $region16: #{tpu_custom_call.1} parent=1 // pred_region
      _
    $region17: #{tpu_custom_call.1} parent=1 // pred_fallthru
      _
    // Predicated region
    $region18: #{tpu_custom_call.1} parent=1 // pred_check
      _
    $region19: #{tpu_custom_call.1} parent=1 // pred_check_branch
      %53 = sbr.rel (0) target = $region21
    $region20: #{tpu_custom_call.1} parent=1 // pred_region
      %s55 = ssub.s32 512, 512
      %56 = vsyncadd [#allocation6], %s55
      %s57 = sshll.u32 [#allocation7], 4
      %s58 = int_to_ptr.vmem [resolvable:$true] %s57
      %63 = dma.hbm_to_vmem [thread:$0]  %s4, 512, %s58, [#allocation6], 128, 128, 8
    $region21: #{tpu_custom_call.1} parent=1 // pred_fallthru
      _
    // Predicated region
    $region22: #{tpu_custom_call.1} parent=1 // pred_check
      _
    $region23: #{tpu_custom_call.1} parent=1 // pred_check_branch
      %65 = sbr.rel (0) target = $region25
    $region24: #{tpu_custom_call.1} parent=1 // pred_region
      _
    $region25: #{tpu_custom_call.1} parent=1 // pred_fallthru
      _
    // Predicated region
    $region26: #{tpu_custom_call.1} parent=1 // pred_check
      _
    $region27: #{tpu_custom_call.1} parent=1 // pred_check_branch
      %67 = sbr.rel (0) target = $region29
    $region28: #{tpu_custom_call.1} parent=1 // pred_region
      _
    $region29: #{tpu_custom_call.1} parent=1 // pred_fallthru
      _
    // Predicated region
    $region30: #{tpu_custom_call.1} parent=1 // pred_check
      _
    $region31: #{tpu_custom_call.1} parent=1 // pred_check_branch
      %69 = sbr.rel (0) target = $region33
    $region32: #{tpu_custom_call.1} parent=1 // pred_region
      _
    $region33: #{tpu_custom_call.1} parent=1 // pred_fallthru
      _
    // Predicated region
    $region34: #{tpu_custom_call.1} parent=1 // pred_check
      _
    $region35: #{tpu_custom_call.1} parent=1 // pred_check_branch
      %71 = sbr.rel (0) target = $region37
    $region36: #{tpu_custom_call.1} parent=1 // pred_region
      _
    $region37: #{tpu_custom_call.1} parent=1 // pred_fallthru
      _
    // Predicated region
    $region38: #{tpu_custom_call.1} parent=1 // pred_check
      _
    $region39: #{tpu_custom_call.1} parent=1 // pred_check_branch
      %73 = sbr.rel (0) target = $region41
    $region40: #{tpu_custom_call.1} parent=1 // pred_region
      _
    $region41: #{tpu_custom_call.1} parent=1 // pred_fallthru
      _
    // Predicated region
    $region42: #{tpu_custom_call.1} parent=1 // pred_check
      _
    $region43: #{tpu_custom_call.1} parent=1 // pred_check_branch
      %75 = sbr.rel (0) target = $region45
    $region44: #{tpu_custom_call.1} parent=1 // pred_region
      %s77 = ssub.s32 512, 512
      %78 = vsyncadd [#allocation9], %s77
      %s79 = sshll.u32 [#allocation8], 4
      %s80 = int_to_ptr.vmem [resolvable:$true] %s79
      %85 = dma.hbm_to_vmem [thread:$0]  %s10, 512, %s80, [#allocation9], 128, 128, 8
    $region45: #{tpu_custom_call.1} parent=1 // pred_fallthru
      _
    // Predicated region
    $region46: #{tpu_custom_call.1} parent=1 // pred_check
      _
    $region47: #{tpu_custom_call.1} parent=1 // pred_check_branch
      %87 = sbr.rel (0) target = $region49
    $region48: #{tpu_custom_call.1} parent=1 // pred_region
      _
    $region49: #{tpu_custom_call.1} parent=1 // pred_fallthru
      _
    // Predicated region
    $region50: #{tpu_custom_call.1} parent=1 // pred_check
      _
    $region51: #{tpu_custom_call.1} parent=1 // pred_check_branch
      %89 = sbr.rel (0) target = $region53
    $region52: #{tpu_custom_call.1} parent=1 // pred_region
      %s91 = ssub.s32 2048, 2048
      %92 = vsyncadd [#allocation9], %s91
      %s93 = sshll.u32 [#allocation10], 4
      %s94 = int_to_ptr.vmem [resolvable:$true] %s93
      %99 = dma.hbm_to_vmem [thread:$0]  %s12, 2048, %s94, [#allocation9], 128, 128, 8
    $region53: #{tpu_custom_call.1} parent=1 // pred_fallthru
      _
    // Predicated region
    $region54: #{tpu_custom_call.1} parent=1 // pred_check
      _
    $region55: #{tpu_custom_call.1} parent=1 // pred_check_branch
      %101 = sbr.rel (0) target = $region57
    $region56: #{tpu_custom_call.1} parent=1 // pred_region
      _
    $region57: #{tpu_custom_call.1} parent=1 // pred_fallthru
      _
    // Predicated region
    $region58: #{tpu_custom_call.1} parent=1 // pred_check
      _
    $region59: #{tpu_custom_call.1} parent=1 // pred_check_branch
      %103 = sbr.rel (0) target = $region61
    $region60: #{tpu_custom_call.1} parent=1 // pred_region
      %s105 = ssub.s32 2048, 2048
      %106 = vsyncadd [#allocation12], %s105
      %s107 = sshll.u32 [#allocation11], 4
      %s108 = int_to_ptr.vmem [resolvable:$true] %s107
      %113 = dma.hbm_to_vmem [thread:$0]  %s14, 2048, %s108, [#allocation12], 128, 128, 8
    $region61: #{tpu_custom_call.1} parent=1 // pred_fallthru
      _
    // Predicated region
    $region62: #{tpu_custom_call.1} parent=1 // pred_check
      _
    $region63: #{tpu_custom_call.1} parent=1 // pred_check_branch
      %115 = sbr.rel (0) target = $region65
    $region64: #{tpu_custom_call.1} parent=1 // pred_region
      _
    $region65: #{tpu_custom_call.1} parent=1 // pred_fallthru
      _
    // Predicated region
    $region66: #{tpu_custom_call.1} parent=1 // pred_check
      _
    $region67: #{tpu_custom_call.1} parent=1 // pred_check_branch
      %117 = sbr.rel (0) target = $region69
    $region68: #{tpu_custom_call.1} parent=1 // pred_region
      %118 = dma.done [#allocation4], 128
    $region69: #{tpu_custom_call.1} parent=1 // pred_fallthru
      _
    // Predicated region
    $region70: #{tpu_custom_call.1} parent=1 // pred_check
      _
    $region71: #{tpu_custom_call.1} parent=1 // pred_check_branch
      %120 = sbr.rel (0) target = $region73
    $region72: #{tpu_custom_call.1} parent=1 // pred_region
      %121 = dma.done [#allocation6], 1024
    $region73: #{tpu_custom_call.1} parent=1 // pred_fallthru
      _
    // Predicated region
    $region74: #{tpu_custom_call.1} parent=1 // pred_check
      _
    $region75: #{tpu_custom_call.1} parent=1 // pred_check_branch
      %123 = sbr.rel (0) target = $region77
    $region76: #{tpu_custom_call.1} parent=1 // pred_region
      %124 = dma.done [#allocation6], 512
    $region77: #{tpu_custom_call.1} parent=1 // pred_fallthru
      _
    // Predicated region
    $region78: #{tpu_custom_call.1} parent=1 // pred_check
      _
    $region79: #{tpu_custom_call.1} parent=1 // pred_check_branch
      %126 = sbr.rel (0) target = $region81
    $region80: #{tpu_custom_call.1} parent=1 // pred_region
      %127 = dma.done [#allocation9], 512
    $region81: #{tpu_custom_call.1} parent=1 // pred_fallthru
      _
    // Predicated region
    $region82: #{tpu_custom_call.1} parent=1 // pred_check
      _
    $region83: #{tpu_custom_call.1} parent=1 // pred_check_branch
      %129 = sbr.rel (0) target = $region85
    $region84: #{tpu_custom_call.1} parent=1 // pred_region
      %130 = dma.done [#allocation9], 2048
    $region85: #{tpu_custom_call.1} parent=1 // pred_fallthru
      _
    // Predicated region
    $region86: #{tpu_custom_call.1} parent=1 // pred_check
      _
    $region87: #{tpu_custom_call.1} parent=1 // pred_check_branch
      %132 = sbr.rel (0) target = $region89
    $region88: #{tpu_custom_call.1} parent=1 // pred_region
      %133 = dma.done [#allocation12], 2048
    $region89: #{tpu_custom_call.1} parent=1 // pred_fallthru
      _
    %v134 = vld [vmem:[#allocation3] sm:$0xff]
    %v135 = vld [vmem:[#allocation5] sm:$0xff]
    %v136 = vld [vmem:[#allocation5 + $0x8] sm:$0xff]
    %v137 = vld [vmem:[#allocation5 + $0x10] sm:$0xff]
    %v138 = vld [vmem:[#allocation5 + $0x18] sm:$0xff]
    %v139 = vld [vmem:[#allocation5 + $0x20] sm:$0xff]
    %v140 = vld [vmem:[#allocation5 + $0x28] sm:$0xff]
    %v141 = vld [vmem:[#allocation5 + $0x30] sm:$0xff]
    %v142 = vld [vmem:[#allocation5 + $0x38] sm:$0xff]
    %v143 = vld [vmem:[%s2] sm:$0xff]
    %v144 = vld [vmem:[%s2 + $0x8] sm:$0xff]
    %v145 = vld [vmem:[%s2 + $0x10] sm:$0xff]
    %v146 = vld [vmem:[%s2 + $0x18] sm:$0xff]
    %v147 = vld [vmem:[%s3] sm:$0x1]
    %v149 = vlaneseq
    %v150 = vshrl.u32 %v149, 7
    %v151 = vsub.s32 0, %v150
    %v152 = vrot.slane %v147, %v151
    %vm154 = vcmask 261120
    %v156 = vsel %vm154, %v134, 0
    %158 = vmatprep.subr.mxu0 0.0
    %159 = vmatpush1.msra.mxu0 %v143
    %160 = vmatprep.subr.mxu0 0.0
    %161 = vmatpush1.msra.mxu0 %v144
    %162 = vmatprep.subr.mxu0 0.0
    %163 = vmatpush1.msra.mxu0 %v145
    %164 = vmatprep.subr.mxu0 0.0
    %165 = vmatpush1.msra.mxu0 %v146
    %166 = vmatprep.subr.mxu0 0.0
    %167 = vmatpush1.msra.mxu0 0.0
    %168 = vmatprep.subr.mxu0 0.0
    %169 = vmatpush1.msra.mxu0 0.0
    %170 = vmatprep.subr.mxu0 0.0
    %171 = vmatpush1.msra.mxu0 0.0
    %172 = vmatprep.subr.mxu0 0.0
    %173 = vmatpush1.msra.mxu0 0.0
    %174 = vmatprep.subr.mxu0 0.0
    %175 = vmatpush1.msra.mxu0 0.0
    %176 = vmatprep.subr.mxu0 0.0
    %177 = vmatpush1.msra.mxu0 0.0
    %178 = vmatprep.subr.mxu0 0.0
    %179 = vmatpush1.msra.mxu0 0.0
    %180 = vmatprep.subr.mxu0 0.0
    %181 = vmatpush1.msra.mxu0 0.0
    %182 = vmatprep.subr.mxu0 0.0
    %183 = vmatpush1.msra.mxu0 0.0
    %184 = vmatprep.subr.mxu0 0.0
    %185 = vmatpush1.msra.mxu0 0.0
    %186 = vmatprep.subr.mxu0 0.0
    %187 = vmatpush1.msra.mxu0 0.0
    %188 = vmatprep.subr.mxu0 0.0
    %189 = vmatpush1.msra.mxu0 0.0
    %190 = vmatprep.subr.mxu0 0.0
    %191 = vmatpush1.msra.mxu0 0.0
    %192 = vmatprep.subr.mxu0 0.0
    %193 = vmatpush1.msra.mxu0 0.0
    %194 = vmatprep.subr.mxu0 0.0
    %195 = vmatpush1.msra.mxu0 0.0
    %196 = vmatprep.subr.mxu0 0.0
    %197 = vmatpush1.msra.mxu0 0.0
    %198 = vmatprep.subr.mxu0 0.0
    %199 = vmatpush1.msra.mxu0 0.0
    %200 = vmatprep.subr.mxu0 0.0
    %201 = vmatpush1.msra.mxu0 0.0
    %202 = vmatprep.subr.mxu0 0.0
    %203 = vmatpush1.msra.mxu0 0.0
    %204 = vmatprep.subr.mxu0 0.0
    %205 = vmatpush1.msra.mxu0 0.0
    %206 = vmatprep.subr.mxu0 0.0
    %207 = vmatpush1.msra.mxu0 0.0
    %208 = vmatprep.subr.mxu0 0.0
    %209 = vmatpush1.msra.mxu0 0.0
    %210 = vmatprep.subr.mxu0 0.0
    %211 = vmatpush1.msra.mxu0 0.0
    %212 = vmatprep.subr.mxu0 0.0
    %213 = vmatpush1.msra.mxu0 0.0
    %214 = vmatprep.subr.mxu0 0.0
    %215 = vmatpush1.msra.mxu0 0.0
    %216 = vmatprep.subr.mxu0 0.0
    %217 = vmatpush1.msra.mxu0 0.0
    %218 = vmatprep.subr.mxu0 0.0
    %219 = vmatpush1.msra.mxu0 0.0
    %220 = vmatprep.subr.mxu0 0.0
    %221 = vmatpush1.msra.mxu0 0.0
    %222 = vmatprep.mubr.f32.mxu0 0.0
    %223 = vmatmul.mubr.f32.gmra.mrb[0].mxu0 %v156
    %v224 = vpop.f32.mrb[0].mxu0
    %v225 = vadd.f32 %v152, %v224
    %v226 = vpop.f32.mrb[0].mxu0
    %227 = vdwg.mxu0
    %v228 = vld [vmem:[#allocation7] sm:$0xff]
    %v229 = vld [vmem:[#allocation7 + $0x8] sm:$0xff]
    %v230 = vld [vmem:[#allocation7 + $0x10] sm:$0xff]
    %v231 = vld [vmem:[#allocation7 + $0x18] sm:$0xff]
    %v233 = vsel %vm154, %v225, 0
    %235 = vmatprep.subr.mxu0 0.0
    %236 = vmatpush1.msra.mxu0 %v228
    %237 = vmatprep.subr.mxu0 0.0
    %238 = vmatpush1.msra.mxu0 %v229
    %239 = vmatprep.subr.mxu0 0.0
    %240 = vmatpush1.msra.mxu0 %v230
    %241 = vmatprep.subr.mxu0 0.0
    %242 = vmatpush1.msra.mxu0 %v231
    %243 = vmatprep.subr.mxu0 0.0
    %244 = vmatpush1.msra.mxu0 0.0
    %245 = vmatprep.subr.mxu0 0.0
    %246 = vmatpush1.msra.mxu0 0.0
    %247 = vmatprep.subr.mxu0 0.0
    %248 = vmatpush1.msra.mxu0 0.0
    %249 = vmatprep.subr.mxu0 0.0
    %250 = vmatpush1.msra.mxu0 0.0
    %251 = vmatprep.subr.mxu0 0.0
    %252 = vmatpush1.msra.mxu0 0.0
    %253 = vmatprep.subr.mxu0 0.0
    %254 = vmatpush1.msra.mxu0 0.0
    %255 = vmatprep.subr.mxu0 0.0
    %256 = vmatpush1.msra.mxu0 0.0
    %257 = vmatprep.subr.mxu0 0.0
    %258 = vmatpush1.msra.mxu0 0.0
    %259 = vmatprep.subr.mxu0 0.0
    %260 = vmatpush1.msra.mxu0 0.0
    %261 = vmatprep.subr.mxu0 0.0
    %262 = vmatpush1.msra.mxu0 0.0
    %263 = vmatprep.subr.mxu0 0.0
    %264 = vmatpush1.msra.mxu0 0.0
    %265 = vmatprep.subr.mxu0 0.0
    %266 = vmatpush1.msra.mxu0 0.0
    %267 = vmatprep.subr.mxu0 0.0
    %268 = vmatpush1.msra.mxu0 0.0
    %269 = vmatprep.subr.mxu0 0.0
    %270 = vmatpush1.msra.mxu0 0.0
    %271 = vmatprep.subr.mxu0 0.0
    %272 = vmatpush1.msra.mxu0 0.0
    %273 = vmatprep.subr.mxu0 0.0
    %274 = vmatpush1.msra.mxu0 0.0
    %275 = vmatprep.subr.mxu0 0.0
    %276 = vmatpush1.msra.mxu0 0.0
    %277 = vmatprep.subr.mxu0 0.0
    %278 = vmatpush1.msra.mxu0 0.0
    %279 = vmatprep.subr.mxu0 0.0
    %280 = vmatpush1.msra.mxu0 0.0
    %281 = vmatprep.subr.mxu0 0.0
    %282 = vmatpush1.msra.mxu0 0.0
    %283 = vmatprep.subr.mxu0 0.0
    %284 = vmatpush1.msra.mxu0 0.0
    %285 = vmatprep.subr.mxu0 0.0
    %286 = vmatpush1.msra.mxu0 0.0
    %287 = vmatprep.subr.mxu0 0.0
    %288 = vmatpush1.msra.mxu0 0.0
    %289 = vmatprep.subr.mxu0 0.0
    %290 = vmatpush1.msra.mxu0 0.0
    %291 = vmatprep.subr.mxu0 0.0
    %292 = vmatpush1.msra.mxu0 0.0
    %293 = vmatprep.subr.mxu0 0.0
    %294 = vmatpush1.msra.mxu0 0.0
    %295 = vmatprep.subr.mxu0 0.0
    %296 = vmatpush1.msra.mxu0 0.0
    %297 = vmatprep.subr.mxu0 0.0
    %298 = vmatpush1.msra.mxu0 0.0
    %299 = vmatprep.mubr.f32.mxu0 0.0
    %300 = vmatmul.mubr.f32.gmra.mrb[0].mxu0 %v233
    %v301 = vpop.f32.mrb[0].mxu0
    %v302 = vadd.f32 0.0, %v301
    %v303 = vpop.f32.mrb[0].mxu0
    %304 = vdwg.mxu0
    %v306 = vcombine.high %v302, %v302
    %v308 = vunpack.c.l.s4 1966171168
    %v309 = vunpack.c.0.s8 %v308
    %v310 = vlaneseq
    %v311 = vshrl.u32 %v310, 7
    %v312 = vsub.s32 %v309, %v311
    %v313 = vrot.slane %v302, %v312
    %v315 = vunpack.c.l.s4 1966171168
    %v316 = vunpack.c.0.s8 %v315
    %v317 = vlaneseq
    %v318 = vshrl.u32 %v317, 7
    %v319 = vsub.s32 %v316, %v318
    %v320 = vrot.slane %v306, %v319
    %v321 = vcombine.high %v313, %v313
    %v322 = vcombine.high %v320, %v320
    %v324 = vunpack.c.l.s4 1966171168
    %v325 = vunpack.c.0.s8 %v324
    %v326 = vlaneseq
    %v327 = vshrl.u32 %v326, 7
    %v328 = vsub.s32 %v325, %v327
    %v329 = vrot.slane %v313, %v328
    %v331 = vunpack.c.l.s4 1966171168
    %v332 = vunpack.c.0.s8 %v331
    %v333 = vlaneseq
    %v334 = vshrl.u32 %v333, 7
    %v335 = vsub.s32 %v332, %v334
    %v336 = vrot.slane %v320, %v335
    %v338 = vunpack.c.l.s4 1966171168
    %v339 = vunpack.c.0.s8 %v338
    %v340 = vlaneseq
    %v341 = vshrl.u32 %v340, 7
    %v342 = vsub.s32 %v339, %v341
    %v343 = vrot.slane %v321, %v342
    %v345 = vunpack.c.l.s4 1966171168
    %v346 = vunpack.c.0.s8 %v345
    %v347 = vlaneseq
    %v348 = vshrl.u32 %v347, 7
    %v349 = vsub.s32 %v346, %v348
    %v350 = vrot.slane %v322, %v349
    %v351 = vcombine.high %v329, %v329
    %v352 = vcombine.high %v336, %v336
    %v353 = vcombine.high %v343, %v343
    %v354 = vcombine.high %v350, %v350
    %v355 = vlaneseq
    %v356 = vshrl.u32 %v355, 7
    %v357 = vsub.s32 0, %v356
    %v358 = vrot.slane %v329, %v357
    %v359 = vlaneseq
    %v360 = vshrl.u32 %v359, 7
    %v361 = vsub.s32 0, %v360
    %v362 = vrot.slane %v343, %v361
    %v363 = vlaneseq
    %v364 = vshrl.u32 %v363, 7
    %v365 = vsub.s32 0, %v364
    %v366 = vrot.slane %v351, %v365
    %v367 = vlaneseq
    %v368 = vshrl.u32 %v367, 7
    %v369 = vsub.s32 0, %v368
    %v370 = vrot.slane %v353, %v369
    %v371 = vlaneseq
    %v372 = vshrl.u32 %v371, 7
    %v373 = vsub.s32 0, %v372
    %v374 = vrot.slane %v336, %v373
    %v375 = vlaneseq
    %v376 = vshrl.u32 %v375, 7
    %v377 = vsub.s32 0, %v376
    %v378 = vrot.slane %v350, %v377
    %v379 = vlaneseq
    %v380 = vshrl.u32 %v379, 7
    %v381 = vsub.s32 0, %v380
    %v382 = vrot.slane %v352, %v381
    %v383 = vlaneseq
    %v384 = vshrl.u32 %v383, 7
    %v385 = vsub.s32 0, %v384
    %v386 = vrot.slane %v354, %v385
    %v395 = vmul.f32 %v135, %v358
    %v396 = vmul.f32 %v136, %v362
    %v397 = vmul.f32 %v137, %v366
    %v398 = vmul.f32 %v138, %v370
    %v399 = vmul.f32 %v139, %v374
    %v400 = vmul.f32 %v140, %v378
    %v401 = vmul.f32 %v141, %v382
    %v402 = vmul.f32 %v142, %v386
    %v403 = vld [vmem:[%s5] sm:$0xff]
    %v404 = vld [vmem:[%s5 + $0x8] sm:$0xff]
    %v405 = vld [vmem:[%s5 + $0x10] sm:$0xff]
    %v406 = vld [vmem:[%s5 + $0x18] sm:$0xff]
    %v407 = vld [vmem:[%s5 + $0x20] sm:$0xff]
    %v408 = vld [vmem:[%s5 + $0x28] sm:$0xff]
    %v409 = vld [vmem:[%s5 + $0x30] sm:$0xff]
    %v410 = vld [vmem:[%s5 + $0x38] sm:$0xff]
    %v411 = vld [vmem:[%s5 + $0x40] sm:$0xff]
    %v412 = vld [vmem:[%s5 + $0x48] sm:$0xff]
    %v413 = vld [vmem:[%s5 + $0x50] sm:$0xff]
    %v414 = vld [vmem:[%s5 + $0x58] sm:$0xff]
    %v415 = vld [vmem:[%s5 + $0x60] sm:$0xff]
    %v416 = vld [vmem:[%s5 + $0x68] sm:$0xff]
    %v417 = vld [vmem:[%s5 + $0x70] sm:$0xff]
    %v418 = vld [vmem:[%s5 + $0x78] sm:$0xff]
    %419 = vmatprep.subr.mxu0 0.0
    %420 = vmatpush1.msra.mxu0 %v403
    %421 = vmatprep.subr.mxu0 0.0
    %422 = vmatpush1.msra.mxu0 %v404
    %423 = vmatprep.subr.mxu0 0.0
    %424 = vmatpush1.msra.mxu0 %v405
    %425 = vmatprep.subr.mxu0 0.0
    %426 = vmatpush1.msra.mxu0 %v406
    %427 = vmatprep.subr.mxu0 0.0
    %428 = vmatpush1.msra.mxu0 %v407
    %429 = vmatprep.subr.mxu0 0.0
    %430 = vmatpush1.msra.mxu0 %v408
    %431 = vmatprep.subr.mxu0 0.0
    %432 = vmatpush1.msra.mxu0 %v409
    %433 = vmatprep.subr.mxu0 0.0
    %434 = vmatpush1.msra.mxu0 %v410
    %435 = vmatprep.subr.mxu0 0.0
    %436 = vmatpush1.msra.mxu0 %v411
    %437 = vmatprep.subr.mxu0 0.0
    %438 = vmatpush1.msra.mxu0 %v412
    %439 = vmatprep.subr.mxu0 0.0
    %440 = vmatpush1.msra.mxu0 %v413
    %441 = vmatprep.subr.mxu0 0.0
    %442 = vmatpush1.msra.mxu0 %v414
    %443 = vmatprep.subr.mxu0 0.0
    %444 = vmatpush1.msra.mxu0 %v415
    %445 = vmatprep.subr.mxu0 0.0
    %446 = vmatpush1.msra.mxu0 %v416
    %447 = vmatprep.subr.mxu0 0.0
    %448 = vmatpush1.msra.mxu0 %v417
    %449 = vmatprep.subr.mxu0 0.0
    %450 = vmatpush1.msra.mxu0 %v418
    %451 = vmatprep.subr.mxu0 0.0
    %452 = vmatpush1.msra.mxu0 0.0
    %453 = vmatprep.subr.mxu0 0.0
    %454 = vmatpush1.msra.mxu0 0.0
    %455 = vmatprep.subr.mxu0 0.0
    %456 = vmatpush1.msra.mxu0 0.0
    %457 = vmatprep.subr.mxu0 0.0
    %458 = vmatpush1.msra.mxu0 0.0
    %459 = vmatprep.subr.mxu0 0.0
    %460 = vmatpush1.msra.mxu0 0.0
    %461 = vmatprep.subr.mxu0 0.0
    %462 = vmatpush1.msra.mxu0 0.0
    %463 = vmatprep.subr.mxu0 0.0
    %464 = vmatpush1.msra.mxu0 0.0
    %465 = vmatprep.subr.mxu0 0.0
    %466 = vmatpush1.msra.mxu0 0.0
    %467 = vmatprep.subr.mxu0 0.0
    %468 = vmatpush1.msra.mxu0 0.0
    %469 = vmatprep.subr.mxu0 0.0
    %470 = vmatpush1.msra.mxu0 0.0
    %471 = vmatprep.subr.mxu0 0.0
    %472 = vmatpush1.msra.mxu0 0.0
    %473 = vmatprep.subr.mxu0 0.0
    %474 = vmatpush1.msra.mxu0 0.0
    %475 = vmatprep.subr.mxu0 0.0
    %476 = vmatpush1.msra.mxu0 0.0
    %477 = vmatprep.subr.mxu0 0.0
    %478 = vmatpush1.msra.mxu0 0.0
    %479 = vmatprep.subr.mxu0 0.0
    %480 = vmatpush1.msra.mxu0 0.0
    %481 = vmatprep.subr.mxu0 0.0
    %482 = vmatpush1.msra.mxu0 0.0
    %483 = vmatprep.mubr.f32.mxu0 0.0
    %484 = vmatmul.mubr.f32.gmra.mrb[0].mxu0 %v395
    %v485 = vpop.f32.mrb[0].mxu0
    %v486 = vadd.f32 0.0, %v485
    %v487 = vpop.f32.mrb[0].mxu0
    %488 = vmatprep.mubr.f32.mxu0 0.0
    %489 = vmatmul.mubr.f32.gmra.mrb[0].mxu0 %v396
    %v490 = vpop.f32.mrb[0].mxu0
    %v491 = vadd.f32 0.0, %v490
    %v492 = vpop.f32.mrb[0].mxu0
    %493 = vmatprep.mubr.f32.mxu0 0.0
    %494 = vmatmul.mubr.f32.gmra.mrb[0].mxu0 %v397
    %v495 = vpop.f32.mrb[0].mxu0
    %v496 = vadd.f32 0.0, %v495
    %v497 = vpop.f32.mrb[0].mxu0
    %498 = vmatprep.mubr.f32.mxu0 0.0
    %499 = vmatmul.mubr.f32.gmra.mrb[0].mxu0 %v398
    %v500 = vpop.f32.mrb[0].mxu0
    %v501 = vadd.f32 0.0, %v500
    %v502 = vpop.f32.mrb[0].mxu0
    %503 = vmatprep.mubr.f32.mxu0 0.0
    %504 = vmatmul.mubr.f32.gmra.mrb[0].mxu0 %v399
    %v505 = vpop.f32.mrb[0].mxu0
    %v506 = vadd.f32 0.0, %v505
    %v507 = vpop.f32.mrb[0].mxu0
    %508 = vmatprep.mubr.f32.mxu0 0.0
    %509 = vmatmul.mubr.f32.gmra.mrb[0].mxu0 %v400
    %v510 = vpop.f32.mrb[0].mxu0
    %v511 = vadd.f32 0.0, %v510
    %v512 = vpop.f32.mrb[0].mxu0
    %513 = vmatprep.mubr.f32.mxu0 0.0
    %514 = vmatmul.mubr.f32.gmra.mrb[0].mxu0 %v401
    %v515 = vpop.f32.mrb[0].mxu0
    %v516 = vadd.f32 0.0, %v515
    %v517 = vpop.f32.mrb[0].mxu0
    %518 = vmatprep.mubr.f32.mxu0 0.0
    %519 = vmatmul.mubr.f32.gmra.mrb[0].mxu0 %v402
    %v520 = vpop.f32.mrb[0].mxu0
    %v521 = vadd.f32 0.0, %v520
    %v522 = vpop.f32.mrb[0].mxu0
    %523 = vdwg.mxu0
    %524 = vmax.xlane.f32.xlu0 %v486
    %v525 = vpop.xlane.xlu0 %524
    %526 = vmax.xlane.f32.xlu0 %v491
    %v527 = vpop.xlane.xlu0 %526
    %528 = vmax.xlane.f32.xlu0 %v496
    %v529 = vpop.xlane.xlu0 %528
    %530 = vmax.xlane.f32.xlu0 %v501
    %v531 = vpop.xlane.xlu0 %530
    %532 = vmax.xlane.f32.xlu0 %v506
    %v533 = vpop.xlane.xlu0 %532
    %534 = vmax.xlane.f32.xlu0 %v511
    %v535 = vpop.xlane.xlu0 %534
    %536 = vmax.xlane.f32.xlu0 %v516
    %v537 = vpop.xlane.xlu0 %536
    %538 = vmax.xlane.f32.xlu0 %v521
    %v539 = vpop.xlane.xlu0 %538
    %v540 = vrot.slane %v525, 4
    %v541 = vmax.f32 %v525, %v540
    %v542 = vrot.slane %v541, 2
    %v543 = vmax.f32 %v541, %v542
    %v544 = vrot.slane %v543, 1
    %v545 = vmax.f32 %v543, %v544
    %v546 = vrot.slane %v527, 4
    %v547 = vmax.f32 %v527, %v546
    %v548 = vrot.slane %v547, 2
    %v549 = vmax.f32 %v547, %v548
    %v550 = vrot.slane %v549, 1
    %v551 = vmax.f32 %v549, %v550
    %v552 = vrot.slane %v529, 4
    %v553 = vmax.f32 %v529, %v552
    %v554 = vrot.slane %v553, 2
    %v555 = vmax.f32 %v553, %v554
    %v556 = vrot.slane %v555, 1
    %v557 = vmax.f32 %v555, %v556
    %v558 = vrot.slane %v531, 4
    %v559 = vmax.f32 %v531, %v558
    %v560 = vrot.slane %v559, 2
    %v561 = vmax.f32 %v559, %v560
    %v562 = vrot.slane %v561, 1
    %v563 = vmax.f32 %v561, %v562
    %v564 = vrot.slane %v533, 4
    %v565 = vmax.f32 %v533, %v564
    %v566 = vrot.slane %v565, 2
    %v567 = vmax.f32 %v565, %v566
    %v568 = vrot.slane %v567, 1
    %v569 = vmax.f32 %v567, %v568
    %v570 = vrot.slane %v535, 4
    %v571 = vmax.f32 %v535, %v570
    %v572 = vrot.slane %v571, 2
    %v573 = vmax.f32 %v571, %v572
    %v574 = vrot.slane %v573, 1
    %v575 = vmax.f32 %v573, %v574
    %v576 = vrot.slane %v537, 4
    %v577 = vmax.f32 %v537, %v576
    %v578 = vrot.slane %v577, 2
    %v579 = vmax.f32 %v577, %v578
    %v580 = vrot.slane %v579, 1
    %v581 = vmax.f32 %v579, %v580
    %v582 = vrot.slane %v539, 4
    %v583 = vmax.f32 %v539, %v582
    %v584 = vrot.slane %v583, 2
    %v585 = vmax.f32 %v583, %v584
    %v586 = vrot.slane %v585, 1
    %v587 = vmax.f32 %v585, %v586
    %v588 = vsub.f32 %v486, %v545
    %v589 = vsub.f32 %v491, %v551
    %v590 = vsub.f32 %v496, %v557
    %v591 = vsub.f32 %v501, %v563
    %v592 = vsub.f32 %v506, %v569
    %v593 = vsub.f32 %v511, %v575
    %v594 = vsub.f32 %v516, %v581
    %v595 = vsub.f32 %v521, %v587
    %v596 = vmul.f32 %v588, 1.442695
    %v597 = vpow.pop %v596
    %v598 = vmul.f32 %v589, 1.442695
    %v599 = vpow.pop %v598
    %v600 = vmul.f32 %v590, 1.442695
    %v601 = vpow.pop %v600
    %v602 = vmul.f32 %v591, 1.442695
    %v603 = vpow.pop %v602
    %v604 = vmul.f32 %v592, 1.442695
    %v605 = vpow.pop %v604
    %v606 = vmul.f32 %v593, 1.442695
    %v607 = vpow.pop %v606
    %v608 = vmul.f32 %v594, 1.442695
    %v609 = vpow.pop %v608
    %v610 = vmul.f32 %v595, 1.442695
    %v611 = vpow.pop %v610
    %612 = vadd.xlane.f32.xlu0 %v597
    %v613 = vpop.xlane.xlu0 %612
    %614 = vadd.xlane.f32.xlu0 %v599
    %v615 = vpop.xlane.xlu0 %614
    %616 = vadd.xlane.f32.xlu0 %v601
    %v617 = vpop.xlane.xlu0 %616
    %618 = vadd.xlane.f32.xlu0 %v603
    %v619 = vpop.xlane.xlu0 %618
    %620 = vadd.xlane.f32.xlu0 %v605
    %v621 = vpop.xlane.xlu0 %620
    %622 = vadd.xlane.f32.xlu0 %v607
    %v623 = vpop.xlane.xlu0 %622
    %624 = vadd.xlane.f32.xlu0 %v609
    %v625 = vpop.xlane.xlu0 %624
    %626 = vadd.xlane.f32.xlu0 %v611
    %v627 = vpop.xlane.xlu0 %626
    %v628 = vrot.slane %v613, 4
    %v629 = vadd.f32 %v613, %v628
    %v630 = vrot.slane %v629, 2
    %v631 = vadd.f32 %v629, %v630
    %v632 = vrot.slane %v631, 1
    %v633 = vadd.f32 %v631, %v632
    %v634 = vrot.slane %v615, 4
    %v635 = vadd.f32 %v615, %v634
    %v636 = vrot.slane %v635, 2
    %v637 = vadd.f32 %v635, %v636
    %v638 = vrot.slane %v637, 1
    %v639 = vadd.f32 %v637, %v638
    %v640 = vrot.slane %v617, 4
    %v641 = vadd.f32 %v617, %v640
    %v642 = vrot.slane %v641, 2
    %v643 = vadd.f32 %v641, %v642
    %v644 = vrot.slane %v643, 1
    %v645 = vadd.f32 %v643, %v644
    %v646 = vrot.slane %v619, 4
    %v647 = vadd.f32 %v619, %v646
    %v648 = vrot.slane %v647, 2
    %v649 = vadd.f32 %v647, %v648
    %v650 = vrot.slane %v649, 1
    %v651 = vadd.f32 %v649, %v650
    %v652 = vrot.slane %v621, 4
    %v653 = vadd.f32 %v621, %v652
    %v654 = vrot.slane %v653, 2
    %v655 = vadd.f32 %v653, %v654
    %v656 = vrot.slane %v655, 1
    %v657 = vadd.f32 %v655, %v656
    %v658 = vrot.slane %v623, 4
    %v659 = vadd.f32 %v623, %v658
    %v660 = vrot.slane %v659, 2
    %v661 = vadd.f32 %v659, %v660
    %v662 = vrot.slane %v661, 1
    %v663 = vadd.f32 %v661, %v662
    %v664 = vrot.slane %v625, 4
    %v665 = vadd.f32 %v625, %v664
    %v666 = vrot.slane %v665, 2
    %v667 = vadd.f32 %v665, %v666
    %v668 = vrot.slane %v667, 1
    %v669 = vadd.f32 %v667, %v668
    %v670 = vrot.slane %v627, 4
    %v671 = vadd.f32 %v627, %v670
    %v672 = vrot.slane %v671, 2
    %v673 = vadd.f32 %v671, %v672
    %v674 = vrot.slane %v673, 1
    %v675 = vadd.f32 %v673, %v674
    %v676 = vrcp.pop %v633
    %v677 = vmul.f32 32.0, %v676
    %v678 = vrcp.pop %v639
    %v679 = vmul.f32 32.0, %v678
    %v680 = vrcp.pop %v645
    %v681 = vmul.f32 32.0, %v680
    %v682 = vrcp.pop %v651
    %v683 = vmul.f32 32.0, %v682
    %v684 = vrcp.pop %v657
    %v685 = vmul.f32 32.0, %v684
    %v686 = vrcp.pop %v663
    %v687 = vmul.f32 32.0, %v686
    %v688 = vrcp.pop %v669
    %v689 = vmul.f32 32.0, %v688
    %v690 = vrcp.pop %v675
    %v691 = vmul.f32 32.0, %v690
    %v692 = vmul.f32 %v597, %v677
    %v693 = vmul.f32 %v599, %v679
    %v694 = vmul.f32 %v601, %v681
    %v695 = vmul.f32 %v603, %v683
    %v696 = vmul.f32 %v605, %v685
    %v697 = vmul.f32 %v607, %v687
    %v698 = vmul.f32 %v609, %v689
    %v699 = vmul.f32 %v611, %v691
    %v700 = vmul.f32 %v692, %v135
    %v701 = vmul.f32 %v693, %v136
    %v702 = vmul.f32 %v694, %v137
    %v703 = vmul.f32 %v695, %v138
    %v704 = vmul.f32 %v696, %v139
    %v705 = vmul.f32 %v697, %v140
    %v706 = vmul.f32 %v698, %v141
    %v707 = vmul.f32 %v699, %v142
    %v708 = vrot.slane %v700, 4
    %v709 = vadd.f32 %v700, %v708
    %v710 = vrot.slane %v709, 2
    %v711 = vadd.f32 %v709, %v710
    %v712 = vrot.slane %v711, 1
    %v713 = vadd.f32 %v711, %v712
    %v714 = vrot.slane %v701, 4
    %v715 = vadd.f32 %v701, %v714
    %v716 = vrot.slane %v715, 2
    %v717 = vadd.f32 %v715, %v716
    %v718 = vrot.slane %v717, 1
    %v719 = vadd.f32 %v717, %v718
    %v720 = vrot.slane %v702, 4
    %v721 = vadd.f32 %v702, %v720
    %v722 = vrot.slane %v721, 2
    %v723 = vadd.f32 %v721, %v722
    %v724 = vrot.slane %v723, 1
    %v725 = vadd.f32 %v723, %v724
    %v726 = vrot.slane %v703, 4
    %v727 = vadd.f32 %v703, %v726
    %v728 = vrot.slane %v727, 2
    %v729 = vadd.f32 %v727, %v728
    %v730 = vrot.slane %v729, 1
    %v731 = vadd.f32 %v729, %v730
    %v732 = vrot.slane %v704, 4
    %v733 = vadd.f32 %v704, %v732
    %v734 = vrot.slane %v733, 2
    %v735 = vadd.f32 %v733, %v734
    %v736 = vrot.slane %v735, 1
    %v737 = vadd.f32 %v735, %v736
    %v738 = vrot.slane %v705, 4
    %v739 = vadd.f32 %v705, %v738
    %v740 = vrot.slane %v739, 2
    %v741 = vadd.f32 %v739, %v740
    %v742 = vrot.slane %v741, 1
    %v743 = vadd.f32 %v741, %v742
    %v744 = vrot.slane %v706, 4
    %v745 = vadd.f32 %v706, %v744
    %v746 = vrot.slane %v745, 2
    %v747 = vadd.f32 %v745, %v746
    %v748 = vrot.slane %v747, 1
    %v749 = vadd.f32 %v747, %v748
    %v750 = vrot.slane %v707, 4
    %v751 = vadd.f32 %v707, %v750
    %v752 = vrot.slane %v751, 2
    %v753 = vadd.f32 %v751, %v752
    %v754 = vrot.slane %v753, 1
    %v755 = vadd.f32 %v753, %v754
    %vm764 = vcmask 1041409
    %v765 = vsel %vm764, %v719, %v713
    %vm766 = vcmask 1042434
    %v767 = vsel %vm766, %v725, %v765
    %vm768 = vcmask 1043459
    %v769 = vsel %vm768, %v731, %v767
    %vm770 = vcmask 1044484
    %v771 = vsel %vm770, %v737, %v769
    %vm772 = vcmask 1045509
    %v773 = vsel %vm772, %v743, %v771
    %vm774 = vcmask 1046534
    %v775 = vsel %vm774, %v749, %v773
    %vm776 = vcmask 1047559
    %v777 = vsel %vm776, %v755, %v775
    %779 = vrot.lane.b32.xlu0 %v777, 96
    %v780 = vpop.permute.xlu0 %779
    %v782 = vrot.slane %v780, 1
    %v783 = vrot.slane %v780, 2
    %v784 = vrot.slane %v780, 3
    %v785 = vrot.slane %v780, 4
    %v786 = vrot.slane %v780, 5
    %v787 = vrot.slane %v780, 6
    %v788 = vrot.slane %v780, 7
    %v797 = vadd.f32 %v713, %v780
    %v798 = vadd.f32 %v719, %v782
    %v799 = vadd.f32 %v725, %v783
    %v800 = vadd.f32 %v731, %v784
    %v801 = vadd.f32 %v737, %v785
    %v802 = vadd.f32 %v743, %v786
    %v803 = vadd.f32 %v749, %v787
    %v804 = vadd.f32 %v755, %v788
    %v813 = vrot.slane %v798, 7
    %v814 = vsel %vm764, %v813, %v797
    %v815 = vrot.slane %v799, 6
    %v816 = vsel %vm766, %v815, %v814
    %v817 = vrot.slane %v800, 5
    %v818 = vsel %vm768, %v817, %v816
    %v819 = vrot.slane %v801, 4
    %v820 = vsel %vm770, %v819, %v818
    %v821 = vrot.slane %v802, 3
    %v822 = vsel %vm772, %v821, %v820
    %v823 = vrot.slane %v803, 2
    %v824 = vsel %vm774, %v823, %v822
    %v825 = vrot.slane %v804, 1
    %v826 = vsel %vm776, %v825, %v824
    %828 = vrot.lane.b32.xlu0 %v826, 64
    %v829 = vpop.permute.xlu0 %828
    %v831 = vrot.slane %v829, 1
    %v832 = vrot.slane %v829, 2
    %v833 = vrot.slane %v829, 3
    %v834 = vrot.slane %v829, 4
    %v835 = vrot.slane %v829, 5
    %v836 = vrot.slane %v829, 6
    %v837 = vrot.slane %v829, 7
    %v846 = vadd.f32 %v797, %v829
    %v847 = vadd.f32 %v798, %v831
    %v848 = vadd.f32 %v799, %v832
    %v849 = vadd.f32 %v800, %v833
    %v850 = vadd.f32 %v801, %v834
    %v851 = vadd.f32 %v802, %v835
    %v852 = vadd.f32 %v803, %v836
    %v853 = vadd.f32 %v804, %v837
    %v854 = vld [vmem:[%s6] sm:$0xff]
    %v855 = vld [vmem:[%s6 + $0x8] sm:$0xff]
    %v856 = vld [vmem:[%s6 + $0x10] sm:$0xff]
    %v857 = vld [vmem:[%s6 + $0x18] sm:$0xff]
    %v858 = vld [vmem:[%s6 + $0x20] sm:$0xff]
    %v859 = vld [vmem:[%s6 + $0x28] sm:$0xff]
    %v860 = vld [vmem:[%s6 + $0x30] sm:$0xff]
    %v861 = vld [vmem:[%s6 + $0x38] sm:$0xff]
    %v862 = vld [vmem:[%s6 + $0x40] sm:$0xff]
    %v863 = vld [vmem:[%s6 + $0x48] sm:$0xff]
    %v864 = vld [vmem:[%s6 + $0x50] sm:$0xff]
    %v865 = vld [vmem:[%s6 + $0x58] sm:$0xff]
    %v866 = vld [vmem:[%s6 + $0x60] sm:$0xff]
    %v867 = vld [vmem:[%s6 + $0x68] sm:$0xff]
    %v868 = vld [vmem:[%s6 + $0x70] sm:$0xff]
    %v869 = vld [vmem:[%s6 + $0x78] sm:$0xff]
    %v870 = vld [vmem:[%s7] sm:$0x1]
    %v872 = vlaneseq
    %v873 = vshrl.u32 %v872, 7
    %v874 = vsub.s32 0, %v873
    %v875 = vrot.slane %v870, %v874
    %v885 = vrot.slane %v847, 7
    %v886 = vsel %vm764, %v885, %v846
    %v887 = vrot.slane %v848, 6
    %v888 = vsel %vm766, %v887, %v886
    %v889 = vrot.slane %v849, 5
    %v890 = vsel %vm768, %v889, %v888
    %v891 = vrot.slane %v850, 4
    %v892 = vsel %vm770, %v891, %v890
    %v893 = vrot.slane %v851, 3
    %v894 = vsel %vm772, %v893, %v892
    %v895 = vrot.slane %v852, 2
    %v896 = vsel %vm774, %v895, %v894
    %v897 = vrot.slane %v853, 1
    %v898 = vsel %vm776, %v897, %v896
    %900 = vmatprep.subr.mxu0 0.0
    %901 = vmatpush1.msra.mxu0 %v854
    %902 = vmatprep.subr.mxu0 0.0
    %903 = vmatpush1.msra.mxu0 %v855
    %904 = vmatprep.subr.mxu0 0.0
    %905 = vmatpush1.msra.mxu0 %v856
    %906 = vmatprep.subr.mxu0 0.0
    %907 = vmatpush1.msra.mxu0 %v857
    %908 = vmatprep.subr.mxu0 0.0
    %909 = vmatpush1.msra.mxu0 %v858
    %910 = vmatprep.subr.mxu0 0.0
    %911 = vmatpush1.msra.mxu0 %v859
    %912 = vmatprep.subr.mxu0 0.0
    %913 = vmatpush1.msra.mxu0 %v860
    %914 = vmatprep.subr.mxu0 0.0
    %915 = vmatpush1.msra.mxu0 %v861
    %916 = vmatprep.subr.mxu0 0.0
    %917 = vmatpush1.msra.mxu0 %v862
    %918 = vmatprep.subr.mxu0 0.0
    %919 = vmatpush1.msra.mxu0 %v863
    %920 = vmatprep.subr.mxu0 0.0
    %921 = vmatpush1.msra.mxu0 %v864
    %922 = vmatprep.subr.mxu0 0.0
    %923 = vmatpush1.msra.mxu0 %v865
    %924 = vmatprep.subr.mxu0 0.0
    %925 = vmatpush1.msra.mxu0 %v866
    %926 = vmatprep.subr.mxu0 0.0
    %927 = vmatpush1.msra.mxu0 %v867
    %928 = vmatprep.subr.mxu0 0.0
    %929 = vmatpush1.msra.mxu0 %v868
    %930 = vmatprep.subr.mxu0 0.0
    %931 = vmatpush1.msra.mxu0 %v869
    %932 = vmatprep.subr.mxu0 0.0
    %933 = vmatpush1.msra.mxu0 0.0
    %934 = vmatprep.subr.mxu0 0.0
    %935 = vmatpush1.msra.mxu0 0.0
    %936 = vmatprep.subr.mxu0 0.0
    %937 = vmatpush1.msra.mxu0 0.0
    %938 = vmatprep.subr.mxu0 0.0
    %939 = vmatpush1.msra.mxu0 0.0
    %940 = vmatprep.subr.mxu0 0.0
    %941 = vmatpush1.msra.mxu0 0.0
    %942 = vmatprep.subr.mxu0 0.0
    %943 = vmatpush1.msra.mxu0 0.0
    %944 = vmatprep.subr.mxu0 0.0
    %945 = vmatpush1.msra.mxu0 0.0
    %946 = vmatprep.subr.mxu0 0.0
    %947 = vmatpush1.msra.mxu0 0.0
    %948 = vmatprep.subr.mxu0 0.0
    %949 = vmatpush1.msra.mxu0 0.0
    %950 = vmatprep.subr.mxu0 0.0
    %951 = vmatpush1.msra.mxu0 0.0
    %952 = vmatprep.subr.mxu0 0.0
    %953 = vmatpush1.msra.mxu0 0.0
    %954 = vmatprep.subr.mxu0 0.0
    %955 = vmatpush1.msra.mxu0 0.0
    %956 = vmatprep.subr.mxu0 0.0
    %957 = vmatpush1.msra.mxu0 0.0
    %958 = vmatprep.subr.mxu0 0.0
    %959 = vmatpush1.msra.mxu0 0.0
    %960 = vmatprep.subr.mxu0 0.0
    %961 = vmatpush1.msra.mxu0 0.0
    %962 = vmatprep.subr.mxu0 0.0
    %963 = vmatpush1.msra.mxu0 0.0
    %964 = vmatprep.mubr.f32.mxu0 0.0
    %965 = vmatmul.mubr.f32.gmra.mrb[0].mxu0 %v898
    %v966 = vpop.f32.mrb[0].mxu0
    %v967 = vadd.f32 %v875, %v966
    %v968 = vpop.f32.mrb[0].mxu0
    %969 = vdwg.mxu0
    %s970 = sld [smem:[#allocation2]]
    %v971 = vld [vmem:[%s9] sm:$0xff]
    %v972 = vld [vmem:[%s9 + $0x8] sm:$0xff]
    %v973 = vld [vmem:[%s9 + $0x10] sm:$0xff]
    %v974 = vld [vmem:[%s9 + $0x18] sm:$0xff]
    %v975 = vld [vmem:[#allocation8] sm:$0xff]
    %v976 = vld [vmem:[#allocation8 + $0x8] sm:$0xff]
    %v977 = vld [vmem:[#allocation8 + $0x10] sm:$0xff]
    %v978 = vld [vmem:[#allocation8 + $0x18] sm:$0xff]
    %v980 = vsel %vm154, %v967, 0
    %982 = vmatprep.subr.mxu0 0.0
    %983 = vmatpush1.msra.mxu0 %v975
    %984 = vmatprep.subr.mxu0 0.0
    %985 = vmatpush1.msra.mxu0 %v976
    %986 = vmatprep.subr.mxu0 0.0
    %987 = vmatpush1.msra.mxu0 %v977
    %988 = vmatprep.subr.mxu0 0.0
    %989 = vmatpush1.msra.mxu0 %v978
    %990 = vmatprep.subr.mxu0 0.0
    %991 = vmatpush1.msra.mxu0 0.0
    %992 = vmatprep.subr.mxu0 0.0
    %993 = vmatpush1.msra.mxu0 0.0
    %994 = vmatprep.subr.mxu0 0.0
    %995 = vmatpush1.msra.mxu0 0.0
    %996 = vmatprep.subr.mxu0 0.0
    %997 = vmatpush1.msra.mxu0 0.0
    %998 = vmatprep.subr.mxu0 0.0
    %999 = vmatpush1.msra.mxu0 0.0
    %1000 = vmatprep.subr.mxu0 0.0
    %1001 = vmatpush1.msra.mxu0 0.0
    %1002 = vmatprep.subr.mxu0 0.0
    %1003 = vmatpush1.msra.mxu0 0.0
    %1004 = vmatprep.subr.mxu0 0.0
    %1005 = vmatpush1.msra.mxu0 0.0
    %1006 = vmatprep.subr.mxu0 0.0
    %1007 = vmatpush1.msra.mxu0 0.0
    %1008 = vmatprep.subr.mxu0 0.0
    %1009 = vmatpush1.msra.mxu0 0.0
    %1010 = vmatprep.subr.mxu0 0.0
    %1011 = vmatpush1.msra.mxu0 0.0
    %1012 = vmatprep.subr.mxu0 0.0
    %1013 = vmatpush1.msra.mxu0 0.0
    %1014 = vmatprep.subr.mxu0 0.0
    %1015 = vmatpush1.msra.mxu0 0.0
    %1016 = vmatprep.subr.mxu0 0.0
    %1017 = vmatpush1.msra.mxu0 0.0
    %1018 = vmatprep.subr.mxu0 0.0
    %1019 = vmatpush1.msra.mxu0 0.0
    %1020 = vmatprep.subr.mxu0 0.0
    %1021 = vmatpush1.msra.mxu0 0.0
    %1022 = vmatprep.subr.mxu0 0.0
    %1023 = vmatpush1.msra.mxu0 0.0
    %1024 = vmatprep.subr.mxu0 0.0
    %1025 = vmatpush1.msra.mxu0 0.0
    %1026 = vmatprep.subr.mxu0 0.0
    %1027 = vmatpush1.msra.mxu0 0.0
    %1028 = vmatprep.subr.mxu0 0.0
    %1029 = vmatpush1.msra.mxu0 0.0
    %1030 = vmatprep.subr.mxu0 0.0
    %1031 = vmatpush1.msra.mxu0 0.0
    %1032 = vmatprep.subr.mxu0 0.0
    %1033 = vmatpush1.msra.mxu0 0.0
    %1034 = vmatprep.subr.mxu0 0.0
    %1035 = vmatpush1.msra.mxu0 0.0
    %1036 = vmatprep.subr.mxu0 0.0
    %1037 = vmatpush1.msra.mxu0 0.0
    %1038 = vmatprep.subr.mxu0 0.0
    %1039 = vmatpush1.msra.mxu0 0.0
    %1040 = vmatprep.subr.mxu0 0.0
    %1041 = vmatpush1.msra.mxu0 0.0
    %1042 = vmatprep.subr.mxu0 0.0
    %1043 = vmatpush1.msra.mxu0 0.0
    %1044 = vmatprep.subr.mxu0 0.0
    %1045 = vmatpush1.msra.mxu0 0.0
    %1046 = vmatprep.mubr.f32.mxu0 0.0
    %1047 = vmatmul.mubr.f32.gmra.mrb[0].mxu0 %v980
    %v1048 = vpop.f32.mrb[0].mxu0
    %v1049 = vadd.f32 0.0, %v1048
    %v1050 = vpop.f32.mrb[0].mxu0
    %1051 = vdwg.mxu0
    %1052 = vmatprep.subr.mxu0 0.0
    %1053 = vmatpush1.msra.mxu0 %v971
    %1054 = vmatprep.subr.mxu0 0.0
    %1055 = vmatpush1.msra.mxu0 %v972
    %1056 = vmatprep.subr.mxu0 0.0
    %1057 = vmatpush1.msra.mxu0 %v973
    %1058 = vmatprep.subr.mxu0 0.0
    %1059 = vmatpush1.msra.mxu0 %v974
    %1060 = vmatprep.subr.mxu0 0.0
    %1061 = vmatpush1.msra.mxu0 0.0
    %1062 = vmatprep.subr.mxu0 0.0
    %1063 = vmatpush1.msra.mxu0 0.0
    %1064 = vmatprep.subr.mxu0 0.0
    %1065 = vmatpush1.msra.mxu0 0.0
    %1066 = vmatprep.subr.mxu0 0.0
    %1067 = vmatpush1.msra.mxu0 0.0
    %1068 = vmatprep.subr.mxu0 0.0
    %1069 = vmatpush1.msra.mxu0 0.0
    %1070 = vmatprep.subr.mxu0 0.0
    %1071 = vmatpush1.msra.mxu0 0.0
    %1072 = vmatprep.subr.mxu0 0.0
    %1073 = vmatpush1.msra.mxu0 0.0
    %1074 = vmatprep.subr.mxu0 0.0
    %1075 = vmatpush1.msra.mxu0 0.0
    %1076 = vmatprep.subr.mxu0 0.0
    %1077 = vmatpush1.msra.mxu0 0.0
    %1078 = vmatprep.subr.mxu0 0.0
    %1079 = vmatpush1.msra.mxu0 0.0
    %1080 = vmatprep.subr.mxu0 0.0
    %1081 = vmatpush1.msra.mxu0 0.0
    %1082 = vmatprep.subr.mxu0 0.0
    %1083 = vmatpush1.msra.mxu0 0.0
    %1084 = vmatprep.subr.mxu0 0.0
    %1085 = vmatpush1.msra.mxu0 0.0
    %1086 = vmatprep.subr.mxu0 0.0
    %1087 = vmatpush1.msra.mxu0 0.0
    %1088 = vmatprep.subr.mxu0 0.0
    %1089 = vmatpush1.msra.mxu0 0.0
    %1090 = vmatprep.subr.mxu0 0.0
    %1091 = vmatpush1.msra.mxu0 0.0
    %1092 = vmatprep.subr.mxu0 0.0
    %1093 = vmatpush1.msra.mxu0 0.0
    %1094 = vmatprep.subr.mxu0 0.0
    %1095 = vmatpush1.msra.mxu0 0.0
    %1096 = vmatprep.subr.mxu0 0.0
    %1097 = vmatpush1.msra.mxu0 0.0
    %1098 = vmatprep.subr.mxu0 0.0
    %1099 = vmatpush1.msra.mxu0 0.0
    %1100 = vmatprep.subr.mxu0 0.0
    %1101 = vmatpush1.msra.mxu0 0.0
    %1102 = vmatprep.subr.mxu0 0.0
    %1103 = vmatpush1.msra.mxu0 0.0
    %1104 = vmatprep.subr.mxu0 0.0
    %1105 = vmatpush1.msra.mxu0 0.0
    %1106 = vmatprep.subr.mxu0 0.0
    %1107 = vmatpush1.msra.mxu0 0.0
    %1108 = vmatprep.subr.mxu0 0.0
    %1109 = vmatpush1.msra.mxu0 0.0
    %1110 = vmatprep.subr.mxu0 0.0
    %1111 = vmatpush1.msra.mxu0 0.0
    %1112 = vmatprep.subr.mxu0 0.0
    %1113 = vmatpush1.msra.mxu0 0.0
    %1114 = vmatprep.subr.mxu0 0.0
    %1115 = vmatpush1.msra.mxu0 0.0
    %1116 = vmatprep.mubr.f32.mxu0 0.0
    %1117 = vmatmul.mubr.f32.gmra.mrb[0].mxu0 %v156
    %v1118 = vpop.f32.mrb[0].mxu0
    %v1119 = vadd.f32 %v1049, %v1118
    %v1120 = vpop.f32.mrb[0].mxu0
    %1121 = vdwg.mxu0
    %v1122 = vld [vmem:[%s11] sm:$0x1]
    %v1124 = vlaneseq
    %v1125 = vshrl.u32 %v1124, 7
    %v1126 = vsub.s32 0, %v1125
    %v1127 = vrot.slane %v1122, %v1126
    %v1129 = vadd.f32 %v1119, %v1127
    %vm1130 = vcmp.ge.f32.partialorder %v1129, 0.0
    %v1131 = vstv %s970
    %v1132 = vmul.f32 %v1131, %v1129
    %v1133 = vsel %vm1130, %v1129, %v1132
    %v1134 = vld [vmem:[#allocation10] sm:$0xff]
    %v1135 = vld [vmem:[#allocation10 + $0x8] sm:$0xff]
    %v1136 = vld [vmem:[#allocation10 + $0x10] sm:$0xff]
    %v1137 = vld [vmem:[#allocation10 + $0x18] sm:$0xff]
    %v1138 = vld [vmem:[#allocation10 + $0x20] sm:$0xff]
    %v1139 = vld [vmem:[#allocation10 + $0x28] sm:$0xff]
    %v1140 = vld [vmem:[#allocation10 + $0x30] sm:$0xff]
    %v1141 = vld [vmem:[#allocation10 + $0x38] sm:$0xff]
    %v1142 = vld [vmem:[#allocation10 + $0x40] sm:$0xff]
    %v1143 = vld [vmem:[#allocation10 + $0x48] sm:$0xff]
    %v1144 = vld [vmem:[#allocation10 + $0x50] sm:$0xff]
    %v1145 = vld [vmem:[#allocation10 + $0x58] sm:$0xff]
    %v1146 = vld [vmem:[#allocation10 + $0x60] sm:$0xff]
    %v1147 = vld [vmem:[#allocation10 + $0x68] sm:$0xff]
    %v1148 = vld [vmem:[#allocation10 + $0x70] sm:$0xff]
    %v1149 = vld [vmem:[#allocation10 + $0x78] sm:$0xff]
    %v1150 = vld [vmem:[%s13] sm:$0x1]
    %v1152 = vlaneseq
    %v1153 = vshrl.u32 %v1152, 7
    %v1154 = vsub.s32 0, %v1153
    %v1155 = vrot.slane %v1150, %v1154
    %1157 = vmatprep.subr.mxu0 0.0
    %1158 = vmatpush1.msra.mxu0 %v1134
    %1159 = vmatprep.subr.mxu0 0.0
    %1160 = vmatpush1.msra.mxu0 %v1135
    %1161 = vmatprep.subr.mxu0 0.0
    %1162 = vmatpush1.msra.mxu0 %v1136
    %1163 = vmatprep.subr.mxu0 0.0
    %1164 = vmatpush1.msra.mxu0 %v1137
    %1165 = vmatprep.subr.mxu0 0.0
    %1166 = vmatpush1.msra.mxu0 %v1138
    %1167 = vmatprep.subr.mxu0 0.0
    %1168 = vmatpush1.msra.mxu0 %v1139
    %1169 = vmatprep.subr.mxu0 0.0
    %1170 = vmatpush1.msra.mxu0 %v1140
    %1171 = vmatprep.subr.mxu0 0.0
    %1172 = vmatpush1.msra.mxu0 %v1141
    %1173 = vmatprep.subr.mxu0 0.0
    %1174 = vmatpush1.msra.mxu0 %v1142
    %1175 = vmatprep.subr.mxu0 0.0
    %1176 = vmatpush1.msra.mxu0 %v1143
    %1177 = vmatprep.subr.mxu0 0.0
    %1178 = vmatpush1.msra.mxu0 %v1144
    %1179 = vmatprep.subr.mxu0 0.0
    %1180 = vmatpush1.msra.mxu0 %v1145
    %1181 = vmatprep.subr.mxu0 0.0
    %1182 = vmatpush1.msra.mxu0 %v1146
    %1183 = vmatprep.subr.mxu0 0.0
    %1184 = vmatpush1.msra.mxu0 %v1147
    %1185 = vmatprep.subr.mxu0 0.0
    %1186 = vmatpush1.msra.mxu0 %v1148
    %1187 = vmatprep.subr.mxu0 0.0
    %1188 = vmatpush1.msra.mxu0 %v1149
    %1189 = vmatprep.subr.mxu0 0.0
    %1190 = vmatpush1.msra.mxu0 0.0
    %1191 = vmatprep.subr.mxu0 0.0
    %1192 = vmatpush1.msra.mxu0 0.0
    %1193 = vmatprep.subr.mxu0 0.0
    %1194 = vmatpush1.msra.mxu0 0.0
    %1195 = vmatprep.subr.mxu0 0.0
    %1196 = vmatpush1.msra.mxu0 0.0
    %1197 = vmatprep.subr.mxu0 0.0
    %1198 = vmatpush1.msra.mxu0 0.0
    %1199 = vmatprep.subr.mxu0 0.0
    %1200 = vmatpush1.msra.mxu0 0.0
    %1201 = vmatprep.subr.mxu0 0.0
    %1202 = vmatpush1.msra.mxu0 0.0
    %1203 = vmatprep.subr.mxu0 0.0
    %1204 = vmatpush1.msra.mxu0 0.0
    %1205 = vmatprep.subr.mxu0 0.0
    %1206 = vmatpush1.msra.mxu0 0.0
    %1207 = vmatprep.subr.mxu0 0.0
    %1208 = vmatpush1.msra.mxu0 0.0
    %1209 = vmatprep.subr.mxu0 0.0
    %1210 = vmatpush1.msra.mxu0 0.0
    %1211 = vmatprep.subr.mxu0 0.0
    %1212 = vmatpush1.msra.mxu0 0.0
    %1213 = vmatprep.subr.mxu0 0.0
    %1214 = vmatpush1.msra.mxu0 0.0
    %1215 = vmatprep.subr.mxu0 0.0
    %1216 = vmatpush1.msra.mxu0 0.0
    %1217 = vmatprep.subr.mxu0 0.0
    %1218 = vmatpush1.msra.mxu0 0.0
    %1219 = vmatprep.subr.mxu0 0.0
    %1220 = vmatpush1.msra.mxu0 0.0
    %1221 = vmatprep.mubr.f32.mxu0 0.0
    %1222 = vmatmul.mubr.f32.gmra.mrb[0].mxu0 %v1133
    %v1223 = vpop.f32.mrb[0].mxu0
    %v1224 = vadd.f32 %v1155, %v1223
    %v1225 = vpop.f32.mrb[0].mxu0
    %1226 = vdwg.mxu0
    %vm1227 = vcmp.ge.f32.partialorder %v1224, 0.0
    %v1228 = vmul.f32 %v1131, %v1224
    %v1229 = vsel %vm1227, %v1224, %v1228
    %v1230 = vld [vmem:[#allocation11] sm:$0xff]
    %v1231 = vld [vmem:[#allocation11 + $0x8] sm:$0xff]
    %v1232 = vld [vmem:[#allocation11 + $0x10] sm:$0xff]
    %v1233 = vld [vmem:[#allocation11 + $0x18] sm:$0xff]
    %v1234 = vld [vmem:[#allocation11 + $0x20] sm:$0xff]
    %v1235 = vld [vmem:[#allocation11 + $0x28] sm:$0xff]
    %v1236 = vld [vmem:[#allocation11 + $0x30] sm:$0xff]
    %v1237 = vld [vmem:[#allocation11 + $0x38] sm:$0xff]
    %v1238 = vld [vmem:[#allocation11 + $0x40] sm:$0xff]
    %v1239 = vld [vmem:[#allocation11 + $0x48] sm:$0xff]
    %v1240 = vld [vmem:[#allocation11 + $0x50] sm:$0xff]
    %v1241 = vld [vmem:[#allocation11 + $0x58] sm:$0xff]
    %v1242 = vld [vmem:[#allocation11 + $0x60] sm:$0xff]
    %v1243 = vld [vmem:[#allocation11 + $0x68] sm:$0xff]
    %v1244 = vld [vmem:[#allocation11 + $0x70] sm:$0xff]
    %v1245 = vld [vmem:[#allocation11 + $0x78] sm:$0xff]
    %v1246 = vld [vmem:[%s15] sm:$0x1]
    %v1248 = vlaneseq
    %v1249 = vshrl.u32 %v1248, 7
    %v1250 = vsub.s32 0, %v1249
    %v1251 = vrot.slane %v1246, %v1250
    %1253 = vmatprep.subr.mxu0 0.0
    %1254 = vmatpush1.msra.mxu0 %v1230
    %1255 = vmatprep.subr.mxu0 0.0
    %1256 = vmatpush1.msra.mxu0 %v1231
    %1257 = vmatprep.subr.mxu0 0.0
    %1258 = vmatpush1.msra.mxu0 %v1232
    %1259 = vmatprep.subr.mxu0 0.0
    %1260 = vmatpush1.msra.mxu0 %v1233
    %1261 = vmatprep.subr.mxu0 0.0
    %1262 = vmatpush1.msra.mxu0 %v1234
    %1263 = vmatprep.subr.mxu0 0.0
    %1264 = vmatpush1.msra.mxu0 %v1235
    %1265 = vmatprep.subr.mxu0 0.0
    %1266 = vmatpush1.msra.mxu0 %v1236
    %1267 = vmatprep.subr.mxu0 0.0
    %1268 = vmatpush1.msra.mxu0 %v1237
    %1269 = vmatprep.subr.mxu0 0.0
    %1270 = vmatpush1.msra.mxu0 %v1238
    %1271 = vmatprep.subr.mxu0 0.0
    %1272 = vmatpush1.msra.mxu0 %v1239
    %1273 = vmatprep.subr.mxu0 0.0
    %1274 = vmatpush1.msra.mxu0 %v1240
    %1275 = vmatprep.subr.mxu0 0.0
    %1276 = vmatpush1.msra.mxu0 %v1241
    %1277 = vmatprep.subr.mxu0 0.0
    %1278 = vmatpush1.msra.mxu0 %v1242
    %1279 = vmatprep.subr.mxu0 0.0
    %1280 = vmatpush1.msra.mxu0 %v1243
    %1281 = vmatprep.subr.mxu0 0.0
    %1282 = vmatpush1.msra.mxu0 %v1244
    %1283 = vmatprep.subr.mxu0 0.0
    %1284 = vmatpush1.msra.mxu0 %v1245
    %1285 = vmatprep.subr.mxu0 0.0
    %1286 = vmatpush1.msra.mxu0 0.0
    %1287 = vmatprep.subr.mxu0 0.0
    %1288 = vmatpush1.msra.mxu0 0.0
    %1289 = vmatprep.subr.mxu0 0.0
    %1290 = vmatpush1.msra.mxu0 0.0
    %1291 = vmatprep.subr.mxu0 0.0
    %1292 = vmatpush1.msra.mxu0 0.0
    %1293 = vmatprep.subr.mxu0 0.0
    %1294 = vmatpush1.msra.mxu0 0.0
    %1295 = vmatprep.subr.mxu0 0.0
    %1296 = vmatpush1.msra.mxu0 0.0
    %1297 = vmatprep.subr.mxu0 0.0
    %1298 = vmatpush1.msra.mxu0 0.0
    %1299 = vmatprep.subr.mxu0 0.0
    %1300 = vmatpush1.msra.mxu0 0.0
    %1301 = vmatprep.subr.mxu0 0.0
    %1302 = vmatpush1.msra.mxu0 0.0
    %1303 = vmatprep.subr.mxu0 0.0
    %1304 = vmatpush1.msra.mxu0 0.0
    %1305 = vmatprep.subr.mxu0 0.0
    %1306 = vmatpush1.msra.mxu0 0.0
    %1307 = vmatprep.subr.mxu0 0.0
    %1308 = vmatpush1.msra.mxu0 0.0
    %1309 = vmatprep.subr.mxu0 0.0
    %1310 = vmatpush1.msra.mxu0 0.0
    %1311 = vmatprep.subr.mxu0 0.0
    %1312 = vmatpush1.msra.mxu0 0.0
    %1313 = vmatprep.subr.mxu0 0.0
    %1314 = vmatpush1.msra.mxu0 0.0
    %1315 = vmatprep.subr.mxu0 0.0
    %1316 = vmatpush1.msra.mxu0 0.0
    %1317 = vmatprep.mubr.f32.mxu0 0.0
    %1318 = vmatmul.mubr.f32.gmra.mrb[0].mxu0 %v1229
    %v1319 = vpop.f32.mrb[0].mxu0
    %v1320 = vadd.f32 %v1251, %v1319
    %v1321 = vpop.f32.mrb[0].mxu0
    %1322 = vdwg.mxu0
    %vm1323 = vcmp.ge.f32.partialorder %v1320, 0.0
    %v1324 = vmul.f32 %v1131, %v1320
    %v1325 = vsel %vm1323, %v1320, %v1324
    %v1326 = vxor.u32 %v1325, 2147483648
    %v1327 = vmul.f32 %v1326, 1.442695
    %v1328 = vpow.pop %v1327
    %v1329 = vadd.f32 %v1328, 1.0
    %v1330 = vrcp.pop %v1329
    %v1331 = vmul.f32 1.0, %v1330
    %vm1332 = vcmask 7168
    %1333 = vst.msk [vmem:[%s16] sm:$0xff] %vm1332, %v1331
    // Predicated region
    $region90: #{tpu_custom_call.1} parent=1 // pred_check
      _
    $region91: #{tpu_custom_call.1} parent=1 // pred_check_branch
      %1335 = sbr.rel (0) target = $region93
    $region92: #{tpu_custom_call.1} parent=1 // pred_region
      _
    $region93: #{tpu_custom_call.1} parent=1 // pred_fallthru
      _
    // Predicated region
    $region94: #{tpu_custom_call.1} parent=1 // pred_check
      _
    $region95: #{tpu_custom_call.1} parent=1 // pred_check_branch
      %1337 = sbr.rel (0) target = $region97
    $region96: #{tpu_custom_call.1} parent=1 // pred_region
      _
    $region97: #{tpu_custom_call.1} parent=1 // pred_fallthru
      _
    %1338 = vsyncpa [#allocation4], 1
    %1339 = vsyncpa [#allocation6], 1
    %1340 = vsyncpa [#allocation9], 1
    %1341 = vsyncpa [#allocation12], 1

// kernel: tpu_custom_call.1
$region0: #{tpu_custom_call.1}
  #allocation0 [shape = 'u32[]', space=smem, size = 0x4, offset = 0x4, fixed_abs, tag = 'smem constant byte address 0x4 - core index']
  #allocation1 [shape = 'u32[144,128]{1,0:T(1,128)}', space=vmem, size = 0x12000, scoped, tag = 'internal scratch']
  #allocation2 [shape = 'f32[1,1]{1,0:T(1,128)S(6)}', space=smem, size = 0x200, scoped, tag = 'scoped memory for tpu_custom_call.1']
  %s0 = inlined_call_operand.hbm [shape: f32[8,32], index: 0, kind: input, shape index: {}]
  %s1 = inlined_call_operand.hbm [shape: f32[8,8,128], index: 1, kind: input, shape index: {}]
  %s2 = inlined_call_operand.vmem [shape: f32[32,32], index: 2, kind: input, shape index: {}]
  %s3 = inlined_call_operand.vmem [shape: f32[1,32], index: 3, kind: input, shape index: {}]
  %s4 = inlined_call_operand.hbm [shape: f32[32,128], index: 4, kind: input, shape index: {}]
  %s5 = inlined_call_operand.vmem [shape: f32[128,128], index: 5, kind: input, shape index: {}]
  %s6 = inlined_call_operand.vmem [shape: f32[128,32], index: 6, kind: input, shape index: {}]
  %s7 = inlined_call_operand.vmem [shape: f32[1,32], index: 7, kind: input, shape index: {}]
  %s8 = inlined_call_operand.<no memory space> [shape: f32[1,1], index: 8, kind: input, shape index: {}]
  %s9 = inlined_call_operand.vmem [shape: f32[32,128], index: 9, kind: input, shape index: {}]
  %s10 = inlined_call_operand.hbm [shape: f32[32,128], index: 10, kind: input, shape index: {}]
  %s11 = inlined_call_operand.vmem [shape: f32[1,128], index: 11, kind: input, shape index: {}]
  %s12 = inlined_call_operand.hbm [shape: f32[128,128], index: 12, kind: input, shape index: {}]
  %s13 = inlined_call_operand.vmem [shape: f32[1,128], index: 13, kind: input, shape index: {}]
  %s14 = inlined_call_operand.hbm [shape: f32[128,128], index: 14, kind: input, shape index: {}]
  %s15 = inlined_call_operand.vmem [shape: f32[1,128], index: 15, kind: input, shape index: {}]
  %s16 = inlined_call_operand.vmem [shape: f32[8,1], index: 16, kind: output, shape index: {}]
  %s17 = sld [smem:[#allocation0]]
  $region98: #{tpu_custom_call.1} parent=0
    _
  %s19 = ssub.s32 1, %s17
  %s20 = scalar_select 0, %s19, %s17
  %21 = sst [smem:[#allocation2]] %s8
  $region1: #{tpu_custom_call.1} parent=0
    #allocation3 [shape = 'u8[4096]{0}', space=vmem, size = 0x1000, scoped, tag = 'input window, operand 0, single buffered']
    #allocation4 [shape = 's32[1]{0}', space=sflag, size = 0x4, scoped, tag = 'scoped memory for tpu_custom_call.1']
    #allocation5 [shape = 'u8[32768]{0}', space=vmem, size = 0x8000, scoped, tag = 'input window, operand 1, single buffered']
    #allocation6 [shape = 's32[1]{0}', space=sflag, size = 0x4, scoped, tag = 'scoped memory for tpu_custom_call.1']
    #allocation7 [shape = 'u8[16384]{0}', space=vmem, size = 0x4000, scoped, tag = 'input window, operand 4, single buffered']
    #allocation8 [shape = 'u8[16384]{0}', space=vmem, size = 0x4000, scoped, tag = 'input window, operand 10, single buffered']
    #allocation9 [shape = 's32[1]{0}', space=sflag, size = 0x4, scoped, tag = 'scoped memory for tpu_custom_call.1']
    #allocation10 [shape = 'u8[65536]{0}', space=vmem, size = 0x10000, scoped, tag = 'input window, operand 12, single buffered']
    #allocation11 [shape = 'u8[65536]{0}', space=vmem, size = 0x10000, scoped, tag = 'input window, operand 14, single buffered']
    #allocation12 [shape = 's32[1]{0}', space=sflag, size = 0x4, scoped, tag = 'scoped memory for tpu_custom_call.1']
    %22 = vsyncpa [#allocation4], 0
    %23 = vsyncpa [#allocation6], 0
    %24 = vsyncpa [#allocation9], 0
    %25 = vsyncpa [#allocation12], 0
    // Predicated region
    $region2: #{tpu_custom_call.1} parent=1 // pred_check
      _
    $region3: #{tpu_custom_call.1} parent=1 // pred_check_branch
      %27 = sbr.rel (0) target = $region5
    $region4: #{tpu_custom_call.1} parent=1 // pred_region
      %s29 = ssub.s32 128, 128
      %30 = vsyncadd [#allocation4], %s29
      %s32 = sshll.u32 [#allocation3], 4
      %s33 = int_to_ptr.vmem [resolvable:$true] %s32
      %35 = dma.hbm_to_vmem [thread:$0]  %s0, 128, %s33, [#allocation4]
    $region5: #{tpu_custom_call.1} parent=1 // pred_fallthru
      _
    // Predicated region
    $region6: #{tpu_custom_call.1} parent=1 // pred_check
      _
    $region7: #{tpu_custom_call.1} parent=1 // pred_check_branch
      %37 = sbr.rel (0) target = $region9
    $region8: #{tpu_custom_call.1} parent=1 // pred_region
      %s39 = ssub.s32 1024, 1024
      %40 = vsyncadd [#allocation6], %s39
      %s41 = sshll.u32 [#allocation5], 4
      %s42 = int_to_ptr.vmem [resolvable:$true] %s41
      %47 = dma.hbm_to_vmem [thread:$0]  %s1, 1024, %s42, [#allocation6], 128, 128, 8
    $region9: #{tpu_custom_call.1} parent=1 // pred_fallthru
      _
    // Predicated region
    $region10: #{tpu_custom_call.1} parent=1 // pred_check
      _
    $region11: #{tpu_custom_call.1} parent=1 // pred_check_branch
      %49 = sbr.rel (0) target = $region13
    $region12: #{tpu_custom_call.1} parent=1 // pred_region
      _
    $region13: #{tpu_custom_call.1} parent=1 // pred_fallthru
      _
    // Predicated region
    $region14: #{tpu_custom_call.1} parent=1 // pred_check
      _
    $region15: #{tpu_custom_call.1} parent=1 // pred_check_branch
      %51 = sbr.rel (0) target = $region17
    $region16: #{tpu_custom_call.1} parent=1 // pred_region
      _
    $region17: #{tpu_custom_call.1} parent=1 // pred_fallthru
      _
    // Predicated region
    $region18: #{tpu_custom_call.1} parent=1 // pred_check
      _
    $region19: #{tpu_custom_call.1} parent=1 // pred_check_branch
      %53 = sbr.rel (0) target = $region21
    $region20: #{tpu_custom_call.1} parent=1 // pred_region
      %s55 = ssub.s32 512, 512
      %56 = vsyncadd [#allocation6], %s55
      %s57 = sshll.u32 [#allocation7], 4
      %s58 = int_to_ptr.vmem [resolvable:$true] %s57
      %63 = dma.hbm_to_vmem [thread:$0]  %s4, 512, %s58, [#allocation6], 128, 128, 8
    $region21: #{tpu_custom_call.1} parent=1 // pred_fallthru
      _
    // Predicated region
    $region22: #{tpu_custom_call.1} parent=1 // pred_check
      _
    $region23: #{tpu_custom_call.1} parent=1 // pred_check_branch
      %65 = sbr.rel (0) target = $region25
    $region24: #{tpu_custom_call.1} parent=1 // pred_region
      _
    $region25: #{tpu_custom_call.1} parent=1 // pred_fallthru
      _
    // Predicated region
    $region26: #{tpu_custom_call.1} parent=1 // pred_check
      _
    $region27: #{tpu_custom_call.1} parent=1 // pred_check_branch
      %67 = sbr.rel (0) target = $region29
    $region28: #{tpu_custom_call.1} parent=1 // pred_region
      _
    $region29: #{tpu_custom_call.1} parent=1 // pred_fallthru
      _
    // Predicated region
    $region30: #{tpu_custom_call.1} parent=1 // pred_check
      _
    $region31: #{tpu_custom_call.1} parent=1 // pred_check_branch
      %69 = sbr.rel (0) target = $region33
    $region32: #{tpu_custom_call.1} parent=1 // pred_region
      _
    $region33: #{tpu_custom_call.1} parent=1 // pred_fallthru
      _
    // Predicated region
    $region34: #{tpu_custom_call.1} parent=1 // pred_check
      _
    $region35: #{tpu_custom_call.1} parent=1 // pred_check_branch
      %71 = sbr.rel (0) target = $region37
    $region36: #{tpu_custom_call.1} parent=1 // pred_region
      _
    $region37: #{tpu_custom_call.1} parent=1 // pred_fallthru
      _
    // Predicated region
    $region38: #{tpu_custom_call.1} parent=1 // pred_check
      _
    $region39: #{tpu_custom_call.1} parent=1 // pred_check_branch
      %73 = sbr.rel (0) target = $region41
    $region40: #{tpu_custom_call.1} parent=1 // pred_region
      _
    $region41: #{tpu_custom_call.1} parent=1 // pred_fallthru
      _
    // Predicated region
    $region42: #{tpu_custom_call.1} parent=1 // pred_check
      _
    $region43: #{tpu_custom_call.1} parent=1 // pred_check_branch
      %75 = sbr.rel (0) target = $region45
    $region44: #{tpu_custom_call.1} parent=1 // pred_region
      %s77 = ssub.s32 512, 512
      %78 = vsyncadd [#allocation9], %s77
      %s79 = sshll.u32 [#allocation8], 4
      %s80 = int_to_ptr.vmem [resolvable:$true] %s79
      %85 = dma.hbm_to_vmem [thread:$0]  %s10, 512, %s80, [#allocation9], 128, 128, 8
    $region45: #{tpu_custom_call.1} parent=1 // pred_fallthru
      _
    // Predicated region
    $region46: #{tpu_custom_call.1} parent=1 // pred_check
      _
    $region47: #{tpu_custom_call.1} parent=1 // pred_check_branch
      %87 = sbr.rel (0) target = $region49
    $region48: #{tpu_custom_call.1} parent=1 // pred_region
      _
    $region49: #{tpu_custom_call.1} parent=1 // pred_fallthru
      _
    // Predicated region
    $region50: #{tpu_custom_call.1} parent=1 // pred_check
      _
    $region51: #{tpu_custom_call.1} parent=1 // pred_check_branch
      %89 = sbr.rel (0) target = $region53
    $region52: #{tpu_custom_call.1} parent=1 // pred_region
      %s91 = ssub.s32 2048, 2048
      %92 = vsyncadd [#allocation9], %s91
      %s93 = sshll.u32 [#allocation10], 4
      %s94 = int_to_ptr.vmem [resolvable:$true] %s93
      %99 = dma.hbm_to_vmem [thread:$0]  %s12, 2048, %s94, [#allocation9], 128, 128, 8
    $region53: #{tpu_custom_call.1} parent=1 // pred_fallthru
      _
    // Predicated region
    $region54: #{tpu_custom_call.1} parent=1 // pred_check
      _
    $region55: #{tpu_custom_call.1} parent=1 // pred_check_branch
      %101 = sbr.rel (0) target = $region57
    $region56: #{tpu_custom_call.1} parent=1 // pred_region
      _
    $region57: #{tpu_custom_call.1} parent=1 // pred_fallthru
      _
    // Predicated region
    $region58: #{tpu_custom_call.1} parent=1 // pred_check
      _
    $region59: #{tpu_custom_call.1} parent=1 // pred_check_branch
      %103 = sbr.rel (0) target = $region61
    $region60: #{tpu_custom_call.1} parent=1 // pred_region
      %s105 = ssub.s32 2048, 2048
      %106 = vsyncadd [#allocation12], %s105
      %s107 = sshll.u32 [#allocation11], 4
      %s108 = int_to_ptr.vmem [resolvable:$true] %s107
      %113 = dma.hbm_to_vmem [thread:$0]  %s14, 2048, %s108, [#allocation12], 128, 128, 8
    $region61: #{tpu_custom_call.1} parent=1 // pred_fallthru
      _
    // Predicated region
    $region62: #{tpu_custom_call.1} parent=1 // pred_check
      _
    $region63: #{tpu_custom_call.1} parent=1 // pred_check_branch
      %115 = sbr.rel (0) target = $region65
    $region64: #{tpu_custom_call.1} parent=1 // pred_region
      _
    $region65: #{tpu_custom_call.1} parent=1 // pred_fallthru
      _
    // Predicated region
    $region66: #{tpu_custom_call.1} parent=1 // pred_check
      _
    $region67: #{tpu_custom_call.1} parent=1 // pred_check_branch
      %117 = sbr.rel (0) target = $region69
    $region68: #{tpu_custom_call.1} parent=1 // pred_region
      %118 = dma.done [#allocation4], 128
    $region69: #{tpu_custom_call.1} parent=1 // pred_fallthru
      _
    // Predicated region
    $region70: #{tpu_custom_call.1} parent=1 // pred_check
      _
    $region71: #{tpu_custom_call.1} parent=1 // pred_check_branch
      %120 = sbr.rel (0) target = $region73
    $region72: #{tpu_custom_call.1} parent=1 // pred_region
      %121 = dma.done [#allocation6], 1024
    $region73: #{tpu_custom_call.1} parent=1 // pred_fallthru
      _
    // Predicated region
    $region74: #{tpu_custom_call.1} parent=1 // pred_check
      _
    $region75: #{tpu_custom_call.1} parent=1 // pred_check_branch
      %123 = sbr.rel (0) target = $region77
    $region76: #{tpu_custom_call.1} parent=1 // pred_region
      %124 = dma.done [#allocation6], 512
    $region77: #{tpu_custom_call.1} parent=1 // pred_fallthru
      _
    // Predicated region
    $region78: #{tpu_custom_call.1} parent=1 // pred_check
      _
    $region79: #{tpu_custom_call.1} parent=1 // pred_check_branch
      %126 = sbr.rel (0) target = $region81
    $region80: #{tpu_custom_call.1} parent=1 // pred_region
      %127 = dma.done [#allocation9], 512
    $region81: #{tpu_custom_call.1} parent=1 // pred_fallthru
      _
    // Predicated region
    $region82: #{tpu_custom_call.1} parent=1 // pred_check
      _
    $region83: #{tpu_custom_call.1} parent=1 // pred_check_branch
      %129 = sbr.rel (0) target = $region85
    $region84: #{tpu_custom_call.1} parent=1 // pred_region
      %130 = dma.done [#allocation9], 2048
    $region85: #{tpu_custom_call.1} parent=1 // pred_fallthru
      _
    // Predicated region
    $region86: #{tpu_custom_call.1} parent=1 // pred_check
      _
    $region87: #{tpu_custom_call.1} parent=1 // pred_check_branch
      %132 = sbr.rel (0) target = $region89
    $region88: #{tpu_custom_call.1} parent=1 // pred_region
      %133 = dma.done [#allocation12], 2048
    $region89: #{tpu_custom_call.1} parent=1 // pred_fallthru
      _
    %v134 = vld [vmem:[#allocation3] sm:$0xff]
    %v135 = vld [vmem:[#allocation5] sm:$0xff]
    %v136 = vld [vmem:[#allocation5 + $0x8] sm:$0xff]
    %v137 = vld [vmem:[#allocation5 + $0x10] sm:$0xff]
    %v138 = vld [vmem:[#allocation5 + $0x18] sm:$0xff]
    %v139 = vld [vmem:[#allocation5 + $0x20] sm:$0xff]
    %v140 = vld [vmem:[#allocation5 + $0x28] sm:$0xff]
    %v141 = vld [vmem:[#allocation5 + $0x30] sm:$0xff]
    %v142 = vld [vmem:[#allocation5 + $0x38] sm:$0xff]
    %v143 = vld [vmem:[%s2] sm:$0xff]
    %v144 = vld [vmem:[%s2 + $0x8] sm:$0xff]
    %v145 = vld [vmem:[%s2 + $0x10] sm:$0xff]
    %v146 = vld [vmem:[%s2 + $0x18] sm:$0xff]
    %v147 = vld [vmem:[%s3] sm:$0x1]
    %v149 = vlaneseq
    %v150 = vshrl.u32 %v149, 7
    %v151 = vsub.s32 0, %v150
    %v152 = vrot.slane %v147, %v151
    %vm154 = vcmask 261120
    %v156 = vsel %vm154, %v134, 0
    %158 = vmatprep.subr.mxu0 0.0
    %159 = vmatpush1.msra.mxu0 %v143
    %160 = vmatprep.subr.mxu0 0.0
    %161 = vmatpush1.msra.mxu0 %v144
    %162 = vmatprep.subr.mxu0 0.0
    %163 = vmatpush1.msra.mxu0 %v145
    %164 = vmatprep.subr.mxu0 0.0
    %165 = vmatpush1.msra.mxu0 %v146
    %166 = vmatprep.subr.mxu0 0.0
    %167 = vmatpush1.msra.mxu0 0.0
    %168 = vmatprep.subr.mxu0 0.0
    %169 = vmatpush1.msra.mxu0 0.0
    %170 = vmatprep.subr.mxu0 0.0
    %171 = vmatpush1.msra.mxu0 0.0
    %172 = vmatprep.subr.mxu0 0.0
    %173 = vmatpush1.msra.mxu0 0.0
    %174 = vmatprep.subr.mxu0 0.0
    %175 = vmatpush1.msra.mxu0 0.0
    %176 = vmatprep.subr.mxu0 0.0
    %177 = vmatpush1.msra.mxu0 0.0
    %178 = vmatprep.subr.mxu0 0.0
    %179 = vmatpush1.msra.mxu0 0.0
    %180 = vmatprep.subr.mxu0 0.0
    %181 = vmatpush1.msra.mxu0 0.0
    %182 = vmatprep.subr.mxu0 0.0
    %183 = vmatpush1.msra.mxu0 0.0
    %184 = vmatprep.subr.mxu0 0.0
    %185 = vmatpush1.msra.mxu0 0.0
    %186 = vmatprep.subr.mxu0 0.0
    %187 = vmatpush1.msra.mxu0 0.0
    %188 = vmatprep.subr.mxu0 0.0
    %189 = vmatpush1.msra.mxu0 0.0
    %190 = vmatprep.subr.mxu0 0.0
    %191 = vmatpush1.msra.mxu0 0.0
    %192 = vmatprep.subr.mxu0 0.0
    %193 = vmatpush1.msra.mxu0 0.0
    %194 = vmatprep.subr.mxu0 0.0
    %195 = vmatpush1.msra.mxu0 0.0
    %196 = vmatprep.subr.mxu0 0.0
    %197 = vmatpush1.msra.mxu0 0.0
    %198 = vmatprep.subr.mxu0 0.0
    %199 = vmatpush1.msra.mxu0 0.0
    %200 = vmatprep.subr.mxu0 0.0
    %201 = vmatpush1.msra.mxu0 0.0
    %202 = vmatprep.subr.mxu0 0.0
    %203 = vmatpush1.msra.mxu0 0.0
    %204 = vmatprep.subr.mxu0 0.0
    %205 = vmatpush1.msra.mxu0 0.0
    %206 = vmatprep.subr.mxu0 0.0
    %207 = vmatpush1.msra.mxu0 0.0
    %208 = vmatprep.subr.mxu0 0.0
    %209 = vmatpush1.msra.mxu0 0.0
    %210 = vmatprep.subr.mxu0 0.0
    %211 = vmatpush1.msra.mxu0 0.0
    %212 = vmatprep.subr.mxu0 0.0
    %213 = vmatpush1.msra.mxu0 0.0
    %214 = vmatprep.subr.mxu0 0.0
    %215 = vmatpush1.msra.mxu0 0.0
    %216 = vmatprep.subr.mxu0 0.0
    %217 = vmatpush1.msra.mxu0 0.0
    %218 = vmatprep.subr.mxu0 0.0
    %219 = vmatpush1.msra.mxu0 0.0
    %220 = vmatprep.subr.mxu0 0.0
    %221 = vmatpush1.msra.mxu0 0.0
    %222 = vmatprep.mubr.f32.mxu0 0.0
    %223 = vmatmul.mubr.f32.gmra.mrb[0].mxu0 %v156
    %v224 = vpop.f32.mrb[0].mxu0
    %v225 = vadd.f32 %v152, %v224
    %v226 = vpop.f32.mrb[0].mxu0
    %227 = vdwg.mxu0
    %v228 = vld [vmem:[#allocation7] sm:$0xff]
    %v229 = vld [vmem:[#allocation7 + $0x8] sm:$0xff]
    %v230 = vld [vmem:[#allocation7 + $0x10] sm:$0xff]
    %v231 = vld [vmem:[#allocation7 + $0x18] sm:$0xff]
    %v233 = vsel %vm154, %v225, 0
    %235 = vmatprep.subr.mxu0 0.0
    %236 = vmatpush1.msra.mxu0 %v228
    %237 = vmatprep.subr.mxu0 0.0
    %238 = vmatpush1.msra.mxu0 %v229
    %239 = vmatprep.subr.mxu0 0.0
    %240 = vmatpush1.msra.mxu0 %v230
    %241 = vmatprep.subr.mxu0 0.0
    %242 = vmatpush1.msra.mxu0 %v231
    %243 = vmatprep.subr.mxu0 0.0
    %244 = vmatpush1.msra.mxu0 0.0
    %245 = vmatprep.subr.mxu0 0.0
    %246 = vmatpush1.msra.mxu0 0.0
    %247 = vmatprep.subr.mxu0 0.0
    %248 = vmatpush1.msra.mxu0 0.0
    %249 = vmatprep.subr.mxu0 0.0
    %250 = vmatpush1.msra.mxu0 0.0
    %251 = vmatprep.subr.mxu0 0.0
    %252 = vmatpush1.msra.mxu0 0.0
    %253 = vmatprep.subr.mxu0 0.0
    %254 = vmatpush1.msra.mxu0 0.0
    %255 = vmatprep.subr.mxu0 0.0
    %256 = vmatpush1.msra.mxu0 0.0
    %257 = vmatprep.subr.mxu0 0.0
    %258 = vmatpush1.msra.mxu0 0.0
    %259 = vmatprep.subr.mxu0 0.0
    %260 = vmatpush1.msra.mxu0 0.0
    %261 = vmatprep.subr.mxu0 0.0
    %262 = vmatpush1.msra.mxu0 0.0
    %263 = vmatprep.subr.mxu0 0.0
    %264 = vmatpush1.msra.mxu0 0.0
    %265 = vmatprep.subr.mxu0 0.0
    %266 = vmatpush1.msra.mxu0 0.0
    %267 = vmatprep.subr.mxu0 0.0
    %268 = vmatpush1.msra.mxu0 0.0
    %269 = vmatprep.subr.mxu0 0.0
    %270 = vmatpush1.msra.mxu0 0.0
    %271 = vmatprep.subr.mxu0 0.0
    %272 = vmatpush1.msra.mxu0 0.0
    %273 = vmatprep.subr.mxu0 0.0
    %274 = vmatpush1.msra.mxu0 0.0
    %275 = vmatprep.subr.mxu0 0.0
    %276 = vmatpush1.msra.mxu0 0.0
    %277 = vmatprep.subr.mxu0 0.0
    %278 = vmatpush1.msra.mxu0 0.0
    %279 = vmatprep.subr.mxu0 0.0
    %280 = vmatpush1.msra.mxu0 0.0
    %281 = vmatprep.subr.mxu0 0.0
    %282 = vmatpush1.msra.mxu0 0.0
    %283 = vmatprep.subr.mxu0 0.0
    %284 = vmatpush1.msra.mxu0 0.0
    %285 = vmatprep.subr.mxu0 0.0
    %286 = vmatpush1.msra.mxu0 0.0
    %287 = vmatprep.subr.mxu0 0.0
    %288 = vmatpush1.msra.mxu0 0.0
    %289 = vmatprep.subr.mxu0 0.0
    %290 = vmatpush1.msra.mxu0 0.0
    %291 = vmatprep.subr.mxu0 0.0
    %292 = vmatpush1.msra.mxu0 0.0
    %293 = vmatprep.subr.mxu0 0.0
    %294 = vmatpush1.msra.mxu0 0.0
    %295 = vmatprep.subr.mxu0 0.0
    %296 = vmatpush1.msra.mxu0 0.0
    %297 = vmatprep.subr.mxu0 0.0
    %298 = vmatpush1.msra.mxu0 0.0
    %299 = vmatprep.mubr.f32.mxu0 0.0
    %300 = vmatmul.mubr.f32.gmra.mrb[0].mxu0 %v233
    %v301 = vpop.f32.mrb[0].mxu0
    %v302 = vadd.f32 0.0, %v301
    %v303 = vpop.f32.mrb[0].mxu0
    %304 = vdwg.mxu0
    %v306 = vcombine.high %v302, %v302
    %v308 = vunpack.c.l.s4 1966171168
    %v309 = vunpack.c.0.s8 %v308
    %v310 = vlaneseq
    %v311 = vshrl.u32 %v310, 7
    %v312 = vsub.s32 %v309, %v311
    %v313 = vrot.slane %v302, %v312
    %v315 = vunpack.c.l.s4 1966171168
    %v316 = vunpack.c.0.s8 %v315
    %v317 = vlaneseq
    %v318 = vshrl.u32 %v317, 7
    %v319 = vsub.s32 %v316, %v318
    %v320 = vrot.slane %v306, %v319
    %v321 = vcombine.high %v313, %v313
    %v322 = vcombine.high %v320, %v320
    %v324 = vunpack.c.l.s4 1966171168
    %v325 = vunpack.c.0.s8 %v324
    %v326 = vlaneseq
    %v327 = vshrl.u32 %v326, 7
    %v328 = vsub.s32 %v325, %v327
    %v329 = vrot.slane %v313, %v328
    %v331 = vunpack.c.l.s4 1966171168
    %v332 = vunpack.c.0.s8 %v331
    %v333 = vlaneseq
    %v334 = vshrl.u32 %v333, 7
    %v335 = vsub.s32 %v332, %v334
    %v336 = vrot.slane %v320, %v335
    %v338 = vunpack.c.l.s4 1966171168
    %v339 = vunpack.c.0.s8 %v338
    %v340 = vlaneseq
    %v341 = vshrl.u32 %v340, 7
    %v342 = vsub.s32 %v339, %v341
    %v343 = vrot.slane %v321, %v342
    %v345 = vunpack.c.l.s4 1966171168
    %v346 = vunpack.c.0.s8 %v345
    %v347 = vlaneseq
    %v348 = vshrl.u32 %v347, 7
    %v349 = vsub.s32 %v346, %v348
    %v350 = vrot.slane %v322, %v349
    %v351 = vcombine.high %v329, %v329
    %v352 = vcombine.high %v336, %v336
    %v353 = vcombine.high %v343, %v343
    %v354 = vcombine.high %v350, %v350
    %v355 = vlaneseq
    %v356 = vshrl.u32 %v355, 7
    %v357 = vsub.s32 0, %v356
    %v358 = vrot.slane %v329, %v357
    %v359 = vlaneseq
    %v360 = vshrl.u32 %v359, 7
    %v361 = vsub.s32 0, %v360
    %v362 = vrot.slane %v343, %v361
    %v363 = vlaneseq
    %v364 = vshrl.u32 %v363, 7
    %v365 = vsub.s32 0, %v364
    %v366 = vrot.slane %v351, %v365
    %v367 = vlaneseq
    %v368 = vshrl.u32 %v367, 7
    %v369 = vsub.s32 0, %v368
    %v370 = vrot.slane %v353, %v369
    %v371 = vlaneseq
    %v372 = vshrl.u32 %v371, 7
    %v373 = vsub.s32 0, %v372
    %v374 = vrot.slane %v336, %v373
    %v375 = vlaneseq
    %v376 = vshrl.u32 %v375, 7
    %v377 = vsub.s32 0, %v376
    %v378 = vrot.slane %v350, %v377
    %v379 = vlaneseq
    %v380 = vshrl.u32 %v379, 7
    %v381 = vsub.s32 0, %v380
    %v382 = vrot.slane %v352, %v381
    %v383 = vlaneseq
    %v384 = vshrl.u32 %v383, 7
    %v385 = vsub.s32 0, %v384
    %v386 = vrot.slane %v354, %v385
    %v395 = vmul.f32 %v135, %v358
    %v396 = vmul.f32 %v136, %v362
    %v397 = vmul.f32 %v137, %v366
    %v398 = vmul.f32 %v138, %v370
    %v399 = vmul.f32 %v139, %v374
    %v400 = vmul.f32 %v140, %v378
    %v401 = vmul.f32 %v141, %v382
    %v402 = vmul.f32 %v142, %v386
    %v403 = vld [vmem:[%s5] sm:$0xff]
    %v404 = vld [vmem:[%s5 + $0x8] sm:$0xff]
    %v405 = vld [vmem:[%s5 + $0x10] sm:$0xff]
    %v406 = vld [vmem:[%s5 + $0x18] sm:$0xff]
    %v407 = vld [vmem:[%s5 + $0x20] sm:$0xff]
    %v408 = vld [vmem:[%s5 + $0x28] sm:$0xff]
    %v409 = vld [vmem:[%s5 + $0x30] sm:$0xff]
    %v410 = vld [vmem:[%s5 + $0x38] sm:$0xff]
    %v411 = vld [vmem:[%s5 + $0x40] sm:$0xff]
    %v412 = vld [vmem:[%s5 + $0x48] sm:$0xff]
    %v413 = vld [vmem:[%s5 + $0x50] sm:$0xff]
    %v414 = vld [vmem:[%s5 + $0x58] sm:$0xff]
    %v415 = vld [vmem:[%s5 + $0x60] sm:$0xff]
    %v416 = vld [vmem:[%s5 + $0x68] sm:$0xff]
    %v417 = vld [vmem:[%s5 + $0x70] sm:$0xff]
    %v418 = vld [vmem:[%s5 + $0x78] sm:$0xff]
    %419 = vmatprep.subr.mxu0 0.0
    %420 = vmatpush1.msra.mxu0 %v403
    %421 = vmatprep.subr.mxu0 0.0
    %422 = vmatpush1.msra.mxu0 %v404
    %423 = vmatprep.subr.mxu0 0.0
    %424 = vmatpush1.msra.mxu0 %v405
    %425 = vmatprep.subr.mxu0 0.0
    %426 = vmatpush1.msra.mxu0 %v406
    %427 = vmatprep.subr.mxu0 0.0
    %428 = vmatpush1.msra.mxu0 %v407
    %429 = vmatprep.subr.mxu0 0.0
    %430 = vmatpush1.msra.mxu0 %v408
    %431 = vmatprep.subr.mxu0 0.0
    %432 = vmatpush1.msra.mxu0 %v409
    %433 = vmatprep.subr.mxu0 0.0
    %434 = vmatpush1.msra.mxu0 %v410
    %435 = vmatprep.subr.mxu0 0.0
    %436 = vmatpush1.msra.mxu0 %v411
    %437 = vmatprep.subr.mxu0 0.0
    %438 = vmatpush1.msra.mxu0 %v412
    %439 = vmatprep.subr.mxu0 0.0
    %440 = vmatpush1.msra.mxu0 %v413
    %441 = vmatprep.subr.mxu0 0.0
    %442 = vmatpush1.msra.mxu0 %v414
    %443 = vmatprep.subr.mxu0 0.0
    %444 = vmatpush1.msra.mxu0 %v415
    %445 = vmatprep.subr.mxu0 0.0
    %446 = vmatpush1.msra.mxu0 %v416
    %447 = vmatprep.subr.mxu0 0.0
    %448 = vmatpush1.msra.mxu0 %v417
    %449 = vmatprep.subr.mxu0 0.0
    %450 = vmatpush1.msra.mxu0 %v418
    %451 = vmatprep.subr.mxu0 0.0
    %452 = vmatpush1.msra.mxu0 0.0
    %453 = vmatprep.subr.mxu0 0.0
    %454 = vmatpush1.msra.mxu0 0.0
    %455 = vmatprep.subr.mxu0 0.0
    %456 = vmatpush1.msra.mxu0 0.0
    %457 = vmatprep.subr.mxu0 0.0
    %458 = vmatpush1.msra.mxu0 0.0
    %459 = vmatprep.subr.mxu0 0.0
    %460 = vmatpush1.msra.mxu0 0.0
    %461 = vmatprep.subr.mxu0 0.0
    %462 = vmatpush1.msra.mxu0 0.0
    %463 = vmatprep.subr.mxu0 0.0
    %464 = vmatpush1.msra.mxu0 0.0
    %465 = vmatprep.subr.mxu0 0.0
    %466 = vmatpush1.msra.mxu0 0.0
    %467 = vmatprep.subr.mxu0 0.0
    %468 = vmatpush1.msra.mxu0 0.0
    %469 = vmatprep.subr.mxu0 0.0
    %470 = vmatpush1.msra.mxu0 0.0
    %471 = vmatprep.subr.mxu0 0.0
    %472 = vmatpush1.msra.mxu0 0.0
    %473 = vmatprep.subr.mxu0 0.0
    %474 = vmatpush1.msra.mxu0 0.0
    %475 = vmatprep.subr.mxu0 0.0
    %476 = vmatpush1.msra.mxu0 0.0
    %477 = vmatprep.subr.mxu0 0.0
    %478 = vmatpush1.msra.mxu0 0.0
    %479 = vmatprep.subr.mxu0 0.0
    %480 = vmatpush1.msra.mxu0 0.0
    %481 = vmatprep.subr.mxu0 0.0
    %482 = vmatpush1.msra.mxu0 0.0
    %483 = vmatprep.mubr.f32.mxu0 0.0
    %484 = vmatmul.mubr.f32.gmra.mrb[0].mxu0 %v395
    %v485 = vpop.f32.mrb[0].mxu0
    %v486 = vadd.f32 0.0, %v485
    %v487 = vpop.f32.mrb[0].mxu0
    %488 = vmatprep.mubr.f32.mxu0 0.0
    %489 = vmatmul.mubr.f32.gmra.mrb[0].mxu0 %v396
    %v490 = vpop.f32.mrb[0].mxu0
    %v491 = vadd.f32 0.0, %v490
    %v492 = vpop.f32.mrb[0].mxu0
    %493 = vmatprep.mubr.f32.mxu0 0.0
    %494 = vmatmul.mubr.f32.gmra.mrb[0].mxu0 %v397
    %v495 = vpop.f32.mrb[0].mxu0
    %v496 = vadd.f32 0.0, %v495
    %v497 = vpop.f32.mrb[0].mxu0
    %498 = vmatprep.mubr.f32.mxu0 0.0
    %499 = vmatmul.mubr.f32.gmra.mrb[0].mxu0 %v398
    %v500 = vpop.f32.mrb[0].mxu0
    %v501 = vadd.f32 0.0, %v500
    %v502 = vpop.f32.mrb[0].mxu0
    %503 = vmatprep.mubr.f32.mxu0 0.0
    %504 = vmatmul.mubr.f32.gmra.mrb[0].mxu0 %v399
    %v505 = vpop.f32.mrb[0].mxu0
    %v506 = vadd.f32 0.0, %v505
    %v507 = vpop.f32.mrb[0].mxu0
    %508 = vmatprep.mubr.f32.mxu0 0.0
    %509 = vmatmul.mubr.f32.gmra.mrb[0].mxu0 %v400
    %v510 = vpop.f32.mrb[0].mxu0
    %v511 = vadd.f32 0.0, %v510
    %v512 = vpop.f32.mrb[0].mxu0
    %513 = vmatprep.mubr.f32.mxu0 0.0
    %514 = vmatmul.mubr.f32.gmra.mrb[0].mxu0 %v401
    %v515 = vpop.f32.mrb[0].mxu0
    %v516 = vadd.f32 0.0, %v515
    %v517 = vpop.f32.mrb[0].mxu0
    %518 = vmatprep.mubr.f32.mxu0 0.0
    %519 = vmatmul.mubr.f32.gmra.mrb[0].mxu0 %v402
    %v520 = vpop.f32.mrb[0].mxu0
    %v521 = vadd.f32 0.0, %v520
    %v522 = vpop.f32.mrb[0].mxu0
    %523 = vdwg.mxu0
    %524 = vmax.xlane.f32.xlu0 %v486
    %v525 = vpop.xlane.xlu0 %524
    %526 = vmax.xlane.f32.xlu0 %v491
    %v527 = vpop.xlane.xlu0 %526
    %528 = vmax.xlane.f32.xlu0 %v496
    %v529 = vpop.xlane.xlu0 %528
    %530 = vmax.xlane.f32.xlu0 %v501
    %v531 = vpop.xlane.xlu0 %530
    %532 = vmax.xlane.f32.xlu0 %v506
    %v533 = vpop.xlane.xlu0 %532
    %534 = vmax.xlane.f32.xlu0 %v511
    %v535 = vpop.xlane.xlu0 %534
    %536 = vmax.xlane.f32.xlu0 %v516
    %v537 = vpop.xlane.xlu0 %536
    %538 = vmax.xlane.f32.xlu0 %v521
    %v539 = vpop.xlane.xlu0 %538
    %v540 = vrot.slane %v525, 4
    %v541 = vmax.f32 %v525, %v540
    %v542 = vrot.slane %v541, 2
    %v543 = vmax.f32 %v541, %v542
    %v544 = vrot.slane %v543, 1
    %v545 = vmax.f32 %v543, %v544
    %v546 = vrot.slane %v527, 4
    %v547 = vmax.f32 %v527, %v546
    %v548 = vrot.slane %v547, 2
    %v549 = vmax.f32 %v547, %v548
    %v550 = vrot.slane %v549, 1
    %v551 = vmax.f32 %v549, %v550
    %v552 = vrot.slane %v529, 4
    %v553 = vmax.f32 %v529, %v552
    %v554 = vrot.slane %v553, 2
    %v555 = vmax.f32 %v553, %v554
    %v556 = vrot.slane %v555, 1
    %v557 = vmax.f32 %v555, %v556
    %v558 = vrot.slane %v531, 4
    %v559 = vmax.f32 %v531, %v558
    %v560 = vrot.slane %v559, 2
    %v561 = vmax.f32 %v559, %v560
    %v562 = vrot.slane %v561, 1
    %v563 = vmax.f32 %v561, %v562
    %v564 = vrot.slane %v533, 4
    %v565 = vmax.f32 %v533, %v564
    %v566 = vrot.slane %v565, 2
    %v567 = vmax.f32 %v565, %v566
    %v568 = vrot.slane %v567, 1
    %v569 = vmax.f32 %v567, %v568
    %v570 = vrot.slane %v535, 4
    %v571 = vmax.f32 %v535, %v570
    %v572 = vrot.slane %v571, 2
    %v573 = vmax.f32 %v571, %v572
    %v574 = vrot.slane %v573, 1
    %v575 = vmax.f32 %v573, %v574
    %v576 = vrot.slane %v537, 4
    %v577 = vmax.f32 %v537, %v576
    %v578 = vrot.slane %v577, 2
    %v579 = vmax.f32 %v577, %v578
    %v580 = vrot.slane %v579, 1
    %v581 = vmax.f32 %v579, %v580
    %v582 = vrot.slane %v539, 4
    %v583 = vmax.f32 %v539, %v582
    %v584 = vrot.slane %v583, 2
    %v585 = vmax.f32 %v583, %v584
    %v586 = vrot.slane %v585, 1
    %v587 = vmax.f32 %v585, %v586
    %v588 = vsub.f32 %v486, %v545
    %v589 = vsub.f32 %v491, %v551
    %v590 = vsub.f32 %v496, %v557
    %v591 = vsub.f32 %v501, %v563
    %v592 = vsub.f32 %v506, %v569
    %v593 = vsub.f32 %v511, %v575
    %v594 = vsub.f32 %v516, %v581
    %v595 = vsub.f32 %v521, %v587
    %v596 = vmul.f32 %v588, 1.442695
    %v597 = vpow.pop %v596
    %v598 = vmul.f32 %v589, 1.442695
    %v599 = vpow.pop %v598
    %v600 = vmul.f32 %v590, 1.442695
    %v601 = vpow.pop %v600
    %v602 = vmul.f32 %v591, 1.442695
    %v603 = vpow.pop %v602
    %v604 = vmul.f32 %v592, 1.442695
    %v605 = vpow.pop %v604
    %v606 = vmul.f32 %v593, 1.442695
    %v607 = vpow.pop %v606
    %v608 = vmul.f32 %v594, 1.442695
    %v609 = vpow.pop %v608
    %v610 = vmul.f32 %v595, 1.442695
    %v611 = vpow.pop %v610
    %612 = vadd.xlane.f32.xlu0 %v597
    %v613 = vpop.xlane.xlu0 %612
    %614 = vadd.xlane.f32.xlu0 %v599
    %v615 = vpop.xlane.xlu0 %614
    %616 = vadd.xlane.f32.xlu0 %v601
    %v617 = vpop.xlane.xlu0 %616
    %618 = vadd.xlane.f32.xlu0 %v603
    %v619 = vpop.xlane.xlu0 %618
    %620 = vadd.xlane.f32.xlu0 %v605
    %v621 = vpop.xlane.xlu0 %620
    %622 = vadd.xlane.f32.xlu0 %v607
    %v623 = vpop.xlane.xlu0 %622
    %624 = vadd.xlane.f32.xlu0 %v609
    %v625 = vpop.xlane.xlu0 %624
    %626 = vadd.xlane.f32.xlu0 %v611
    %v627 = vpop.xlane.xlu0 %626
    %v628 = vrot.slane %v613, 4
    %v629 = vadd.f32 %v613, %v628
    %v630 = vrot.slane %v629, 2
    %v631 = vadd.f32 %v629, %v630
    %v632 = vrot.slane %v631, 1
    %v633 = vadd.f32 %v631, %v632
    %v634 = vrot.slane %v615, 4
    %v635 = vadd.f32 %v615, %v634
    %v636 = vrot.slane %v635, 2
    %v637 = vadd.f32 %v635, %v636
    %v638 = vrot.slane %v637, 1
    %v639 = vadd.f32 %v637, %v638
    %v640 = vrot.slane %v617, 4
    %v641 = vadd.f32 %v617, %v640
    %v642 = vrot.slane %v641, 2
    %v643 = vadd.f32 %v641, %v642
    %v644 = vrot.slane %v643, 1
    %v645 = vadd.f32 %v643, %v644
    %v646 = vrot.slane %v619, 4
    %v647 = vadd.f32 %v619, %v646
    %v648 = vrot.slane %v647, 2
    %v649 = vadd.f32 %v647, %v648
    %v650 = vrot.slane %v649, 1
    %v651 = vadd.f32 %v649, %v650
    %v652 = vrot.slane %v621, 4
    %v653 = vadd.f32 %v621, %v652
    %v654 = vrot.slane %v653, 2
    %v655 = vadd.f32 %v653, %v654
    %v656 = vrot.slane %v655, 1
    %v657 = vadd.f32 %v655, %v656
    %v658 = vrot.slane %v623, 4
    %v659 = vadd.f32 %v623, %v658
    %v660 = vrot.slane %v659, 2
    %v661 = vadd.f32 %v659, %v660
    %v662 = vrot.slane %v661, 1
    %v663 = vadd.f32 %v661, %v662
    %v664 = vrot.slane %v625, 4
    %v665 = vadd.f32 %v625, %v664
    %v666 = vrot.slane %v665, 2
    %v667 = vadd.f32 %v665, %v666
    %v668 = vrot.slane %v667, 1
    %v669 = vadd.f32 %v667, %v668
    %v670 = vrot.slane %v627, 4
    %v671 = vadd.f32 %v627, %v670
    %v672 = vrot.slane %v671, 2
    %v673 = vadd.f32 %v671, %v672
    %v674 = vrot.slane %v673, 1
    %v675 = vadd.f32 %v673, %v674
    %v676 = vrcp.pop %v633
    %v677 = vmul.f32 32.0, %v676
    %v678 = vrcp.pop %v639
    %v679 = vmul.f32 32.0, %v678
    %v680 = vrcp.pop %v645
    %v681 = vmul.f32 32.0, %v680
    %v682 = vrcp.pop %v651
    %v683 = vmul.f32 32.0, %v682
    %v684 = vrcp.pop %v657
    %v685 = vmul.f32 32.0, %v684
    %v686 = vrcp.pop %v663
    %v687 = vmul.f32 32.0, %v686
    %v688 = vrcp.pop %v669
    %v689 = vmul.f32 32.0, %v688
    %v690 = vrcp.pop %v675
    %v691 = vmul.f32 32.0, %v690
    %v692 = vmul.f32 %v597, %v677
    %v693 = vmul.f32 %v599, %v679
    %v694 = vmul.f32 %v601, %v681
    %v695 = vmul.f32 %v603, %v683
    %v696 = vmul.f32 %v605, %v685
    %v697 = vmul.f32 %v607, %v687
    %v698 = vmul.f32 %v609, %v689
    %v699 = vmul.f32 %v611, %v691
    %v700 = vmul.f32 %v692, %v135
    %v701 = vmul.f32 %v693, %v136
    %v702 = vmul.f32 %v694, %v137
    %v703 = vmul.f32 %v695, %v138
    %v704 = vmul.f32 %v696, %v139
    %v705 = vmul.f32 %v697, %v140
    %v706 = vmul.f32 %v698, %v141
    %v707 = vmul.f32 %v699, %v142
    %v708 = vrot.slane %v700, 4
    %v709 = vadd.f32 %v700, %v708
    %v710 = vrot.slane %v709, 2
    %v711 = vadd.f32 %v709, %v710
    %v712 = vrot.slane %v711, 1
    %v713 = vadd.f32 %v711, %v712
    %v714 = vrot.slane %v701, 4
    %v715 = vadd.f32 %v701, %v714
    %v716 = vrot.slane %v715, 2
    %v717 = vadd.f32 %v715, %v716
    %v718 = vrot.slane %v717, 1
    %v719 = vadd.f32 %v717, %v718
    %v720 = vrot.slane %v702, 4
    %v721 = vadd.f32 %v702, %v720
    %v722 = vrot.slane %v721, 2
    %v723 = vadd.f32 %v721, %v722
    %v724 = vrot.slane %v723, 1
    %v725 = vadd.f32 %v723, %v724
    %v726 = vrot.slane %v703, 4
    %v727 = vadd.f32 %v703, %v726
    %v728 = vrot.slane %v727, 2
    %v729 = vadd.f32 %v727, %v728
    %v730 = vrot.slane %v729, 1
    %v731 = vadd.f32 %v729, %v730
    %v732 = vrot.slane %v704, 4
    %v733 = vadd.f32 %v704, %v732
    %v734 = vrot.slane %v733, 2
    %v735 = vadd.f32 %v733, %v734
    %v736 = vrot.slane %v735, 1
    %v737 = vadd.f32 %v735, %v736
    %v738 = vrot.slane %v705, 4
    %v739 = vadd.f32 %v705, %v738
    %v740 = vrot.slane %v739, 2
    %v741 = vadd.f32 %v739, %v740
    %v742 = vrot.slane %v741, 1
    %v743 = vadd.f32 %v741, %v742
    %v744 = vrot.slane %v706, 4
    %v745 = vadd.f32 %v706, %v744
    %v746 = vrot.slane %v745, 2
    %v747 = vadd.f32 %v745, %v746
    %v748 = vrot.slane %v747, 1
    %v749 = vadd.f32 %v747, %v748
    %v750 = vrot.slane %v707, 4
    %v751 = vadd.f32 %v707, %v750
    %v752 = vrot.slane %v751, 2
    %v753 = vadd.f32 %v751, %v752
    %v754 = vrot.slane %v753, 1
    %v755 = vadd.f32 %v753, %v754
    %vm764 = vcmask 1041409
    %v765 = vsel %vm764, %v719, %v713
    %vm766 = vcmask 1042434
    %v767 = vsel %vm766, %v725, %v765
    %vm768 = vcmask 1043459
    %v769 = vsel %vm768, %v731, %v767
    %vm770 = vcmask 1044484
    %v771 = vsel %vm770, %v737, %v769
    %vm772 = vcmask 1045509
    %v773 = vsel %vm772, %v743, %v771
    %vm774 = vcmask 1046534
    %v775 = vsel %vm774, %v749, %v773
    %vm776 = vcmask 1047559
    %v777 = vsel %vm776, %v755, %v775
    %779 = vrot.lane.b32.xlu0 %v777, 96
    %v780 = vpop.permute.xlu0 %779
    %v782 = vrot.slane %v780, 1
    %v783 = vrot.slane %v780, 2
    %v784 = vrot.slane %v780, 3
    %v785 = vrot.slane %v780, 4
    %v786 = vrot.slane %v780, 5
    %v787 = vrot.slane %v780, 6
    %v788 = vrot.slane %v780, 7
    %v797 = vadd.f32 %v713, %v780
    %v798 = vadd.f32 %v719, %v782
    %v799 = vadd.f32 %v725, %v783
    %v800 = vadd.f32 %v731, %v784
    %v801 = vadd.f32 %v737, %v785
    %v802 = vadd.f32 %v743, %v786
    %v803 = vadd.f32 %v749, %v787
    %v804 = vadd.f32 %v755, %v788
    %v813 = vrot.slane %v798, 7
    %v814 = vsel %vm764, %v813, %v797
    %v815 = vrot.slane %v799, 6
    %v816 = vsel %vm766, %v815, %v814
    %v817 = vrot.slane %v800, 5
    %v818 = vsel %vm768, %v817, %v816
    %v819 = vrot.slane %v801, 4
    %v820 = vsel %vm770, %v819, %v818
    %v821 = vrot.slane %v802, 3
    %v822 = vsel %vm772, %v821, %v820
    %v823 = vrot.slane %v803, 2
    %v824 = vsel %vm774, %v823, %v822
    %v825 = vrot.slane %v804, 1
    %v826 = vsel %vm776, %v825, %v824
    %828 = vrot.lane.b32.xlu0 %v826, 64
    %v829 = vpop.permute.xlu0 %828
    %v831 = vrot.slane %v829, 1
    %v832 = vrot.slane %v829, 2
    %v833 = vrot.slane %v829, 3
    %v834 = vrot.slane %v829, 4
    %v835 = vrot.slane %v829, 5
    %v836 = vrot.slane %v829, 6
    %v837 = vrot.slane %v829, 7
    %v846 = vadd.f32 %v797, %v829
    %v847 = vadd.f32 %v798, %v831
    %v848 = vadd.f32 %v799, %v832
    %v849 = vadd.f32 %v800, %v833
    %v850 = vadd.f32 %v801, %v834
    %v851 = vadd.f32 %v802, %v835
    %v852 = vadd.f32 %v803, %v836
    %v853 = vadd.f32 %v804, %v837
    %v854 = vld [vmem:[%s6] sm:$0xff]
    %v855 = vld [vmem:[%s6 + $0x8] sm:$0xff]
    %v856 = vld [vmem:[%s6 + $0x10] sm:$0xff]
    %v857 = vld [vmem:[%s6 + $0x18] sm:$0xff]
    %v858 = vld [vmem:[%s6 + $0x20] sm:$0xff]
    %v859 = vld [vmem:[%s6 + $0x28] sm:$0xff]
    %v860 = vld [vmem:[%s6 + $0x30] sm:$0xff]
    %v861 = vld [vmem:[%s6 + $0x38] sm:$0xff]
    %v862 = vld [vmem:[%s6 + $0x40] sm:$0xff]
    %v863 = vld [vmem:[%s6 + $0x48] sm:$0xff]
    %v864 = vld [vmem:[%s6 + $0x50] sm:$0xff]
    %v865 = vld [vmem:[%s6 + $0x58] sm:$0xff]
    %v866 = vld [vmem:[%s6 + $0x60] sm:$0xff]
    %v867 = vld [vmem:[%s6 + $0x68] sm:$0xff]
    %v868 = vld [vmem:[%s6 + $0x70] sm:$0xff]
    %v869 = vld [vmem:[%s6 + $0x78] sm:$0xff]
    %v870 = vld [vmem:[%s7] sm:$0x1]
    %v872 = vlaneseq
    %v873 = vshrl.u32 %v872, 7
    %v874 = vsub.s32 0, %v873
    %v875 = vrot.slane %v870, %v874
    %v885 = vrot.slane %v847, 7
    %v886 = vsel %vm764, %v885, %v846
    %v887 = vrot.slane %v848, 6
    %v888 = vsel %vm766, %v887, %v886
    %v889 = vrot.slane %v849, 5
    %v890 = vsel %vm768, %v889, %v888
    %v891 = vrot.slane %v850, 4
    %v892 = vsel %vm770, %v891, %v890
    %v893 = vrot.slane %v851, 3
    %v894 = vsel %vm772, %v893, %v892
    %v895 = vrot.slane %v852, 2
    %v896 = vsel %vm774, %v895, %v894
    %v897 = vrot.slane %v853, 1
    %v898 = vsel %vm776, %v897, %v896
    %900 = vmatprep.subr.mxu0 0.0
    %901 = vmatpush1.msra.mxu0 %v854
    %902 = vmatprep.subr.mxu0 0.0
    %903 = vmatpush1.msra.mxu0 %v855
    %904 = vmatprep.subr.mxu0 0.0
    %905 = vmatpush1.msra.mxu0 %v856
    %906 = vmatprep.subr.mxu0 0.0
    %907 = vmatpush1.msra.mxu0 %v857
    %908 = vmatprep.subr.mxu0 0.0
    %909 = vmatpush1.msra.mxu0 %v858
    %910 = vmatprep.subr.mxu0 0.0
    %911 = vmatpush1.msra.mxu0 %v859
    %912 = vmatprep.subr.mxu0 0.0
    %913 = vmatpush1.msra.mxu0 %v860
    %914 = vmatprep.subr.mxu0 0.0
    %915 = vmatpush1.msra.mxu0 %v861
    %916 = vmatprep.subr.mxu0 0.0
    %917 = vmatpush1.msra.mxu0 %v862
    %918 = vmatprep.subr.mxu0 0.0
    %919 = vmatpush1.msra.mxu0 %v863
    %920 = vmatprep.subr.mxu0 0.0
    %921 = vmatpush1.msra.mxu0 %v864
    %922 = vmatprep.subr.mxu0 0.0
    %923 = vmatpush1.msra.mxu0 %v865
    %924 = vmatprep.subr.mxu0 0.0
    %925 = vmatpush1.msra.mxu0 %v866
    %926 = vmatprep.subr.mxu0 0.0
    %927 = vmatpush1.msra.mxu0 %v867
    %928 = vmatprep.subr.mxu0 0.0
    %929 = vmatpush1.msra.mxu0 %v868
    %930 = vmatprep.subr.mxu0 0.0
    %931 = vmatpush1.msra.mxu0 %v869
    %932 = vmatprep.subr.mxu0 0.0
    %933 = vmatpush1.msra.mxu0 0.0
    %934 = vmatprep.subr.mxu0 0.0
    %935 = vmatpush1.msra.mxu0 0.0
    %936 = vmatprep.subr.mxu0 0.0
    %937 = vmatpush1.msra.mxu0 0.0
    %938 = vmatprep.subr.mxu0 0.0
    %939 = vmatpush1.msra.mxu0 0.0
    %940 = vmatprep.subr.mxu0 0.0
    %941 = vmatpush1.msra.mxu0 0.0
    %942 = vmatprep.subr.mxu0 0.0
    %943 = vmatpush1.msra.mxu0 0.0
    %944 = vmatprep.subr.mxu0 0.0
    %945 = vmatpush1.msra.mxu0 0.0
    %946 = vmatprep.subr.mxu0 0.0
    %947 = vmatpush1.msra.mxu0 0.0
    %948 = vmatprep.subr.mxu0 0.0
    %949 = vmatpush1.msra.mxu0 0.0
    %950 = vmatprep.subr.mxu0 0.0
    %951 = vmatpush1.msra.mxu0 0.0
    %952 = vmatprep.subr.mxu0 0.0
    %953 = vmatpush1.msra.mxu0 0.0
    %954 = vmatprep.subr.mxu0 0.0
    %955 = vmatpush1.msra.mxu0 0.0
    %956 = vmatprep.subr.mxu0 0.0
    %957 = vmatpush1.msra.mxu0 0.0
    %958 = vmatprep.subr.mxu0 0.0
    %959 = vmatpush1.msra.mxu0 0.0
    %960 = vmatprep.subr.mxu0 0.0
    %961 = vmatpush1.msra.mxu0 0.0
    %962 = vmatprep.subr.mxu0 0.0
    %963 = vmatpush1.msra.mxu0 0.0
    %964 = vmatprep.mubr.f32.mxu0 0.0
    %965 = vmatmul.mubr.f32.gmra.mrb[0].mxu0 %v898
    %v966 = vpop.f32.mrb[0].mxu0
    %v967 = vadd.f32 %v875, %v966
    %v968 = vpop.f32.mrb[0].mxu0
    %969 = vdwg.mxu0
    %s970 = sld [smem:[#allocation2]]
    %v971 = vld [vmem:[%s9] sm:$0xff]
    %v972 = vld [vmem:[%s9 + $0x8] sm:$0xff]
    %v973 = vld [vmem:[%s9 + $0x10] sm:$0xff]
    %v974 = vld [vmem:[%s9 + $0x18] sm:$0xff]
    %v975 = vld [vmem:[#allocation8] sm:$0xff]
    %v976 = vld [vmem:[#allocation8 + $0x8] sm:$0xff]
    %v977 = vld [vmem:[#allocation8 + $0x10] sm:$0xff]
    %v978 = vld [vmem:[#allocation8 + $0x18] sm:$0xff]
    %v980 = vsel %vm154, %v967, 0
    %982 = vmatprep.subr.mxu0 0.0
    %983 = vmatpush1.msra.mxu0 %v975
    %984 = vmatprep.subr.mxu0 0.0
    %985 = vmatpush1.msra.mxu0 %v976
    %986 = vmatprep.subr.mxu0 0.0
    %987 = vmatpush1.msra.mxu0 %v977
    %988 = vmatprep.subr.mxu0 0.0
    %989 = vmatpush1.msra.mxu0 %v978
    %990 = vmatprep.subr.mxu0 0.0
    %991 = vmatpush1.msra.mxu0 0.0
    %992 = vmatprep.subr.mxu0 0.0
    %993 = vmatpush1.msra.mxu0 0.0
    %994 = vmatprep.subr.mxu0 0.0
    %995 = vmatpush1.msra.mxu0 0.0
    %996 = vmatprep.subr.mxu0 0.0
    %997 = vmatpush1.msra.mxu0 0.0
    %998 = vmatprep.subr.mxu0 0.0
    %999 = vmatpush1.msra.mxu0 0.0
    %1000 = vmatprep.subr.mxu0 0.0
    %1001 = vmatpush1.msra.mxu0 0.0
    %1002 = vmatprep.subr.mxu0 0.0
    %1003 = vmatpush1.msra.mxu0 0.0
    %1004 = vmatprep.subr.mxu0 0.0
    %1005 = vmatpush1.msra.mxu0 0.0
    %1006 = vmatprep.subr.mxu0 0.0
    %1007 = vmatpush1.msra.mxu0 0.0
    %1008 = vmatprep.subr.mxu0 0.0
    %1009 = vmatpush1.msra.mxu0 0.0
    %1010 = vmatprep.subr.mxu0 0.0
    %1011 = vmatpush1.msra.mxu0 0.0
    %1012 = vmatprep.subr.mxu0 0.0
    %1013 = vmatpush1.msra.mxu0 0.0
    %1014 = vmatprep.subr.mxu0 0.0
    %1015 = vmatpush1.msra.mxu0 0.0
    %1016 = vmatprep.subr.mxu0 0.0
    %1017 = vmatpush1.msra.mxu0 0.0
    %1018 = vmatprep.subr.mxu0 0.0
    %1019 = vmatpush1.msra.mxu0 0.0
    %1020 = vmatprep.subr.mxu0 0.0
    %1021 = vmatpush1.msra.mxu0 0.0
    %1022 = vmatprep.subr.mxu0 0.0
    %1023 = vmatpush1.msra.mxu0 0.0
    %1024 = vmatprep.subr.mxu0 0.0
    %1025 = vmatpush1.msra.mxu0 0.0
    %1026 = vmatprep.subr.mxu0 0.0
    %1027 = vmatpush1.msra.mxu0 0.0
    %1028 = vmatprep.subr.mxu0 0.0
    %1029 = vmatpush1.msra.mxu0 0.0
    %1030 = vmatprep.subr.mxu0 0.0
    %1031 = vmatpush1.msra.mxu0 0.0
    %1032 = vmatprep.subr.mxu0 0.0
    %1033 = vmatpush1.msra.mxu0 0.0
    %1034 = vmatprep.subr.mxu0 0.0
    %1035 = vmatpush1.msra.mxu0 0.0
    %1036 = vmatprep.subr.mxu0 0.0
    %1037 = vmatpush1.msra.mxu0 0.0
    %1038 = vmatprep.subr.mxu0 0.0
    %1039 = vmatpush1.msra.mxu0 0.0
    %1040 = vmatprep.subr.mxu0 0.0
    %1041 = vmatpush1.msra.mxu0 0.0
    %1042 = vmatprep.subr.mxu0 0.0
    %1043 = vmatpush1.msra.mxu0 0.0
    %1044 = vmatprep.subr.mxu0 0.0
    %1045 = vmatpush1.msra.mxu0 0.0
    %1046 = vmatprep.mubr.f32.mxu0 0.0
    %1047 = vmatmul.mubr.f32.gmra.mrb[0].mxu0 %v980
    %v1048 = vpop.f32.mrb[0].mxu0
    %v1049 = vadd.f32 0.0, %v1048
    %v1050 = vpop.f32.mrb[0].mxu0
    %1051 = vdwg.mxu0
    %1052 = vmatprep.subr.mxu0 0.0
    %1053 = vmatpush1.msra.mxu0 %v971
    %1054 = vmatprep.subr.mxu0 0.0
    %1055 = vmatpush1.msra.mxu0 %v972
    %1056 = vmatprep.subr.mxu0 0.0
    %1057 = vmatpush1.msra.mxu0 %v973
    %1058 = vmatprep.subr.mxu0 0.0
    %1059 = vmatpush1.msra.mxu0 %v974
    %1060 = vmatprep.subr.mxu0 0.0
    %1061 = vmatpush1.msra.mxu0 0.0
    %1062 = vmatprep.subr.mxu0 0.0
    %1063 = vmatpush1.msra.mxu0 0.0
    %1064 = vmatprep.subr.mxu0 0.0
    %1065 = vmatpush1.msra.mxu0 0.0
    %1066 = vmatprep.subr.mxu0 0.0
    %1067 = vmatpush1.msra.mxu0 0.0
    %1068 = vmatprep.subr.mxu0 0.0
    %1069 = vmatpush1.msra.mxu0 0.0
    %1070 = vmatprep.subr.mxu0 0.0
    %1071 = vmatpush1.msra.mxu0 0.0
    %1072 = vmatprep.subr.mxu0 0.0
    %1073 = vmatpush1.msra.mxu0 0.0
    %1074 = vmatprep.subr.mxu0 0.0
    %1075 = vmatpush1.msra.mxu0 0.0
    %1076 = vmatprep.subr.mxu0 0.0
    %1077 = vmatpush1.msra.mxu0 0.0
    %1078 = vmatprep.subr.mxu0 0.0
    %1079 = vmatpush1.msra.mxu0 0.0
    %1080 = vmatprep.subr.mxu0 0.0
    %1081 = vmatpush1.msra.mxu0 0.0
    %1082 = vmatprep.subr.mxu0 0.0
    %1083 = vmatpush1.msra.mxu0 0.0
    %1084 = vmatprep.subr.mxu0 0.0
    %1085 = vmatpush1.msra.mxu0 0.0
    %1086 = vmatprep.subr.mxu0 0.0
    %1087 = vmatpush1.msra.mxu0 0.0
    %1088 = vmatprep.subr.mxu0 0.0
    %1089 = vmatpush1.msra.mxu0 0.0
    %1090 = vmatprep.subr.mxu0 0.0
    %1091 = vmatpush1.msra.mxu0 0.0
    %1092 = vmatprep.subr.mxu0 0.0
    %1093 = vmatpush1.msra.mxu0 0.0
    %1094 = vmatprep.subr.mxu0 0.0
    %1095 = vmatpush1.msra.mxu0 0.0
    %1096 = vmatprep.subr.mxu0 0.0
    %1097 = vmatpush1.msra.mxu0 0.0
    %1098 = vmatprep.subr.mxu0 0.0
    %1099 = vmatpush1.msra.mxu0 0.0
    %1100 = vmatprep.subr.mxu0 0.0
    %1101 = vmatpush1.msra.mxu0 0.0
    %1102 = vmatprep.subr.mxu0 0.0
    %1103 = vmatpush1.msra.mxu0 0.0
    %1104 = vmatprep.subr.mxu0 0.0
    %1105 = vmatpush1.msra.mxu0 0.0
    %1106 = vmatprep.subr.mxu0 0.0
    %1107 = vmatpush1.msra.mxu0 0.0
    %1108 = vmatprep.subr.mxu0 0.0
    %1109 = vmatpush1.msra.mxu0 0.0
    %1110 = vmatprep.subr.mxu0 0.0
    %1111 = vmatpush1.msra.mxu0 0.0
    %1112 = vmatprep.subr.mxu0 0.0
    %1113 = vmatpush1.msra.mxu0 0.0
    %1114 = vmatprep.subr.mxu0 0.0
    %1115 = vmatpush1.msra.mxu0 0.0
    %1116 = vmatprep.mubr.f32.mxu0 0.0
    %1117 = vmatmul.mubr.f32.gmra.mrb[0].mxu0 %v156
    %v1118 = vpop.f32.mrb[0].mxu0
    %v1119 = vadd.f32 %v1049, %v1118
    %v1120 = vpop.f32.mrb[0].mxu0
    %1121 = vdwg.mxu0
    %v1122 = vld [vmem:[%s11] sm:$0x1]
    %v1124 = vlaneseq
    %v1125 = vshrl.u32 %v1124, 7
    %v1126 = vsub.s32 0, %v1125
    %v1127 = vrot.slane %v1122, %v1126
    %v1129 = vadd.f32 %v1119, %v1127
    %vm1130 = vcmp.ge.f32.partialorder %v1129, 0.0
    %v1131 = vstv %s970
    %v1132 = vmul.f32 %v1131, %v1129
    %v1133 = vsel %vm1130, %v1129, %v1132
    %v1134 = vld [vmem:[#allocation10] sm:$0xff]
    %v1135 = vld [vmem:[#allocation10 + $0x8] sm:$0xff]
    %v1136 = vld [vmem:[#allocation10 + $0x10] sm:$0xff]
    %v1137 = vld [vmem:[#allocation10 + $0x18] sm:$0xff]
    %v1138 = vld [vmem:[#allocation10 + $0x20] sm:$0xff]
    %v1139 = vld [vmem:[#allocation10 + $0x28] sm:$0xff]
    %v1140 = vld [vmem:[#allocation10 + $0x30] sm:$0xff]
    %v1141 = vld [vmem:[#allocation10 + $0x38] sm:$0xff]
    %v1142 = vld [vmem:[#allocation10 + $0x40] sm:$0xff]
    %v1143 = vld [vmem:[#allocation10 + $0x48] sm:$0xff]
    %v1144 = vld [vmem:[#allocation10 + $0x50] sm:$0xff]
    %v1145 = vld [vmem:[#allocation10 + $0x58] sm:$0xff]
    %v1146 = vld [vmem:[#allocation10 + $0x60] sm:$0xff]
    %v1147 = vld [vmem:[#allocation10 + $0x68] sm:$0xff]
    %v1148 = vld [vmem:[#allocation10 + $0x70] sm:$0xff]
    %v1149 = vld [vmem:[#allocation10 + $0x78] sm:$0xff]
    %v1150 = vld [vmem:[%s13] sm:$0x1]
    %v1152 = vlaneseq
    %v1153 = vshrl.u32 %v1152, 7
    %v1154 = vsub.s32 0, %v1153
    %v1155 = vrot.slane %v1150, %v1154
    %1157 = vmatprep.subr.mxu0 0.0
    %1158 = vmatpush1.msra.mxu0 %v1134
    %1159 = vmatprep.subr.mxu0 0.0
    %1160 = vmatpush1.msra.mxu0 %v1135
    %1161 = vmatprep.subr.mxu0 0.0
    %1162 = vmatpush1.msra.mxu0 %v1136
    %1163 = vmatprep.subr.mxu0 0.0
    %1164 = vmatpush1.msra.mxu0 %v1137
    %1165 = vmatprep.subr.mxu0 0.0
    %1166 = vmatpush1.msra.mxu0 %v1138
    %1167 = vmatprep.subr.mxu0 0.0
    %1168 = vmatpush1.msra.mxu0 %v1139
    %1169 = vmatprep.subr.mxu0 0.0
    %1170 = vmatpush1.msra.mxu0 %v1140
    %1171 = vmatprep.subr.mxu0 0.0
    %1172 = vmatpush1.msra.mxu0 %v1141
    %1173 = vmatprep.subr.mxu0 0.0
    %1174 = vmatpush1.msra.mxu0 %v1142
    %1175 = vmatprep.subr.mxu0 0.0
    %1176 = vmatpush1.msra.mxu0 %v1143
    %1177 = vmatprep.subr.mxu0 0.0
    %1178 = vmatpush1.msra.mxu0 %v1144
    %1179 = vmatprep.subr.mxu0 0.0
    %1180 = vmatpush1.msra.mxu0 %v1145
    %1181 = vmatprep.subr.mxu0 0.0
    %1182 = vmatpush1.msra.mxu0 %v1146
    %1183 = vmatprep.subr.mxu0 0.0
    %1184 = vmatpush1.msra.mxu0 %v1147
    %1185 = vmatprep.subr.mxu0 0.0
    %1186 = vmatpush1.msra.mxu0 %v1148
    %1187 = vmatprep.subr.mxu0 0.0
    %1188 = vmatpush1.msra.mxu0 %v1149
    %1189 = vmatprep.subr.mxu0 0.0
    %1190 = vmatpush1.msra.mxu0 0.0
    %1191 = vmatprep.subr.mxu0 0.0
    %1192 = vmatpush1.msra.mxu0 0.0
    %1193 = vmatprep.subr.mxu0 0.0
    %1194 = vmatpush1.msra.mxu0 0.0
    %1195 = vmatprep.subr.mxu0 0.0
    %1196 = vmatpush1.msra.mxu0 0.0
    %1197 = vmatprep.subr.mxu0 0.0
    %1198 = vmatpush1.msra.mxu0 0.0
    %1199 = vmatprep.subr.mxu0 0.0
    %1200 = vmatpush1.msra.mxu0 0.0
    %1201 = vmatprep.subr.mxu0 0.0
    %1202 = vmatpush1.msra.mxu0 0.0
    %1203 = vmatprep.subr.mxu0 0.0
    %1204 = vmatpush1.msra.mxu0 0.0
    %1205 = vmatprep.subr.mxu0 0.0
    %1206 = vmatpush1.msra.mxu0 0.0
    %1207 = vmatprep.subr.mxu0 0.0
    %1208 = vmatpush1.msra.mxu0 0.0
    %1209 = vmatprep.subr.mxu0 0.0
    %1210 = vmatpush1.msra.mxu0 0.0
    %1211 = vmatprep.subr.mxu0 0.0
    %1212 = vmatpush1.msra.mxu0 0.0
    %1213 = vmatprep.subr.mxu0 0.0
    %1214 = vmatpush1.msra.mxu0 0.0
    %1215 = vmatprep.subr.mxu0 0.0
    %1216 = vmatpush1.msra.mxu0 0.0
    %1217 = vmatprep.subr.mxu0 0.0
    %1218 = vmatpush1.msra.mxu0 0.0
    %1219 = vmatprep.subr.mxu0 0.0
    %1220 = vmatpush1.msra.mxu0 0.0
    %1221 = vmatprep.mubr.f32.mxu0 0.0
    %1222 = vmatmul.mubr.f32.gmra.mrb[0].mxu0 %v1133
    %v1223 = vpop.f32.mrb[0].mxu0
    %v1224 = vadd.f32 %v1155, %v1223
    %v1225 = vpop.f32.mrb[0].mxu0
    %1226 = vdwg.mxu0
    %vm1227 = vcmp.ge.f32.partialorder %v1224, 0.0
    %v1228 = vmul.f32 %v1131, %v1224
    %v1229 = vsel %vm1227, %v1224, %v1228
    %v1230 = vld [vmem:[#allocation11] sm:$0xff]
    %v1231 = vld [vmem:[#allocation11 + $0x8] sm:$0xff]
    %v1232 = vld [vmem:[#allocation11 + $0x10] sm:$0xff]
    %v1233 = vld [vmem:[#allocation11 + $0x18] sm:$0xff]
    %v1234 = vld [vmem:[#allocation11 + $0x20] sm:$0xff]
    %v1235 = vld [vmem:[#allocation11 + $0x28] sm:$0xff]
    %v1236 = vld [vmem:[#allocation11 + $0x30] sm:$0xff]
    %v1237 = vld [vmem:[#allocation11 + $0x38] sm:$0xff]
    %v1238 = vld [vmem:[#allocation11 + $0x40] sm:$0xff]
    %v1239 = vld [vmem:[#allocation11 + $0x48] sm:$0xff]
    %v1240 = vld [vmem:[#allocation11 + $0x50] sm:$0xff]
    %v1241 = vld [vmem:[#allocation11 + $0x58] sm:$0xff]
    %v1242 = vld [vmem:[#allocation11 + $0x60] sm:$0xff]
    %v1243 = vld [vmem:[#allocation11 + $0x68] sm:$0xff]
    %v1244 = vld [vmem:[#allocation11 + $0x70] sm:$0xff]
    %v1245 = vld [vmem:[#allocation11 + $0x78] sm:$0xff]
    %v1246 = vld [vmem:[%s15] sm:$0x1]
    %v1248 = vlaneseq
    %v1249 = vshrl.u32 %v1248, 7
    %v1250 = vsub.s32 0, %v1249
    %v1251 = vrot.slane %v1246, %v1250
    %1253 = vmatprep.subr.mxu0 0.0
    %1254 = vmatpush1.msra.mxu0 %v1230
    %1255 = vmatprep.subr.mxu0 0.0
    %1256 = vmatpush1.msra.mxu0 %v1231
    %1257 = vmatprep.subr.mxu0 0.0
    %1258 = vmatpush1.msra.mxu0 %v1232
    %1259 = vmatprep.subr.mxu0 0.0
    %1260 = vmatpush1.msra.mxu0 %v1233
    %1261 = vmatprep.subr.mxu0 0.0
    %1262 = vmatpush1.msra.mxu0 %v1234
    %1263 = vmatprep.subr.mxu0 0.0
    %1264 = vmatpush1.msra.mxu0 %v1235
    %1265 = vmatprep.subr.mxu0 0.0
    %1266 = vmatpush1.msra.mxu0 %v1236
    %1267 = vmatprep.subr.mxu0 0.0
    %1268 = vmatpush1.msra.mxu0 %v1237
    %1269 = vmatprep.subr.mxu0 0.0
    %1270 = vmatpush1.msra.mxu0 %v1238
    %1271 = vmatprep.subr.mxu0 0.0
    %1272 = vmatpush1.msra.mxu0 %v1239
    %1273 = vmatprep.subr.mxu0 0.0
    %1274 = vmatpush1.msra.mxu0 %v1240
    %1275 = vmatprep.subr.mxu0 0.0
    %1276 = vmatpush1.msra.mxu0 %v1241
    %1277 = vmatprep.subr.mxu0 0.0
    %1278 = vmatpush1.msra.mxu0 %v1242
    %1279 = vmatprep.subr.mxu0 0.0
    %1280 = vmatpush1.msra.mxu0 %v1243
    %1281 = vmatprep.subr.mxu0 0.0
    %1282 = vmatpush1.msra.mxu0 %v1244
    %1283 = vmatprep.subr.mxu0 0.0
    %1284 = vmatpush1.msra.mxu0 %v1245
    %1285 = vmatprep.subr.mxu0 0.0
    %1286 = vmatpush1.msra.mxu0 0.0
    %1287 = vmatprep.subr.mxu0 0.0
    %1288 = vmatpush1.msra.mxu0 0.0
    %1289 = vmatprep.subr.mxu0 0.0
    %1290 = vmatpush1.msra.mxu0 0.0
    %1291 = vmatprep.subr.mxu0 0.0
    %1292 = vmatpush1.msra.mxu0 0.0
    %1293 = vmatprep.subr.mxu0 0.0
    %1294 = vmatpush1.msra.mxu0 0.0
    %1295 = vmatprep.subr.mxu0 0.0
    %1296 = vmatpush1.msra.mxu0 0.0
    %1297 = vmatprep.subr.mxu0 0.0
    %1298 = vmatpush1.msra.mxu0 0.0
    %1299 = vmatprep.subr.mxu0 0.0
    %1300 = vmatpush1.msra.mxu0 0.0
    %1301 = vmatprep.subr.mxu0 0.0
    %1302 = vmatpush1.msra.mxu0 0.0
    %1303 = vmatprep.subr.mxu0 0.0
    %1304 = vmatpush1.msra.mxu0 0.0
    %1305 = vmatprep.subr.mxu0 0.0
    %1306 = vmatpush1.msra.mxu0 0.0
    %1307 = vmatprep.subr.mxu0 0.0
    %1308 = vmatpush1.msra.mxu0 0.0
    %1309 = vmatprep.subr.mxu0 0.0
    %1310 = vmatpush1.msra.mxu0 0.0
    %1311 = vmatprep.subr.mxu0 0.0
    %1312 = vmatpush1.msra.mxu0 0.0
    %1313 = vmatprep.subr.mxu0 0.0
    %1314 = vmatpush1.msra.mxu0 0.0
    %1315 = vmatprep.subr.mxu0 0.0
    %1316 = vmatpush1.msra.mxu0 0.0
    %1317 = vmatprep.mubr.f32.mxu0 0.0
    %1318 = vmatmul.mubr.f32.gmra.mrb[0].mxu0 %v1229
    %v1319 = vpop.f32.mrb[0].mxu0
    %v1320 = vadd.f32 %v1251, %v1319
    %v1321 = vpop.f32.mrb[0].mxu0
    %1322 = vdwg.mxu0
    %vm1323 = vcmp.ge.f32.partialorder %v1320, 0.0
    %v1324 = vmul.f32 %v1131, %v1320
    %v1325 = vsel %vm1323, %v1320, %v1324
    %v1326 = vxor.u32 %v1325, 2147483648
    %v1327 = vmul.f32 %v1326, 1.442695
    %v1328 = vpow.pop %v1327
    %v1329 = vadd.f32 %v1328, 1.0
    %v1330 = vrcp.pop %v1329
    %v1331 = vmul.f32 1.0, %v1330
    %vm1332 = vcmask 7168
    %1333 = vst.msk [vmem:[%s16] sm:$0xff] %vm1332, %v1331
    // Predicated region
    $region90: #{tpu_custom_call.1} parent=1 // pred_check
      _
    $region91: #{tpu_custom_call.1} parent=1 // pred_check_branch
      %1335 = sbr.rel (0) target = $region93
    $region92: #{tpu_custom_call.1} parent=1 // pred_region
      _
    $region93: #{tpu_custom_call.1} parent=1 // pred_fallthru
      _
    // Predicated region
    $region94: #{tpu_custom_call.1} parent=1 // pred_check
      _
    $region95: #{tpu_custom_call.1} parent=1 // pred_check_branch
      %1337 = sbr.rel (0) target = $region97
    $region96: #{tpu_custom_call.1} parent=1 // pred_region
      _
    $region97: #{tpu_custom_call.1} parent=1 // pred_fallthru
      _
    %1338 = vsyncpa [#allocation4], 1
    %1339 = vsyncpa [#allocation6], 1
    %1340 = vsyncpa [#allocation9], 1
    %1341 = vsyncpa [#allocation12], 1

</llo_original>
